<compile_context>
chip_gen: v5e
topology: v5e:2x2
jax: 0.10.0
libtpu: 0.0.40
codegen_flags: <defaults>
</compile_context>

<pallas_src>
import functools

import jax
import jax.numpy as jnp
from jax.experimental import pallas as pl
from jax.experimental.pallas import tpu as pltpu

LATENT_DIM = 20
LATENT_PAD = 128          # mu / logvar each packed into one full 128-lane group of the ml slab
IN_DIM = 784
HID_DIM = 400


def _round_up(x, m):
    return (x + m - 1) // m * m


def _cdiv(a, b):
    return (a + b - 1) // b


# --------------------------------------------------------------------------- #
# kernel
# --------------------------------------------------------------------------- #
def _vae_kernel(x_ref, eps_ref,
                w1_ref, b1_ref,
                w2_ref, b2_ref,
                w3_ref, b3_ref,
                w4_ref, b4_ref,
                xrec_ref, ml_ref):
    # ---- encoder: Linear(784, 400) + ReLU ----
    # x arrives f32; cast to bf16 in-kernel (VPU) so the HBM read stays a single f32 pass.
    x = x_ref[...].astype(jnp.bfloat16)
    h = jnp.dot(x, w1_ref[...], preferred_element_type=jnp.float32) + b1_ref[...]
    h = jnp.maximum(h, 0.0)                                   # (tb, 400) f32

    # ---- encoder head: single Linear(400, 2*LATENT_PAD); mu | logvar lane-packed ----
    ml = jnp.dot(h.astype(jnp.bfloat16), w2_ref[...],
                 preferred_element_type=jnp.float32) + b2_ref[...]   # (tb, 256) f32
    mu = ml[:, :LATENT_DIM]                                   # (tb, 20)
    logvar = ml[:, LATENT_PAD:LATENT_PAD + LATENT_DIM]        # (tb, 20)

    # ---- reparameterize: z = mu + eps * exp(0.5 * logvar)  (f32 elementwise) ----
    z = mu + eps_ref[...] * jnp.exp(0.5 * logvar)             # (tb, 20) f32

    # ---- decoder: Linear(20, 400) + ReLU + Linear(400, 784) + Sigmoid ----
    h2 = jnp.dot(z.astype(jnp.bfloat16), w3_ref[...],
                 preferred_element_type=jnp.float32) + b3_ref[...]
    h2 = jnp.maximum(h2, 0.0)                                 # (tb, 400) f32
    logits = jnp.dot(h2.astype(jnp.bfloat16), w4_ref[...],
                     preferred_element_type=jnp.float32) + b4_ref[...]

    # bf16 stores: halves the two output HBM streams (kernel is HBM-bound).
    xrec_ref[...] = jax.nn.sigmoid(logits).astype(jnp.bfloat16)
    ml_ref[...] = ml.astype(jnp.bfloat16)


# --------------------------------------------------------------------------- #
# parameter handling
# --------------------------------------------------------------------------- #
def init_params(key):
    """Natural (PyTorch-shaped) f32 params, nn.Linear default init U(+-1/sqrt(fan_in))."""
    def linear(key, fan_in, fan_out):
        kw, kb = jax.random.split(key)
        bound = 1.0 / jnp.sqrt(fan_in)
        w = jax.random.uniform(kw, (fan_in, fan_out), jnp.float32, -bound, bound)
        b = jax.random.uniform(kb, (fan_out,), jnp.float32, -bound, bound)
        return w, b

    k1, k2, k3, k4 = jax.random.split(key, 4)
    w1, b1 = linear(k1, IN_DIM, HID_DIM)          # encoder Linear(784, 400)
    w2, b2 = linear(k2, HID_DIM, 2 * LATENT_DIM)  # encoder Linear(400, 40)
    w3, b3 = linear(k3, LATENT_DIM, HID_DIM)      # decoder Linear(20, 400)
    w4, b4 = linear(k4, HID_DIM, IN_DIM)          # decoder Linear(400, 784)
    return (w1, b1, w2, b2, w3, b3, w4, b4)


def pack_params(params):
    """Pad / pack params for the kernel.

    * weights -> bf16 (half the HBM weight bytes; MXU-native); biases stay f32.
    * mu/logvar head packed into one (400, 256) weight: cols [0:20]=mu,
      cols [128:148]=logvar, rest zero -> lane-dense (tb, 256) output slab.
    * decoder input weight kept natural (20, 400): the kernel contracts K=20 directly.
    """
    w1, b1, w2, b2, w3, b3, w4, b4 = params

    w2p = jnp.zeros((HID_DIM, 2 * LATENT_PAD), jnp.float32)
    w2p = w2p.at[:, :LATENT_DIM].set(w2[:, :LATENT_DIM])
    w2p = w2p.at[:, LATENT_PAD:LATENT_PAD + LATENT_DIM].set(w2[:, LATENT_DIM:])
    b2p = jnp.zeros((2 * LATENT_PAD,), jnp.float32)
    b2p = b2p.at[:LATENT_DIM].set(b2[:LATENT_DIM])
    b2p = b2p.at[LATENT_PAD:LATENT_PAD + LATENT_DIM].set(b2[LATENT_DIM:])

    return (w1.astype(jnp.bfloat16), b1.reshape(1, HID_DIM),
            w2p.astype(jnp.bfloat16), b2p.reshape(1, 2 * LATENT_PAD),
            w3.astype(jnp.bfloat16), b3.reshape(1, HID_DIM),
            w4.astype(jnp.bfloat16), b4.reshape(1, IN_DIM))


# --------------------------------------------------------------------------- #
# wrapper
# --------------------------------------------------------------------------- #
@functools.partial(jax.jit, static_argnames=("tile_b",))
def vae_forward(x_img, eps, packed_params, *, tile_b=512):
    """x_img: (B, 1, 28, 28) f32 NCHW, eps: (B, LATENT_DIM) ~ N(0,1) f32.

    Returns (x_recon bf16 (B, 784), mu f32 (B, 20), logvar f32 (B, 20)).
    """
    B = x_img.shape[0]
    x = x_img.reshape(B, IN_DIM)                     # x.view(-1, 784); free, stays f32

    # Adaptive batch tiling: choose tb so round_up(B, tb) wastes at most one small tail.
    n_tiles = max(1, _cdiv(B, tile_b))
    tb = _round_up(_cdiv(B, n_tiles), 8)
    Bp = n_tiles * tb
    if Bp != B:
        x = jnp.pad(x, ((0, Bp - B), (0, 0)))
        eps = jnp.pad(eps, ((0, Bp - B), (0, 0)))

    w1, b1, w2, b2, w3, b3, w4, b4 = packed_params
    grid = (n_tiles,)

    def batch_spec(cols):
        return pl.BlockSpec((tb, cols), lambda i: (i, 0))

    def resident_spec(arr):        # weights / biases: same block every grid step
        return pl.BlockSpec(arr.shape, lambda i: (0, 0))

    xrec_pad, ml_pad = pl.pallas_call(
        _vae_kernel,
        grid=grid,
        in_specs=[batch_spec(IN_DIM), batch_spec(LATENT_DIM),
                  resident_spec(w1), resident_spec(b1),
                  resident_spec(w2), resident_spec(b2),
                  resident_spec(w3), resident_spec(b3),
                  resident_spec(w4), resident_spec(b4)],
        out_specs=(batch_spec(IN_DIM), batch_spec(2 * LATENT_PAD)),
        out_shape=(jax.ShapeDtypeStruct((Bp, IN_DIM), jnp.bfloat16),
                   jax.ShapeDtypeStruct((Bp, 2 * LATENT_PAD), jnp.bfloat16)),
        compiler_params=pltpu.CompilerParams(
            dimension_semantics=("parallel",),
            vmem_limit_bytes=32 * 1024 * 1024),
    )(x, eps, w1, b1, w2, b2, w3, b3, w4, b4)

    x_recon = xrec_pad[:B]                                               # bf16
    mu = ml_pad[:B, :LATENT_DIM].astype(jnp.float32)                     # tiny upcast
    logvar = ml_pad[:B, LATENT_PAD:LATENT_PAD + LATENT_DIM].astype(jnp.float32)
    return x_recon, mu, logvar


# --------------------------------------------------------------------------- #
# pure-JAX f32 reference (matches the PyTorch module)
# --------------------------------------------------------------------------- #
def vae_reference(x_img, eps, params):
    w1, b1, w2, b2, w3, b3, w4, b4 = params
    x = x_img.reshape(-1, IN_DIM)
    h = jnp.maximum(x @ w1 + b1, 0.0)
    ml = h @ w2 + b2
    mu, logvar = ml[:, :LATENT_DIM], ml[:, LATENT_DIM:]
    z = mu + eps * jnp.exp(0.5 * logvar)
    h2 = jnp.maximum(z @ w3 + b3, 0.0)
    x_recon = jax.nn.sigmoid(h2 @ w4 + b4)
    return x_recon, mu, logvar


if __name__ == "__main__":
    key = jax.random.PRNGKey(0)
    k_param, k_x, k_eps = jax.random.split(key, 3)

    params = init_params(k_param)
    packed = pack_params(params)

    B = 8
    x_img = jax.random.uniform(k_x, (B, 1, 28, 28), jnp.float32)   # NCHW, like MNIST
    eps = jax.random.normal(k_eps, (B, LATENT_DIM), jnp.float32)   # torch.randn_like(std)

    x_recon, mu, logvar = vae_forward(x_img, eps, packed)
    jax.block_until_ready((x_recon, mu, logvar))

    assert x_recon.shape == (B, IN_DIM)
    assert mu.shape == (B, LATENT_DIM)
    assert logvar.shape == (B, LATENT_DIM)

    x_recon_f32 = x_recon.astype(jnp.float32)
    assert bool(jnp.all(jnp.isfinite(x_recon_f32)))
    assert bool(jnp.all((x_recon_f32 >= 0.0) & (x_recon_f32 <= 1.0)))

    # loose tolerance: bf16 weights / matmul inputs / output stores with f32 accumulation
    xr_ref, mu_ref, lv_ref = vae_reference(x_img, eps, params)
    assert float(jnp.max(jnp.abs(x_recon_f32 - xr_ref))) < 6e-2
    assert float(jnp.max(jnp.abs(mu - mu_ref))) < 6e-2
    assert float(jnp.max(jnp.abs(logvar - lv_ref))) < 6e-2

    print("KERNEL_OK")
</pallas_src>

<mosaic_0001>
module attributes {stable_mosaic.version = 11 : i64} {
  func.func @_vae_kernel(%arg0: i32, %arg1: memref<8x784xf32, #tpu.memory_space<vmem>>, %arg2: memref<8x20xf32, #tpu.memory_space<vmem>>, %arg3: memref<784x400xbf16, #tpu.memory_space<vmem>>, %arg4: memref<1x400xf32, #tpu.memory_space<vmem>>, %arg5: memref<400x256xbf16, #tpu.memory_space<vmem>>, %arg6: memref<1x256xf32, #tpu.memory_space<vmem>>, %arg7: memref<20x400xbf16, #tpu.memory_space<vmem>>, %arg8: memref<1x400xf32, #tpu.memory_space<vmem>>, %arg9: memref<400x784xbf16, #tpu.memory_space<vmem>>, %arg10: memref<1x784xf32, #tpu.memory_space<vmem>>, %arg11: memref<8x784xbf16, #tpu.memory_space<vmem>>, %arg12: memref<8x256xbf16, #tpu.memory_space<vmem>>) attributes {dimension_semantics = [#tpu.dimension_semantics<parallel>], iteration_bounds = array<i64: 1>, scalar_prefetch = 0 : i64, scratch_operands = 0 : i64, tpu.core_type = #tpu.core_type<tc>, window_params = [{transform_indices = @transform_0, window_bounds = array<i64: 8, 784>}, {transform_indices = @transform_1, window_bounds = array<i64: 8, 20>}, {pipeline_mode = #tpu.pipeline_mode<synchronous>, transform_indices = @transform_2, window_bounds = array<i64: 784, 400>}, {pipeline_mode = #tpu.pipeline_mode<synchronous>, transform_indices = @transform_3, window_bounds = array<i64: 1, 400>}, {pipeline_mode = #tpu.pipeline_mode<synchronous>, transform_indices = @transform_4, window_bounds = array<i64: 400, 256>}, {pipeline_mode = #tpu.pipeline_mode<synchronous>, transform_indices = @transform_5, window_bounds = array<i64: 1, 256>}, {pipeline_mode = #tpu.pipeline_mode<synchronous>, transform_indices = @transform_6, window_bounds = array<i64: 20, 400>}, {pipeline_mode = #tpu.pipeline_mode<synchronous>, transform_indices = @transform_7, window_bounds = array<i64: 1, 400>}, {pipeline_mode = #tpu.pipeline_mode<synchronous>, transform_indices = @transform_8, window_bounds = array<i64: 400, 784>}, {pipeline_mode = #tpu.pipeline_mode<synchronous>, transform_indices = @transform_9, window_bounds = array<i64: 1, 784>}, {transform_indices = @transform_10, window_bounds = array<i64: 8, 784>}, {transform_indices = @transform_11, window_bounds = array<i64: 8, 256>}]} {
    %c0 = arith.constant 0 : index
    %c0_0 = arith.constant 0 : index
    %0 = vector.load %arg1[%c0, %c0_0] : memref<8x784xf32, #tpu.memory_space<vmem>>, vector<8x784xf32>
    %1 = arith.truncf %0 : vector<8x784xf32> to vector<8x784xbf16>
    %c0_1 = arith.constant 0 : index
    %c0_2 = arith.constant 0 : index
    %2 = vector.load %arg3[%c0_1, %c0_2] : memref<784x400xbf16, #tpu.memory_space<vmem>>, vector<784x400xbf16>
    %cst = arith.constant dense<0.000000e+00> : vector<8x400xf32>
    %3 = tpu.matmul %1, %2, %cst {dimension_numbers = #tpu.dot_dimension_numbers<[1], [0], [0], [1], [0, 0, 1, 1], [], []>} : vector<8x784xbf16>, vector<784x400xbf16>, vector<8x400xf32> -> vector<8x400xf32>
    %c0_3 = arith.constant 0 : index
    %c0_4 = arith.constant 0 : index
    %4 = vector.load %arg4[%c0_3, %c0_4] : memref<1x400xf32, #tpu.memory_space<vmem>>, vector<1x400xf32>
    %5 = vector.broadcast %4 : vector<1x400xf32> to vector<8x400xf32>
    %6 = arith.addf %3, %5 : vector<8x400xf32>
    %cst_5 = arith.constant 0.000000e+00 : f32
    %7 = vector.broadcast %cst_5 : f32 to vector<8x400xf32>
    %8 = arith.maximumf %6, %7 : vector<8x400xf32>
    %9 = arith.truncf %8 : vector<8x400xf32> to vector<8x400xbf16>
    %c0_6 = arith.constant 0 : index
    %c0_7 = arith.constant 0 : index
    %10 = vector.load %arg5[%c0_6, %c0_7] : memref<400x256xbf16, #tpu.memory_space<vmem>>, vector<400x256xbf16>
    %cst_8 = arith.constant dense<0.000000e+00> : vector<8x256xf32>
    %11 = tpu.matmul %9, %10, %cst_8 {dimension_numbers = #tpu.dot_dimension_numbers<[1], [0], [0], [1], [0, 0, 1, 1], [], []>} : vector<8x400xbf16>, vector<400x256xbf16>, vector<8x256xf32> -> vector<8x256xf32>
    %c0_9 = arith.constant 0 : index
    %c0_10 = arith.constant 0 : index
    %12 = vector.load %arg6[%c0_9, %c0_10] : memref<1x256xf32, #tpu.memory_space<vmem>>, vector<1x256xf32>
    %13 = vector.broadcast %12 : vector<1x256xf32> to vector<8x256xf32>
    %14 = arith.addf %11, %13 : vector<8x256xf32>
    %15 = vector.extract_strided_slice %14 {offsets = [0, 0], sizes = [8, 20], strides = [1, 1]} : vector<8x256xf32> to vector<8x20xf32>
    %16 = vector.extract_strided_slice %14 {offsets = [0, 128], sizes = [8, 20], strides = [1, 1]} : vector<8x256xf32> to vector<8x20xf32>
    %c0_11 = arith.constant 0 : index
    %c0_12 = arith.constant 0 : index
    %17 = vector.load %arg2[%c0_11, %c0_12] : memref<8x20xf32, #tpu.memory_space<vmem>>, vector<8x20xf32>
    %cst_13 = arith.constant 5.000000e-01 : f32
    %18 = vector.broadcast %cst_13 : f32 to vector<8x20xf32>
    %19 = arith.mulf %18, %16 : vector<8x20xf32>
    %20 = math.exp %19 : vector<8x20xf32>
    %21 = arith.mulf %17, %20 : vector<8x20xf32>
    %22 = arith.addf %15, %21 : vector<8x20xf32>
    %23 = arith.truncf %22 : vector<8x20xf32> to vector<8x20xbf16>
    %c0_14 = arith.constant 0 : index
    %c0_15 = arith.constant 0 : index
    %24 = vector.load %arg7[%c0_14, %c0_15] : memref<20x400xbf16, #tpu.memory_space<vmem>>, vector<20x400xbf16>
    %cst_16 = arith.constant dense<0.000000e+00> : vector<8x400xf32>
    %25 = tpu.matmul %23, %24, %cst_16 {dimension_numbers = #tpu.dot_dimension_numbers<[1], [0], [0], [1], [0, 0, 1, 1], [], []>} : vector<8x20xbf16>, vector<20x400xbf16>, vector<8x400xf32> -> vector<8x400xf32>
    %c0_17 = arith.constant 0 : index
    %c0_18 = arith.constant 0 : index
    %26 = vector.load %arg8[%c0_17, %c0_18] : memref<1x400xf32, #tpu.memory_space<vmem>>, vector<1x400xf32>
    %27 = vector.broadcast %26 : vector<1x400xf32> to vector<8x400xf32>
    %28 = arith.addf %25, %27 : vector<8x400xf32>
    %cst_19 = arith.constant 0.000000e+00 : f32
    %29 = vector.broadcast %cst_19 : f32 to vector<8x400xf32>
    %30 = arith.maximumf %28, %29 : vector<8x400xf32>
    %31 = arith.truncf %30 : vector<8x400xf32> to vector<8x400xbf16>
    %c0_20 = arith.constant 0 : index
    %c0_21 = arith.constant 0 : index
    %32 = vector.load %arg9[%c0_20, %c0_21] : memref<400x784xbf16, #tpu.memory_space<vmem>>, vector<400x784xbf16>
    %cst_22 = arith.constant dense<0.000000e+00> : vector<8x784xf32>
    %33 = tpu.matmul %31, %32, %cst_22 {dimension_numbers = #tpu.dot_dimension_numbers<[1], [0], [0], [1], [0, 0, 1, 1], [], []>} : vector<8x400xbf16>, vector<400x784xbf16>, vector<8x784xf32> -> vector<8x784xf32>
    %c0_23 = arith.constant 0 : index
    %c0_24 = arith.constant 0 : index
    %34 = vector.load %arg10[%c0_23, %c0_24] : memref<1x784xf32, #tpu.memory_space<vmem>>, vector<1x784xf32>
    %35 = vector.broadcast %34 : vector<1x784xf32> to vector<8x784xf32>
    %36 = arith.addf %33, %35 : vector<8x784xf32>
    %37 = arith.negf %36 : vector<8x784xf32>
    %38 = math.exp %37 : vector<8x784xf32>
    %cst_25 = arith.constant 1.000000e+00 : f32
    %39 = vector.broadcast %cst_25 : f32 to vector<8x784xf32>
    %40 = arith.addf %39, %38 : vector<8x784xf32>
    %41 = arith.divf %39, %40 : vector<8x784xf32>
    %42 = arith.truncf %41 : vector<8x784xf32> to vector<8x784xbf16>
    %c0_26 = arith.constant 0 : index
    %c0_27 = arith.constant 0 : index
    %43 = vector.load %arg11[%c0_26, %c0_27] : memref<8x784xbf16, #tpu.memory_space<vmem>>, vector<8x784xbf16>
    tpu.vector_store %arg11[%c0_26, %c0_27], %42 {strides = array<i32>} : memref<8x784xbf16, #tpu.memory_space<vmem>>, vector<8x784xbf16>,
    %44 = arith.truncf %14 : vector<8x256xf32> to vector<8x256xbf16>
    %c0_28 = arith.constant 0 : index
    %c0_29 = arith.constant 0 : index
    %45 = vector.load %arg12[%c0_28, %c0_29] : memref<8x256xbf16, #tpu.memory_space<vmem>>, vector<8x256xbf16>
    tpu.vector_store %arg12[%c0_28, %c0_29], %44 {strides = array<i32>} : memref<8x256xbf16, #tpu.memory_space<vmem>>, vector<8x256xbf16>,
    return
  }
  func.func @transform_0(%arg0: i32) -> (i32, i32) {
    %c0_i32 = arith.constant 0 : i32
    %c0_i32_0 = arith.constant 0 : i32
    return %arg0, %c0_i32 : i32, i32
  }
  func.func @transform_1(%arg0: i32) -> (i32, i32) {
    %c0_i32 = arith.constant 0 : i32
    %c0_i32_0 = arith.constant 0 : i32
    return %arg0, %c0_i32 : i32, i32
  }
  func.func @transform_2(%arg0: i32) -> (i32, i32) {
    %c0_i32 = arith.constant 0 : i32
    %c0_i32_0 = arith.constant 0 : i32
    %c0_i32_1 = arith.constant 0 : i32
    return %c0_i32, %c0_i32_0 : i32, i32
  }
  func.func @transform_3(%arg0: i32) -> (i32, i32) {
    %c0_i32 = arith.constant 0 : i32
    %c0_i32_0 = arith.constant 0 : i32
    %c0_i32_1 = arith.constant 0 : i32
    return %c0_i32, %c0_i32_0 : i32, i32
  }
  func.func @transform_4(%arg0: i32) -> (i32, i32) {
    %c0_i32 = arith.constant 0 : i32
    %c0_i32_0 = arith.constant 0 : i32
    %c0_i32_1 = arith.constant 0 : i32
    return %c0_i32, %c0_i32_0 : i32, i32
  }
  func.func @transform_5(%arg0: i32) -> (i32, i32) {
    %c0_i32 = arith.constant 0 : i32
    %c0_i32_0 = arith.constant 0 : i32
    %c0_i32_1 = arith.constant 0 : i32
    return %c0_i32, %c0_i32_0 : i32, i32
  }
  func.func @transform_6(%arg0: i32) -> (i32, i32) {
    %c0_i32 = arith.constant 0 : i32
    %c0_i32_0 = arith.constant 0 : i32
    %c0_i32_1 = arith.constant 0 : i32
    return %c0_i32, %c0_i32_0 : i32, i32
  }
  func.func @transform_7(%arg0: i32) -> (i32, i32) {
    %c0_i32 = arith.constant 0 : i32
    %c0_i32_0 = arith.constant 0 : i32
    %c0_i32_1 = arith.constant 0 : i32
    return %c0_i32, %c0_i32_0 : i32, i32
  }
  func.func @transform_8(%arg0: i32) -> (i32, i32) {
    %c0_i32 = arith.constant 0 : i32
    %c0_i32_0 = arith.constant 0 : i32
    %c0_i32_1 = arith.constant 0 : i32
    return %c0_i32, %c0_i32_0 : i32, i32
  }
  func.func @transform_9(%arg0: i32) -> (i32, i32) {
    %c0_i32 = arith.constant 0 : i32
    %c0_i32_0 = arith.constant 0 : i32
    %c0_i32_1 = arith.constant 0 : i32
    return %c0_i32, %c0_i32_0 : i32, i32
  }
  func.func @transform_10(%arg0: i32) -> (i32, i32) {
    %c0_i32 = arith.constant 0 : i32
    %c0_i32_0 = arith.constant 0 : i32
    return %arg0, %c0_i32 : i32, i32
  }
  func.func @transform_11(%arg0: i32) -> (i32, i32) {
    %c0_i32 = arith.constant 0 : i32
    %c0_i32_0 = arith.constant 0 : i32
    return %arg0, %c0_i32 : i32, i32
  }
}

</mosaic_0001>

<llo_original>
// kernel: vae_forward.1
$region0: #{vae_forward.1}
  #allocation0 [shape = 'u32[]', space=smem, size = 0x4, offset = 0x4, fixed_abs, tag = 'smem constant byte address 0x4 - core index']
  #allocation1 [shape = 'u32[72,128]{1,0:T(1,128)}', space=vmem, size = 0x9000, scoped, tag = 'internal scratch']
  %s0 = inlined_call_operand.vmem [shape: f32[8,784], index: 0, kind: input, shape index: {}]
  %s1 = inlined_call_operand.vmem [shape: f32[8,20], index: 1, kind: input, shape index: {}]
  %s2 = inlined_call_operand.vmem [shape: bf16[784,400], index: 2, kind: input, shape index: {}]
  %s3 = inlined_call_operand.vmem [shape: f32[1,400], index: 3, kind: input, shape index: {}]
  %s4 = inlined_call_operand.vmem [shape: bf16[400,256], index: 4, kind: input, shape index: {}]
  %s5 = inlined_call_operand.vmem [shape: f32[1,256], index: 5, kind: input, shape index: {}]
  %s6 = inlined_call_operand.vmem [shape: bf16[20,400], index: 6, kind: input, shape index: {}]
  %s7 = inlined_call_operand.vmem [shape: f32[1,400], index: 7, kind: input, shape index: {}]
  %s8 = inlined_call_operand.vmem [shape: bf16[400,784], index: 8, kind: input, shape index: {}]
  %s9 = inlined_call_operand.vmem [shape: f32[1,784], index: 9, kind: input, shape index: {}]
  %s10 = inlined_call_operand.hbm [shape: bf16[8,784], index: 10, kind: output, shape index: {0}]
  %s11 = inlined_call_operand.vmem [shape: bf16[8,256], index: 11, kind: output, shape index: {1}]
  %12 = xla_tuple %s10, %s11
  %s13 = sld [smem:[#allocation0]]
  $region58: #{vae_forward.1} parent=0
    _
  %s15 = ssub.s32 1, %s13
  %s16 = scalar_select 0, %s15, %s13
  $region1: #{vae_forward.1} parent=0
    #allocation2 [shape = 'u8[14336]{0}', space=vmem, size = 0x3800, scoped, tag = 'output window, operand 0, single buffered']
    #allocation3 [shape = 's32[1]{0}', space=sflag, size = 0x4, scoped, tag = 'scoped memory for vae_forward.1']
    %17 = vsyncpa [#allocation3], 0
    // Predicated region
    $region2: #{vae_forward.1} parent=1 // pred_check
      _
    $region3: #{vae_forward.1} parent=1 // pred_check_branch
      %19 = sbr.rel (0) target = $region5
    $region4: #{vae_forward.1} parent=1 // pred_region
      _
    $region5: #{vae_forward.1} parent=1 // pred_fallthru
      _
    // Predicated region
    $region6: #{vae_forward.1} parent=1 // pred_check
      _
    $region7: #{vae_forward.1} parent=1 // pred_check_branch
      %21 = sbr.rel (0) target = $region9
    $region8: #{vae_forward.1} parent=1 // pred_region
      _
    $region9: #{vae_forward.1} parent=1 // pred_fallthru
      _
    // Predicated region
    $region10: #{vae_forward.1} parent=1 // pred_check
      _
    $region11: #{vae_forward.1} parent=1 // pred_check_branch
      %23 = sbr.rel (0) target = $region13
    $region12: #{vae_forward.1} parent=1 // pred_region
      _
    $region13: #{vae_forward.1} parent=1 // pred_fallthru
      _
    // Predicated region
    $region14: #{vae_forward.1} parent=1 // pred_check
      _
    $region15: #{vae_forward.1} parent=1 // pred_check_branch
      %25 = sbr.rel (0) target = $region17
    $region16: #{vae_forward.1} parent=1 // pred_region
      _
    $region17: #{vae_forward.1} parent=1 // pred_fallthru
      _
    // Predicated region
    $region18: #{vae_forward.1} parent=1 // pred_check
      _
    $region19: #{vae_forward.1} parent=1 // pred_check_branch
      %27 = sbr.rel (0) target = $region21
    $region20: #{vae_forward.1} parent=1 // pred_region
      _
    $region21: #{vae_forward.1} parent=1 // pred_fallthru
      _
    // Predicated region
    $region22: #{vae_forward.1} parent=1 // pred_check
      _
    $region23: #{vae_forward.1} parent=1 // pred_check_branch
      %29 = sbr.rel (0) target = $region25
    $region24: #{vae_forward.1} parent=1 // pred_region
      _
    $region25: #{vae_forward.1} parent=1 // pred_fallthru
      _
    // Predicated region
    $region26: #{vae_forward.1} parent=1 // pred_check
      _
    $region27: #{vae_forward.1} parent=1 // pred_check_branch
      %31 = sbr.rel (0) target = $region29
    $region28: #{vae_forward.1} parent=1 // pred_region
      _
    $region29: #{vae_forward.1} parent=1 // pred_fallthru
      _
    // Predicated region
    $region30: #{vae_forward.1} parent=1 // pred_check
      _
    $region31: #{vae_forward.1} parent=1 // pred_check_branch
      %33 = sbr.rel (0) target = $region33
    $region32: #{vae_forward.1} parent=1 // pred_region
      _
    $region33: #{vae_forward.1} parent=1 // pred_fallthru
      _
    // Predicated region
    $region34: #{vae_forward.1} parent=1 // pred_check
      _
    $region35: #{vae_forward.1} parent=1 // pred_check_branch
      %35 = sbr.rel (0) target = $region37
    $region36: #{vae_forward.1} parent=1 // pred_region
      _
    $region37: #{vae_forward.1} parent=1 // pred_fallthru
      _
    // Predicated region
    $region38: #{vae_forward.1} parent=1 // pred_check
      _
    $region39: #{vae_forward.1} parent=1 // pred_check_branch
      %37 = sbr.rel (0) target = $region41
    $region40: #{vae_forward.1} parent=1 // pred_region
      _
    $region41: #{vae_forward.1} parent=1 // pred_fallthru
      _
    %v39 = vld [vmem:[%s0] sm:$0xff]
    %v40 = vld [vmem:[%s0 + $0x8] sm:$0xff]
    %v41 = vld [vmem:[%s0 + $0x10] sm:$0xff]
    %v42 = vld [vmem:[%s0 + $0x18] sm:$0xff]
    %v43 = vld [vmem:[%s0 + $0x20] sm:$0xff]
    %v44 = vld [vmem:[%s0 + $0x28] sm:$0xff]
    %v45 = vld [vmem:[%s0 + $0x30] sm:$0xff]
    %v46 = vpack.c.bf16 %v39, %v39
    %v47 = vpack.c.bf16 %v40, %v40
    %v48 = vpack.c.bf16 %v41, %v41
    %v49 = vpack.c.bf16 %v42, %v42
    %v50 = vpack.c.bf16 %v43, %v43
    %v51 = vpack.c.bf16 %v44, %v44
    %v52 = vpack.c.bf16 %v45, %v45
    %v53 = vld [vmem:[%s2] sm:$0xff]
    %v54 = vld [vmem:[%s2 + $0x8] sm:$0xff]
    %v55 = vld [vmem:[%s2 + $0x10] sm:$0xff]
    %v56 = vld [vmem:[%s2 + $0x18] sm:$0xff]
    %v57 = vld [vmem:[%s2 + $0x20] sm:$0xff]
    %v58 = vld [vmem:[%s2 + $0x28] sm:$0xff]
    %v59 = vld [vmem:[%s2 + $0x30] sm:$0xff]
    %v60 = vld [vmem:[%s2 + $0x38] sm:$0xff]
    %v61 = vld [vmem:[%s2 + $0x40] sm:$0xff]
    %v62 = vld [vmem:[%s2 + $0x48] sm:$0xff]
    %v63 = vld [vmem:[%s2 + $0x50] sm:$0xff]
    %v64 = vld [vmem:[%s2 + $0x58] sm:$0xff]
    %v65 = vld [vmem:[%s2 + $0x60] sm:$0xff]
    %v66 = vld [vmem:[%s2 + $0x68] sm:$0xff]
    %v67 = vld [vmem:[%s2 + $0x70] sm:$0xff]
    %v68 = vld [vmem:[%s2 + $0x78] sm:$0xff]
    %v69 = vld [vmem:[%s2 + $0x80] sm:$0xff]
    %v70 = vld [vmem:[%s2 + $0x88] sm:$0xff]
    %v71 = vld [vmem:[%s2 + $0x90] sm:$0xff]
    %v72 = vld [vmem:[%s2 + $0x98] sm:$0xff]
    %v73 = vld [vmem:[%s2 + $0xa0] sm:$0xff]
    %v74 = vld [vmem:[%s2 + $0xa8] sm:$0xff]
    %v75 = vld [vmem:[%s2 + $0xb0] sm:$0xff]
    %v76 = vld [vmem:[%s2 + $0xb8] sm:$0xff]
    %v77 = vld [vmem:[%s2 + $0xc0] sm:$0xff]
    %v78 = vld [vmem:[%s2 + $0xc8] sm:$0xff]
    %v79 = vld [vmem:[%s2 + $0xd0] sm:$0xff]
    %v80 = vld [vmem:[%s2 + $0xd8] sm:$0xff]
    %v81 = vld [vmem:[%s2 + $0xe0] sm:$0xff]
    %v82 = vld [vmem:[%s2 + $0xe8] sm:$0xff]
    %v83 = vld [vmem:[%s2 + $0xf0] sm:$0xff]
    %v84 = vld [vmem:[%s2 + $0xf8] sm:$0xff]
    %v85 = vld [vmem:[%s2 + $0x100] sm:$0xff]
    %v86 = vld [vmem:[%s2 + $0x108] sm:$0xff]
    %v87 = vld [vmem:[%s2 + $0x110] sm:$0xff]
    %v88 = vld [vmem:[%s2 + $0x118] sm:$0xff]
    %v89 = vld [vmem:[%s2 + $0x120] sm:$0xff]
    %v90 = vld [vmem:[%s2 + $0x128] sm:$0xff]
    %v91 = vld [vmem:[%s2 + $0x130] sm:$0xff]
    %v92 = vld [vmem:[%s2 + $0x138] sm:$0xff]
    %v93 = vld [vmem:[%s2 + $0x140] sm:$0xff]
    %v94 = vld [vmem:[%s2 + $0x148] sm:$0xff]
    %v95 = vld [vmem:[%s2 + $0x150] sm:$0xff]
    %v96 = vld [vmem:[%s2 + $0x158] sm:$0xff]
    %v97 = vld [vmem:[%s2 + $0x160] sm:$0xff]
    %v98 = vld [vmem:[%s2 + $0x168] sm:$0xff]
    %v99 = vld [vmem:[%s2 + $0x170] sm:$0xff]
    %v100 = vld [vmem:[%s2 + $0x178] sm:$0xff]
    %v101 = vld [vmem:[%s2 + $0x180] sm:$0xff]
    %v102 = vld [vmem:[%s2 + $0x188] sm:$0xff]
    %v103 = vld [vmem:[%s2 + $0x190] sm:$0xff]
    %v104 = vld [vmem:[%s2 + $0x198] sm:$0xff]
    %v105 = vld [vmem:[%s2 + $0x1a0] sm:$0xff]
    %v106 = vld [vmem:[%s2 + $0x1a8] sm:$0xff]
    %v107 = vld [vmem:[%s2 + $0x1b0] sm:$0xff]
    %v108 = vld [vmem:[%s2 + $0x1b8] sm:$0xff]
    %v109 = vld [vmem:[%s2 + $0x1c0] sm:$0xff]
    %v110 = vld [vmem:[%s2 + $0x1c8] sm:$0xff]
    %v111 = vld [vmem:[%s2 + $0x1d0] sm:$0xff]
    %v112 = vld [vmem:[%s2 + $0x1d8] sm:$0xff]
    %v113 = vld [vmem:[%s2 + $0x1e0] sm:$0xff]
    %v114 = vld [vmem:[%s2 + $0x1e8] sm:$0xff]
    %v115 = vld [vmem:[%s2 + $0x1f0] sm:$0xff]
    %v116 = vld [vmem:[%s2 + $0x1f8] sm:$0xff]
    %v117 = vld [vmem:[%s2 + $0x200] sm:$0xff]
    %v118 = vld [vmem:[%s2 + $0x208] sm:$0xff]
    %v119 = vld [vmem:[%s2 + $0x210] sm:$0xff]
    %v120 = vld [vmem:[%s2 + $0x218] sm:$0xff]
    %v121 = vld [vmem:[%s2 + $0x220] sm:$0xff]
    %v122 = vld [vmem:[%s2 + $0x228] sm:$0xff]
    %v123 = vld [vmem:[%s2 + $0x230] sm:$0xff]
    %v124 = vld [vmem:[%s2 + $0x238] sm:$0xff]
    %v125 = vld [vmem:[%s2 + $0x240] sm:$0xff]
    %v126 = vld [vmem:[%s2 + $0x248] sm:$0xff]
    %v127 = vld [vmem:[%s2 + $0x250] sm:$0xff]
    %v128 = vld [vmem:[%s2 + $0x258] sm:$0xff]
    %v129 = vld [vmem:[%s2 + $0x260] sm:$0xff]
    %v130 = vld [vmem:[%s2 + $0x268] sm:$0xff]
    %v131 = vld [vmem:[%s2 + $0x270] sm:$0xff]
    %v132 = vld [vmem:[%s2 + $0x278] sm:$0xff]
    %v133 = vld [vmem:[%s2 + $0x280] sm:$0xff]
    %v134 = vld [vmem:[%s2 + $0x288] sm:$0xff]
    %v135 = vld [vmem:[%s2 + $0x290] sm:$0xff]
    %v136 = vld [vmem:[%s2 + $0x298] sm:$0xff]
    %v137 = vld [vmem:[%s2 + $0x2a0] sm:$0xff]
    %v138 = vld [vmem:[%s2 + $0x2a8] sm:$0xff]
    %v139 = vld [vmem:[%s2 + $0x2b0] sm:$0xff]
    %v140 = vld [vmem:[%s2 + $0x2b8] sm:$0xff]
    %v141 = vld [vmem:[%s2 + $0x2c0] sm:$0xff]
    %v142 = vld [vmem:[%s2 + $0x2c8] sm:$0xff]
    %v143 = vld [vmem:[%s2 + $0x2d0] sm:$0xff]
    %v144 = vld [vmem:[%s2 + $0x2d8] sm:$0xff]
    %v145 = vld [vmem:[%s2 + $0x2e0] sm:$0xff]
    %v146 = vld [vmem:[%s2 + $0x2e8] sm:$0xff]
    %v147 = vld [vmem:[%s2 + $0x2f0] sm:$0xff]
    %v148 = vld [vmem:[%s2 + $0x2f8] sm:$0xff]
    %v149 = vld [vmem:[%s2 + $0x300] sm:$0xff]
    %v150 = vld [vmem:[%s2 + $0x308] sm:$0xff]
    %v151 = vld [vmem:[%s2 + $0x310] sm:$0xff]
    %v152 = vld [vmem:[%s2 + $0x318] sm:$0xff]
    %v153 = vld [vmem:[%s2 + $0x320] sm:$0xff]
    %v154 = vld [vmem:[%s2 + $0x328] sm:$0xff]
    %v155 = vld [vmem:[%s2 + $0x330] sm:$0xff]
    %v156 = vld [vmem:[%s2 + $0x338] sm:$0xff]
    %v157 = vld [vmem:[%s2 + $0x340] sm:$0xff]
    %v158 = vld [vmem:[%s2 + $0x348] sm:$0xff]
    %v159 = vld [vmem:[%s2 + $0x350] sm:$0xff]
    %v160 = vld [vmem:[%s2 + $0x358] sm:$0xff]
    %v161 = vld [vmem:[%s2 + $0x360] sm:$0xff]
    %v162 = vld [vmem:[%s2 + $0x368] sm:$0xff]
    %v163 = vld [vmem:[%s2 + $0x370] sm:$0xff]
    %v164 = vld [vmem:[%s2 + $0x378] sm:$0xff]
    %v165 = vld [vmem:[%s2 + $0x380] sm:$0xff]
    %v166 = vld [vmem:[%s2 + $0x388] sm:$0xff]
    %v167 = vld [vmem:[%s2 + $0x390] sm:$0xff]
    %v168 = vld [vmem:[%s2 + $0x398] sm:$0xff]
    %v169 = vld [vmem:[%s2 + $0x3a0] sm:$0xff]
    %v170 = vld [vmem:[%s2 + $0x3a8] sm:$0xff]
    %v171 = vld [vmem:[%s2 + $0x3b0] sm:$0xff]
    %v172 = vld [vmem:[%s2 + $0x3b8] sm:$0xff]
    %v173 = vld [vmem:[%s2 + $0x3c0] sm:$0xff]
    %v174 = vld [vmem:[%s2 + $0x3c8] sm:$0xff]
    %v175 = vld [vmem:[%s2 + $0x3d0] sm:$0xff]
    %v176 = vld [vmem:[%s2 + $0x3d8] sm:$0xff]
    %v177 = vld [vmem:[%s2 + $0x3e0] sm:$0xff]
    %v178 = vld [vmem:[%s2 + $0x3e8] sm:$0xff]
    %v179 = vld [vmem:[%s2 + $0x3f0] sm:$0xff]
    %v180 = vld [vmem:[%s2 + $0x3f8] sm:$0xff]
    %v181 = vld [vmem:[%s2 + $0x400] sm:$0xff]
    %v182 = vld [vmem:[%s2 + $0x408] sm:$0xff]
    %v183 = vld [vmem:[%s2 + $0x410] sm:$0xff]
    %v184 = vld [vmem:[%s2 + $0x418] sm:$0xff]
    %v185 = vld [vmem:[%s2 + $0x420] sm:$0xff]
    %v186 = vld [vmem:[%s2 + $0x428] sm:$0xff]
    %v187 = vld [vmem:[%s2 + $0x430] sm:$0xff]
    %v188 = vld [vmem:[%s2 + $0x438] sm:$0xff]
    %v189 = vld [vmem:[%s2 + $0x440] sm:$0xff]
    %v190 = vld [vmem:[%s2 + $0x448] sm:$0xff]
    %v191 = vld [vmem:[%s2 + $0x450] sm:$0xff]
    %v192 = vld [vmem:[%s2 + $0x458] sm:$0xff]
    %v193 = vld [vmem:[%s2 + $0x460] sm:$0xff]
    %v194 = vld [vmem:[%s2 + $0x468] sm:$0xff]
    %v195 = vld [vmem:[%s2 + $0x470] sm:$0xff]
    %v196 = vld [vmem:[%s2 + $0x478] sm:$0xff]
    %v197 = vld [vmem:[%s2 + $0x480] sm:$0xff]
    %v198 = vld [vmem:[%s2 + $0x488] sm:$0xff]
    %v199 = vld [vmem:[%s2 + $0x490] sm:$0xff]
    %v200 = vld [vmem:[%s2 + $0x498] sm:$0xff]
    %v201 = vld [vmem:[%s2 + $0x4a0] sm:$0xff]
    %v202 = vld [vmem:[%s2 + $0x4a8] sm:$0xff]
    %v203 = vld [vmem:[%s2 + $0x4b0] sm:$0xff]
    %v204 = vld [vmem:[%s2 + $0x4b8] sm:$0xff]
    %v205 = vld [vmem:[%s2 + $0x4c0] sm:$0xff]
    %v206 = vld [vmem:[%s2 + $0x4c8] sm:$0xff]
    %v207 = vld [vmem:[%s2 + $0x4d0] sm:$0xff]
    %v208 = vld [vmem:[%s2 + $0x4d8] sm:$0xff]
    %v209 = vld [vmem:[%s2 + $0x4e0] sm:$0xff]
    %v210 = vld [vmem:[%s2 + $0x4e8] sm:$0xff]
    %v211 = vld [vmem:[%s2 + $0x4f0] sm:$0xff]
    %v212 = vld [vmem:[%s2 + $0x4f8] sm:$0xff]
    %v213 = vld [vmem:[%s2 + $0x500] sm:$0xff]
    %v214 = vld [vmem:[%s2 + $0x508] sm:$0xff]
    %v215 = vld [vmem:[%s2 + $0x510] sm:$0xff]
    %v216 = vld [vmem:[%s2 + $0x518] sm:$0xff]
    %v217 = vld [vmem:[%s2 + $0x520] sm:$0xff]
    %v218 = vld [vmem:[%s2 + $0x528] sm:$0xff]
    %v219 = vld [vmem:[%s2 + $0x530] sm:$0xff]
    %v220 = vld [vmem:[%s2 + $0x538] sm:$0xff]
    %v221 = vld [vmem:[%s2 + $0x540] sm:$0xff]
    %v222 = vld [vmem:[%s2 + $0x548] sm:$0xff]
    %v223 = vld [vmem:[%s2 + $0x550] sm:$0xff]
    %v224 = vld [vmem:[%s2 + $0x558] sm:$0xff]
    %v225 = vld [vmem:[%s2 + $0x560] sm:$0xff]
    %v226 = vld [vmem:[%s2 + $0x568] sm:$0xff]
    %v227 = vld [vmem:[%s2 + $0x570] sm:$0xff]
    %v228 = vld [vmem:[%s2 + $0x578] sm:$0xff]
    %v229 = vld [vmem:[%s2 + $0x580] sm:$0xff]
    %v230 = vld [vmem:[%s2 + $0x588] sm:$0xff]
    %v231 = vld [vmem:[%s2 + $0x590] sm:$0xff]
    %v232 = vld [vmem:[%s2 + $0x598] sm:$0xff]
    %v233 = vld [vmem:[%s2 + $0x5a0] sm:$0xff]
    %v234 = vld [vmem:[%s2 + $0x5a8] sm:$0xff]
    %v235 = vld [vmem:[%s2 + $0x5b0] sm:$0xff]
    %v236 = vld [vmem:[%s2 + $0x5b8] sm:$0xff]
    %v237 = vld [vmem:[%s2 + $0x5c0] sm:$0xff]
    %v238 = vld [vmem:[%s2 + $0x5c8] sm:$0xff]
    %v239 = vld [vmem:[%s2 + $0x5d0] sm:$0xff]
    %v240 = vld [vmem:[%s2 + $0x5d8] sm:$0xff]
    %v241 = vld [vmem:[%s2 + $0x5e0] sm:$0xff]
    %v242 = vld [vmem:[%s2 + $0x5e8] sm:$0xff]
    %v243 = vld [vmem:[%s2 + $0x5f0] sm:$0xff]
    %v244 = vld [vmem:[%s2 + $0x5f8] sm:$0xff]
    %v245 = vld [vmem:[%s2 + $0x600] sm:$0xff]
    %v246 = vld [vmem:[%s2 + $0x608] sm:$0xff]
    %v247 = vld [vmem:[%s2 + $0x610] sm:$0xff]
    %v248 = vld [vmem:[%s2 + $0x618] sm:$0xff]
    %v249 = vld [vmem:[%s3] sm:$0xf]
    %v251 = vperm.slane %v249, 0
    %v252 = vperm.slane %v249, 1
    %v253 = vperm.slane %v249, 2
    %v254 = vperm.slane %v249, 3
    %v455 = vunpack.c.l.b16 %v53
    %v456 = vunpack.c.h.b16 %v53
    %v457 = vunpack.c.l.b16 %v54
    %v458 = vunpack.c.h.b16 %v54
    %v459 = vunpack.c.l.b16 %v55
    %v460 = vunpack.c.h.b16 %v55
    %v461 = vunpack.c.l.b16 %v56
    %v462 = vunpack.c.h.b16 %v56
    %v463 = vunpack.c.l.b16 %v57
    %v464 = vunpack.c.h.b16 %v57
    %v465 = vunpack.c.l.b16 %v58
    %v466 = vunpack.c.h.b16 %v58
    %v467 = vunpack.c.l.b16 %v59
    %v468 = vunpack.c.h.b16 %v59
    %v469 = vunpack.c.l.b16 %v60
    %v470 = vunpack.c.h.b16 %v60
    %v471 = vunpack.c.l.b16 %v61
    %v472 = vunpack.c.h.b16 %v61
    %v473 = vunpack.c.l.b16 %v62
    %v474 = vunpack.c.h.b16 %v62
    %v475 = vunpack.c.l.b16 %v63
    %v476 = vunpack.c.h.b16 %v63
    %v477 = vunpack.c.l.b16 %v64
    %v478 = vunpack.c.h.b16 %v64
    %v479 = vunpack.c.l.b16 %v65
    %v480 = vunpack.c.h.b16 %v65
    %v481 = vunpack.c.l.b16 %v66
    %v482 = vunpack.c.h.b16 %v66
    %v483 = vunpack.c.l.b16 %v67
    %v484 = vunpack.c.h.b16 %v67
    %v485 = vunpack.c.l.b16 %v68
    %v486 = vunpack.c.h.b16 %v68
    %v487 = vunpack.c.l.b16 %v69
    %v488 = vunpack.c.h.b16 %v69
    %v489 = vunpack.c.l.b16 %v70
    %v490 = vunpack.c.h.b16 %v70
    %v491 = vunpack.c.l.b16 %v71
    %v492 = vunpack.c.h.b16 %v71
    %v493 = vunpack.c.l.b16 %v72
    %v494 = vunpack.c.h.b16 %v72
    %v495 = vunpack.c.l.b16 %v73
    %v496 = vunpack.c.h.b16 %v73
    %v497 = vunpack.c.l.b16 %v74
    %v498 = vunpack.c.h.b16 %v74
    %v499 = vunpack.c.l.b16 %v75
    %v500 = vunpack.c.h.b16 %v75
    %v501 = vunpack.c.l.b16 %v76
    %v502 = vunpack.c.h.b16 %v76
    %v503 = vunpack.c.l.b16 %v77
    %v504 = vunpack.c.h.b16 %v77
    %v505 = vunpack.c.l.b16 %v78
    %v506 = vunpack.c.h.b16 %v78
    %v507 = vunpack.c.l.b16 %v79
    %v508 = vunpack.c.h.b16 %v79
    %v509 = vunpack.c.l.b16 %v80
    %v510 = vunpack.c.h.b16 %v80
    %v511 = vunpack.c.l.b16 %v81
    %v512 = vunpack.c.h.b16 %v81
    %v513 = vunpack.c.l.b16 %v82
    %v514 = vunpack.c.h.b16 %v82
    %v515 = vunpack.c.l.b16 %v83
    %v516 = vunpack.c.h.b16 %v83
    %v517 = vunpack.c.l.b16 %v84
    %v518 = vunpack.c.h.b16 %v84
    %v519 = vunpack.c.l.b16 %v85
    %v520 = vunpack.c.h.b16 %v85
    %v521 = vunpack.c.l.b16 %v86
    %v522 = vunpack.c.h.b16 %v86
    %v523 = vunpack.c.l.b16 %v87
    %v524 = vunpack.c.h.b16 %v87
    %v525 = vunpack.c.l.b16 %v88
    %v526 = vunpack.c.h.b16 %v88
    %v527 = vunpack.c.l.b16 %v89
    %v528 = vunpack.c.h.b16 %v89
    %v529 = vunpack.c.l.b16 %v90
    %v530 = vunpack.c.h.b16 %v90
    %v531 = vunpack.c.l.b16 %v91
    %v532 = vunpack.c.h.b16 %v91
    %v533 = vunpack.c.l.b16 %v92
    %v534 = vunpack.c.h.b16 %v92
    %v535 = vunpack.c.l.b16 %v93
    %v536 = vunpack.c.h.b16 %v93
    %v537 = vunpack.c.l.b16 %v94
    %v538 = vunpack.c.h.b16 %v94
    %v539 = vunpack.c.l.b16 %v95
    %v540 = vunpack.c.h.b16 %v95
    %v541 = vunpack.c.l.b16 %v96
    %v542 = vunpack.c.h.b16 %v96
    %v543 = vunpack.c.l.b16 %v97
    %v544 = vunpack.c.h.b16 %v97
    %v545 = vunpack.c.l.b16 %v98
    %v546 = vunpack.c.h.b16 %v98
    %v547 = vunpack.c.l.b16 %v99
    %v548 = vunpack.c.h.b16 %v99
    %v549 = vunpack.c.l.b16 %v100
    %v550 = vunpack.c.h.b16 %v100
    %v551 = vunpack.c.l.b16 %v101
    %v552 = vunpack.c.h.b16 %v101
    %v553 = vunpack.c.l.b16 %v102
    %v554 = vunpack.c.h.b16 %v102
    %v555 = vunpack.c.l.b16 %v103
    %v556 = vunpack.c.h.b16 %v103
    %v557 = vunpack.c.l.b16 %v104
    %v558 = vunpack.c.h.b16 %v104
    %v559 = vunpack.c.l.b16 %v105
    %v560 = vunpack.c.h.b16 %v105
    %v561 = vunpack.c.l.b16 %v106
    %v562 = vunpack.c.h.b16 %v106
    %v563 = vunpack.c.l.b16 %v107
    %v564 = vunpack.c.h.b16 %v107
    %v565 = vunpack.c.l.b16 %v108
    %v566 = vunpack.c.h.b16 %v108
    %v567 = vunpack.c.l.b16 %v109
    %v568 = vunpack.c.h.b16 %v109
    %v569 = vunpack.c.l.b16 %v110
    %v570 = vunpack.c.h.b16 %v110
    %v571 = vunpack.c.l.b16 %v111
    %v572 = vunpack.c.h.b16 %v111
    %v573 = vunpack.c.l.b16 %v112
    %v574 = vunpack.c.h.b16 %v112
    %v575 = vunpack.c.l.b16 %v113
    %v576 = vunpack.c.h.b16 %v113
    %v577 = vunpack.c.l.b16 %v114
    %v578 = vunpack.c.h.b16 %v114
    %v579 = vunpack.c.l.b16 %v115
    %v580 = vunpack.c.h.b16 %v115
    %v581 = vunpack.c.l.b16 %v116
    %v582 = vunpack.c.h.b16 %v116
    %v583 = vunpack.c.l.b16 %v117
    %v584 = vunpack.c.h.b16 %v117
    %v585 = vunpack.c.l.b16 %v118
    %v586 = vunpack.c.h.b16 %v118
    %v587 = vunpack.c.l.b16 %v119
    %v588 = vunpack.c.h.b16 %v119
    %v589 = vunpack.c.l.b16 %v120
    %v590 = vunpack.c.h.b16 %v120
    %v591 = vunpack.c.l.b16 %v121
    %v592 = vunpack.c.h.b16 %v121
    %v593 = vunpack.c.l.b16 %v122
    %v594 = vunpack.c.h.b16 %v122
    %v595 = vunpack.c.l.b16 %v123
    %v596 = vunpack.c.h.b16 %v123
    %v597 = vunpack.c.l.b16 %v124
    %v598 = vunpack.c.h.b16 %v124
    %v599 = vunpack.c.l.b16 %v125
    %v600 = vunpack.c.h.b16 %v125
    %v601 = vunpack.c.l.b16 %v126
    %v602 = vunpack.c.h.b16 %v126
    %v603 = vunpack.c.l.b16 %v127
    %v604 = vunpack.c.h.b16 %v127
    %v605 = vunpack.c.l.b16 %v128
    %v606 = vunpack.c.h.b16 %v128
    %v607 = vunpack.c.l.b16 %v129
    %v608 = vunpack.c.h.b16 %v129
    %v609 = vunpack.c.l.b16 %v130
    %v610 = vunpack.c.h.b16 %v130
    %v611 = vunpack.c.l.b16 %v131
    %v612 = vunpack.c.h.b16 %v131
    %v613 = vunpack.c.l.b16 %v132
    %v614 = vunpack.c.h.b16 %v132
    %v615 = vunpack.c.l.b16 %v133
    %v616 = vunpack.c.h.b16 %v133
    %v617 = vunpack.c.l.b16 %v134
    %v618 = vunpack.c.h.b16 %v134
    %v619 = vunpack.c.l.b16 %v135
    %v620 = vunpack.c.h.b16 %v135
    %v621 = vunpack.c.l.b16 %v136
    %v622 = vunpack.c.h.b16 %v136
    %v623 = vunpack.c.l.b16 %v137
    %v624 = vunpack.c.h.b16 %v137
    %v625 = vunpack.c.l.b16 %v138
    %v626 = vunpack.c.h.b16 %v138
    %v627 = vunpack.c.l.b16 %v139
    %v628 = vunpack.c.h.b16 %v139
    %v629 = vunpack.c.l.b16 %v140
    %v630 = vunpack.c.h.b16 %v140
    %v631 = vunpack.c.l.b16 %v141
    %v632 = vunpack.c.h.b16 %v141
    %v633 = vunpack.c.l.b16 %v142
    %v634 = vunpack.c.h.b16 %v142
    %v635 = vunpack.c.l.b16 %v143
    %v636 = vunpack.c.h.b16 %v143
    %v637 = vunpack.c.l.b16 %v144
    %v638 = vunpack.c.h.b16 %v144
    %v639 = vunpack.c.l.b16 %v145
    %v640 = vunpack.c.h.b16 %v145
    %v641 = vunpack.c.l.b16 %v146
    %v642 = vunpack.c.h.b16 %v146
    %v643 = vunpack.c.l.b16 %v147
    %v644 = vunpack.c.h.b16 %v147
    %v645 = vunpack.c.l.b16 %v148
    %v646 = vunpack.c.h.b16 %v148
    %v647 = vunpack.c.l.b16 %v149
    %v648 = vunpack.c.h.b16 %v149
    %v649 = vunpack.c.l.b16 %v150
    %v650 = vunpack.c.h.b16 %v150
    %v651 = vunpack.c.l.b16 %v151
    %v652 = vunpack.c.h.b16 %v151
    %v653 = vunpack.c.l.b16 %v152
    %v654 = vunpack.c.h.b16 %v152
    %v655 = vunpack.c.l.b16 %v153
    %v656 = vunpack.c.h.b16 %v153
    %v657 = vunpack.c.l.b16 %v154
    %v658 = vunpack.c.h.b16 %v154
    %v659 = vunpack.c.l.b16 %v155
    %v660 = vunpack.c.h.b16 %v155
    %v661 = vunpack.c.l.b16 %v156
    %v662 = vunpack.c.h.b16 %v156
    %v663 = vunpack.c.l.b16 %v157
    %v664 = vunpack.c.h.b16 %v157
    %v665 = vunpack.c.l.b16 %v158
    %v666 = vunpack.c.h.b16 %v158
    %v667 = vunpack.c.l.b16 %v159
    %v668 = vunpack.c.h.b16 %v159
    %v669 = vunpack.c.l.b16 %v160
    %v670 = vunpack.c.h.b16 %v160
    %v671 = vunpack.c.l.b16 %v161
    %v672 = vunpack.c.h.b16 %v161
    %v673 = vunpack.c.l.b16 %v162
    %v674 = vunpack.c.h.b16 %v162
    %v675 = vunpack.c.l.b16 %v163
    %v676 = vunpack.c.h.b16 %v163
    %v677 = vunpack.c.l.b16 %v164
    %v678 = vunpack.c.h.b16 %v164
    %v679 = vunpack.c.l.b16 %v165
    %v680 = vunpack.c.h.b16 %v165
    %v681 = vunpack.c.l.b16 %v166
    %v682 = vunpack.c.h.b16 %v166
    %v683 = vunpack.c.l.b16 %v167
    %v684 = vunpack.c.h.b16 %v167
    %v685 = vunpack.c.l.b16 %v168
    %v686 = vunpack.c.h.b16 %v168
    %v687 = vunpack.c.l.b16 %v169
    %v688 = vunpack.c.h.b16 %v169
    %v689 = vunpack.c.l.b16 %v170
    %v690 = vunpack.c.h.b16 %v170
    %v691 = vunpack.c.l.b16 %v171
    %v692 = vunpack.c.h.b16 %v171
    %v693 = vunpack.c.l.b16 %v172
    %v694 = vunpack.c.h.b16 %v172
    %v695 = vunpack.c.l.b16 %v173
    %v696 = vunpack.c.h.b16 %v173
    %v697 = vunpack.c.l.b16 %v174
    %v698 = vunpack.c.h.b16 %v174
    %v699 = vunpack.c.l.b16 %v175
    %v700 = vunpack.c.h.b16 %v175
    %v701 = vunpack.c.l.b16 %v176
    %v702 = vunpack.c.h.b16 %v176
    %v703 = vunpack.c.l.b16 %v177
    %v704 = vunpack.c.h.b16 %v177
    %v705 = vunpack.c.l.b16 %v178
    %v706 = vunpack.c.h.b16 %v178
    %v707 = vunpack.c.l.b16 %v179
    %v708 = vunpack.c.h.b16 %v179
    %v709 = vunpack.c.l.b16 %v180
    %v710 = vunpack.c.h.b16 %v180
    %v711 = vunpack.c.l.b16 %v181
    %v712 = vunpack.c.h.b16 %v181
    %v713 = vunpack.c.l.b16 %v182
    %v714 = vunpack.c.h.b16 %v182
    %v715 = vunpack.c.l.b16 %v183
    %v716 = vunpack.c.h.b16 %v183
    %v717 = vunpack.c.l.b16 %v184
    %v718 = vunpack.c.h.b16 %v184
    %v719 = vunpack.c.l.b16 %v185
    %v720 = vunpack.c.h.b16 %v185
    %v721 = vunpack.c.l.b16 %v186
    %v722 = vunpack.c.h.b16 %v186
    %v723 = vunpack.c.l.b16 %v187
    %v724 = vunpack.c.h.b16 %v187
    %v725 = vunpack.c.l.b16 %v188
    %v726 = vunpack.c.h.b16 %v188
    %v727 = vunpack.c.l.b16 %v189
    %v728 = vunpack.c.h.b16 %v189
    %v729 = vunpack.c.l.b16 %v190
    %v730 = vunpack.c.h.b16 %v190
    %v731 = vunpack.c.l.b16 %v191
    %v732 = vunpack.c.h.b16 %v191
    %v733 = vunpack.c.l.b16 %v192
    %v734 = vunpack.c.h.b16 %v192
    %v735 = vunpack.c.l.b16 %v193
    %v736 = vunpack.c.h.b16 %v193
    %v737 = vunpack.c.l.b16 %v194
    %v738 = vunpack.c.h.b16 %v194
    %v739 = vunpack.c.l.b16 %v195
    %v740 = vunpack.c.h.b16 %v195
    %v741 = vunpack.c.l.b16 %v196
    %v742 = vunpack.c.h.b16 %v196
    %v743 = vunpack.c.l.b16 %v197
    %v744 = vunpack.c.h.b16 %v197
    %v745 = vunpack.c.l.b16 %v198
    %v746 = vunpack.c.h.b16 %v198
    %v747 = vunpack.c.l.b16 %v199
    %v748 = vunpack.c.h.b16 %v199
    %v749 = vunpack.c.l.b16 %v200
    %v750 = vunpack.c.h.b16 %v200
    %v751 = vunpack.c.l.b16 %v201
    %v752 = vunpack.c.h.b16 %v201
    %v753 = vunpack.c.l.b16 %v202
    %v754 = vunpack.c.h.b16 %v202
    %v755 = vunpack.c.l.b16 %v203
    %v756 = vunpack.c.h.b16 %v203
    %v757 = vunpack.c.l.b16 %v204
    %v758 = vunpack.c.h.b16 %v204
    %v759 = vunpack.c.l.b16 %v205
    %v760 = vunpack.c.h.b16 %v205
    %v761 = vunpack.c.l.b16 %v206
    %v762 = vunpack.c.h.b16 %v206
    %v763 = vunpack.c.l.b16 %v207
    %v764 = vunpack.c.h.b16 %v207
    %v765 = vunpack.c.l.b16 %v208
    %v766 = vunpack.c.h.b16 %v208
    %v767 = vunpack.c.l.b16 %v209
    %v768 = vunpack.c.h.b16 %v209
    %v769 = vunpack.c.l.b16 %v210
    %v770 = vunpack.c.h.b16 %v210
    %v771 = vunpack.c.l.b16 %v211
    %v772 = vunpack.c.h.b16 %v211
    %v773 = vunpack.c.l.b16 %v212
    %v774 = vunpack.c.h.b16 %v212
    %v775 = vunpack.c.l.b16 %v213
    %v776 = vunpack.c.h.b16 %v213
    %v777 = vunpack.c.l.b16 %v214
    %v778 = vunpack.c.h.b16 %v214
    %v779 = vunpack.c.l.b16 %v215
    %v780 = vunpack.c.h.b16 %v215
    %v781 = vunpack.c.l.b16 %v216
    %v782 = vunpack.c.h.b16 %v216
    %v783 = vunpack.c.l.b16 %v217
    %v784 = vunpack.c.h.b16 %v217
    %v785 = vunpack.c.l.b16 %v218
    %v786 = vunpack.c.h.b16 %v218
    %v787 = vunpack.c.l.b16 %v219
    %v788 = vunpack.c.h.b16 %v219
    %v789 = vunpack.c.l.b16 %v220
    %v790 = vunpack.c.h.b16 %v220
    %v791 = vunpack.c.l.b16 %v221
    %v792 = vunpack.c.h.b16 %v221
    %v793 = vunpack.c.l.b16 %v222
    %v794 = vunpack.c.h.b16 %v222
    %v795 = vunpack.c.l.b16 %v223
    %v796 = vunpack.c.h.b16 %v223
    %v797 = vunpack.c.l.b16 %v224
    %v798 = vunpack.c.h.b16 %v224
    %v799 = vunpack.c.l.b16 %v225
    %v800 = vunpack.c.h.b16 %v225
    %v801 = vunpack.c.l.b16 %v226
    %v802 = vunpack.c.h.b16 %v226
    %v803 = vunpack.c.l.b16 %v227
    %v804 = vunpack.c.h.b16 %v227
    %v805 = vunpack.c.l.b16 %v228
    %v806 = vunpack.c.h.b16 %v228
    %v807 = vunpack.c.l.b16 %v229
    %v808 = vunpack.c.h.b16 %v229
    %v809 = vunpack.c.l.b16 %v230
    %v810 = vunpack.c.h.b16 %v230
    %v811 = vunpack.c.l.b16 %v231
    %v812 = vunpack.c.h.b16 %v231
    %v813 = vunpack.c.l.b16 %v232
    %v814 = vunpack.c.h.b16 %v232
    %v815 = vunpack.c.l.b16 %v233
    %v816 = vunpack.c.h.b16 %v233
    %v817 = vunpack.c.l.b16 %v234
    %v818 = vunpack.c.h.b16 %v234
    %v819 = vunpack.c.l.b16 %v235
    %v820 = vunpack.c.h.b16 %v235
    %v821 = vunpack.c.l.b16 %v236
    %v822 = vunpack.c.h.b16 %v236
    %v823 = vunpack.c.l.b16 %v237
    %v824 = vunpack.c.h.b16 %v237
    %v825 = vunpack.c.l.b16 %v238
    %v826 = vunpack.c.h.b16 %v238
    %v827 = vunpack.c.l.b16 %v239
    %v828 = vunpack.c.h.b16 %v239
    %v829 = vunpack.c.l.b16 %v240
    %v830 = vunpack.c.h.b16 %v240
    %v831 = vunpack.c.l.b16 %v241
    %v832 = vunpack.c.h.b16 %v241
    %v833 = vunpack.c.l.b16 %v242
    %v834 = vunpack.c.h.b16 %v242
    %v835 = vunpack.c.l.b16 %v243
    %v836 = vunpack.c.h.b16 %v243
    %v837 = vunpack.c.l.b16 %v244
    %v838 = vunpack.c.h.b16 %v244
    %v839 = vunpack.c.l.b16 %v245
    %v840 = vunpack.c.h.b16 %v245
    %v841 = vunpack.c.l.b16 %v246
    %v842 = vunpack.c.h.b16 %v246
    %v843 = vunpack.c.l.b16 %v247
    %v844 = vunpack.c.h.b16 %v247
    %v845 = vunpack.c.l.b16 %v248
    %v846 = vunpack.c.h.b16 %v248
    %v847 = vpack.c.b16 %v459, %v455
    %v848 = vpack.c.b16 %v460, %v456
    %v849 = vpack.c.b16 %v461, %v457
    %v850 = vpack.c.b16 %v462, %v458
    %v851 = vpack.c.b16 %v467, %v463
    %v852 = vpack.c.b16 %v468, %v464
    %v853 = vpack.c.b16 %v469, %v465
    %v854 = vpack.c.b16 %v470, %v466
    %v855 = vpack.c.b16 %v475, %v471
    %v856 = vpack.c.b16 %v476, %v472
    %v857 = vpack.c.b16 %v477, %v473
    %v858 = vpack.c.b16 %v478, %v474
    %v859 = vpack.c.b16 %v483, %v479
    %v860 = vpack.c.b16 %v484, %v480
    %v861 = vpack.c.b16 %v485, %v481
    %v862 = vpack.c.b16 %v486, %v482
    %v863 = vpack.c.b16 %v491, %v487
    %v864 = vpack.c.b16 %v492, %v488
    %v865 = vpack.c.b16 %v493, %v489
    %v866 = vpack.c.b16 %v494, %v490
    %v867 = vpack.c.b16 %v499, %v495
    %v868 = vpack.c.b16 %v500, %v496
    %v869 = vpack.c.b16 %v501, %v497
    %v870 = vpack.c.b16 %v502, %v498
    %v871 = vpack.c.b16 %v507, %v503
    %v872 = vpack.c.b16 %v508, %v504
    %v873 = vpack.c.b16 %v509, %v505
    %v874 = vpack.c.b16 %v510, %v506
    %v875 = vpack.c.b16 %v515, %v511
    %v876 = vpack.c.b16 %v516, %v512
    %v877 = vpack.c.b16 %v517, %v513
    %v878 = vpack.c.b16 %v518, %v514
    %v879 = vpack.c.b16 %v523, %v519
    %v880 = vpack.c.b16 %v524, %v520
    %v881 = vpack.c.b16 %v525, %v521
    %v882 = vpack.c.b16 %v526, %v522
    %v883 = vpack.c.b16 %v531, %v527
    %v884 = vpack.c.b16 %v532, %v528
    %v885 = vpack.c.b16 %v533, %v529
    %v886 = vpack.c.b16 %v534, %v530
    %v887 = vpack.c.b16 %v539, %v535
    %v888 = vpack.c.b16 %v540, %v536
    %v889 = vpack.c.b16 %v541, %v537
    %v890 = vpack.c.b16 %v542, %v538
    %v891 = vpack.c.b16 %v547, %v543
    %v892 = vpack.c.b16 %v548, %v544
    %v893 = vpack.c.b16 %v549, %v545
    %v894 = vpack.c.b16 %v550, %v546
    %v895 = vpack.c.b16 %v555, %v551
    %v896 = vpack.c.b16 %v556, %v552
    %v897 = vpack.c.b16 %v557, %v553
    %v898 = vpack.c.b16 %v558, %v554
    %v899 = vpack.c.b16 %v563, %v559
    %v900 = vpack.c.b16 %v564, %v560
    %v901 = vpack.c.b16 %v565, %v561
    %v902 = vpack.c.b16 %v566, %v562
    %v903 = vpack.c.b16 %v571, %v567
    %v904 = vpack.c.b16 %v572, %v568
    %v905 = vpack.c.b16 %v573, %v569
    %v906 = vpack.c.b16 %v574, %v570
    %v907 = vpack.c.b16 %v579, %v575
    %v908 = vpack.c.b16 %v580, %v576
    %v909 = vpack.c.b16 %v581, %v577
    %v910 = vpack.c.b16 %v582, %v578
    %v911 = vpack.c.b16 %v587, %v583
    %v912 = vpack.c.b16 %v588, %v584
    %v913 = vpack.c.b16 %v589, %v585
    %v914 = vpack.c.b16 %v590, %v586
    %v915 = vpack.c.b16 %v595, %v591
    %v916 = vpack.c.b16 %v596, %v592
    %v917 = vpack.c.b16 %v597, %v593
    %v918 = vpack.c.b16 %v598, %v594
    %v919 = vpack.c.b16 %v603, %v599
    %v920 = vpack.c.b16 %v604, %v600
    %v921 = vpack.c.b16 %v605, %v601
    %v922 = vpack.c.b16 %v606, %v602
    %v923 = vpack.c.b16 %v611, %v607
    %v924 = vpack.c.b16 %v612, %v608
    %v925 = vpack.c.b16 %v613, %v609
    %v926 = vpack.c.b16 %v614, %v610
    %v927 = vpack.c.b16 %v619, %v615
    %v928 = vpack.c.b16 %v620, %v616
    %v929 = vpack.c.b16 %v621, %v617
    %v930 = vpack.c.b16 %v622, %v618
    %v931 = vpack.c.b16 %v627, %v623
    %v932 = vpack.c.b16 %v628, %v624
    %v933 = vpack.c.b16 %v629, %v625
    %v934 = vpack.c.b16 %v630, %v626
    %v935 = vpack.c.b16 %v635, %v631
    %v936 = vpack.c.b16 %v636, %v632
    %v937 = vpack.c.b16 %v637, %v633
    %v938 = vpack.c.b16 %v638, %v634
    %v939 = vpack.c.b16 %v643, %v639
    %v940 = vpack.c.b16 %v644, %v640
    %v941 = vpack.c.b16 %v645, %v641
    %v942 = vpack.c.b16 %v646, %v642
    %v943 = vpack.c.b16 %v651, %v647
    %v944 = vpack.c.b16 %v652, %v648
    %v945 = vpack.c.b16 %v653, %v649
    %v946 = vpack.c.b16 %v654, %v650
    %v947 = vpack.c.b16 %v659, %v655
    %v948 = vpack.c.b16 %v660, %v656
    %v949 = vpack.c.b16 %v661, %v657
    %v950 = vpack.c.b16 %v662, %v658
    %v951 = vpack.c.b16 %v667, %v663
    %v952 = vpack.c.b16 %v668, %v664
    %v953 = vpack.c.b16 %v669, %v665
    %v954 = vpack.c.b16 %v670, %v666
    %v955 = vpack.c.b16 %v675, %v671
    %v956 = vpack.c.b16 %v676, %v672
    %v957 = vpack.c.b16 %v677, %v673
    %v958 = vpack.c.b16 %v678, %v674
    %v959 = vpack.c.b16 %v683, %v679
    %v960 = vpack.c.b16 %v684, %v680
    %v961 = vpack.c.b16 %v685, %v681
    %v962 = vpack.c.b16 %v686, %v682
    %v963 = vpack.c.b16 %v691, %v687
    %v964 = vpack.c.b16 %v692, %v688
    %v965 = vpack.c.b16 %v693, %v689
    %v966 = vpack.c.b16 %v694, %v690
    %v967 = vpack.c.b16 %v699, %v695
    %v968 = vpack.c.b16 %v700, %v696
    %v969 = vpack.c.b16 %v701, %v697
    %v970 = vpack.c.b16 %v702, %v698
    %v971 = vpack.c.b16 %v707, %v703
    %v972 = vpack.c.b16 %v708, %v704
    %v973 = vpack.c.b16 %v709, %v705
    %v974 = vpack.c.b16 %v710, %v706
    %v975 = vpack.c.b16 %v715, %v711
    %v976 = vpack.c.b16 %v716, %v712
    %v977 = vpack.c.b16 %v717, %v713
    %v978 = vpack.c.b16 %v718, %v714
    %v979 = vpack.c.b16 %v723, %v719
    %v980 = vpack.c.b16 %v724, %v720
    %v981 = vpack.c.b16 %v725, %v721
    %v982 = vpack.c.b16 %v726, %v722
    %v983 = vpack.c.b16 %v731, %v727
    %v984 = vpack.c.b16 %v732, %v728
    %v985 = vpack.c.b16 %v733, %v729
    %v986 = vpack.c.b16 %v734, %v730
    %v987 = vpack.c.b16 %v739, %v735
    %v988 = vpack.c.b16 %v740, %v736
    %v989 = vpack.c.b16 %v741, %v737
    %v990 = vpack.c.b16 %v742, %v738
    %v991 = vpack.c.b16 %v747, %v743
    %v992 = vpack.c.b16 %v748, %v744
    %v993 = vpack.c.b16 %v749, %v745
    %v994 = vpack.c.b16 %v750, %v746
    %v995 = vpack.c.b16 %v755, %v751
    %v996 = vpack.c.b16 %v756, %v752
    %v997 = vpack.c.b16 %v757, %v753
    %v998 = vpack.c.b16 %v758, %v754
    %v999 = vpack.c.b16 %v763, %v759
    %v1000 = vpack.c.b16 %v764, %v760
    %v1001 = vpack.c.b16 %v765, %v761
    %v1002 = vpack.c.b16 %v766, %v762
    %v1003 = vpack.c.b16 %v771, %v767
    %v1004 = vpack.c.b16 %v772, %v768
    %v1005 = vpack.c.b16 %v773, %v769
    %v1006 = vpack.c.b16 %v774, %v770
    %v1007 = vpack.c.b16 %v779, %v775
    %v1008 = vpack.c.b16 %v780, %v776
    %v1009 = vpack.c.b16 %v781, %v777
    %v1010 = vpack.c.b16 %v782, %v778
    %v1011 = vpack.c.b16 %v787, %v783
    %v1012 = vpack.c.b16 %v788, %v784
    %v1013 = vpack.c.b16 %v789, %v785
    %v1014 = vpack.c.b16 %v790, %v786
    %v1015 = vpack.c.b16 %v795, %v791
    %v1016 = vpack.c.b16 %v796, %v792
    %v1017 = vpack.c.b16 %v797, %v793
    %v1018 = vpack.c.b16 %v798, %v794
    %v1019 = vpack.c.b16 %v803, %v799
    %v1020 = vpack.c.b16 %v804, %v800
    %v1021 = vpack.c.b16 %v805, %v801
    %v1022 = vpack.c.b16 %v806, %v802
    %v1023 = vpack.c.b16 %v811, %v807
    %v1024 = vpack.c.b16 %v812, %v808
    %v1025 = vpack.c.b16 %v813, %v809
    %v1026 = vpack.c.b16 %v814, %v810
    %v1027 = vpack.c.b16 %v819, %v815
    %v1028 = vpack.c.b16 %v820, %v816
    %v1029 = vpack.c.b16 %v821, %v817
    %v1030 = vpack.c.b16 %v822, %v818
    %v1031 = vpack.c.b16 %v827, %v823
    %v1032 = vpack.c.b16 %v828, %v824
    %v1033 = vpack.c.b16 %v829, %v825
    %v1034 = vpack.c.b16 %v830, %v826
    %v1035 = vpack.c.b16 %v835, %v831
    %v1036 = vpack.c.b16 %v836, %v832
    %v1037 = vpack.c.b16 %v837, %v833
    %v1038 = vpack.c.b16 %v838, %v834
    %v1039 = vpack.c.b16 %v843, %v839
    %v1040 = vpack.c.b16 %v844, %v840
    %v1041 = vpack.c.b16 %v845, %v841
    %v1042 = vpack.c.b16 %v846, %v842
    %vm1239 = vcmask 130048
    %v1241 = vsel %vm1239, %v52, 0
    %1243 = vmatpush.bf16.msra.mxu0 %v875
    %1244 = vmatpush.bf16.msra.mxu0 %v871
    %1245 = vmatpush.bf16.msra.mxu0 %v867
    %1246 = vmatpush.bf16.msra.mxu0 %v863
    %1247 = vmatpush.bf16.msra.mxu0 %v859
    %1248 = vmatpush.bf16.msra.mxu0 %v855
    %1249 = vmatpush.bf16.msra.mxu0 %v851
    %1250 = vmatpush.bf16.msra.mxu0 %v847
    %1251 = vmatmul.bf16.gmra.mxu0 %v46
    %v1252 = vpop.f32.mrf.mxu0
    %v1253 = vadd.f32 %v251, %v1252
    %v1254 = vpop.f32.mrf.mxu0
    %1255 = vdwg.mxu0
    %1256 = vmatpush.bf16.msra.mxu0 %v907
    %1257 = vmatpush.bf16.msra.mxu0 %v903
    %1258 = vmatpush.bf16.msra.mxu0 %v899
    %1259 = vmatpush.bf16.msra.mxu0 %v895
    %1260 = vmatpush.bf16.msra.mxu0 %v891
    %1261 = vmatpush.bf16.msra.mxu0 %v887
    %1262 = vmatpush.bf16.msra.mxu0 %v883
    %1263 = vmatpush.bf16.msra.mxu0 %v879
    %1264 = vmatmul.bf16.gmra.mxu0 %v47
    %v1265 = vpop.f32.mrf.mxu0
    %v1266 = vadd.f32 %v1253, %v1265
    %v1267 = vpop.f32.mrf.mxu0
    %1268 = vdwg.mxu0
    %1269 = vmatpush.bf16.msra.mxu0 %v939
    %1270 = vmatpush.bf16.msra.mxu0 %v935
    %1271 = vmatpush.bf16.msra.mxu0 %v931
    %1272 = vmatpush.bf16.msra.mxu0 %v927
    %1273 = vmatpush.bf16.msra.mxu0 %v923
    %1274 = vmatpush.bf16.msra.mxu0 %v919
    %1275 = vmatpush.bf16.msra.mxu0 %v915
    %1276 = vmatpush.bf16.msra.mxu0 %v911
    %1277 = vmatmul.bf16.gmra.mxu0 %v48
    %v1278 = vpop.f32.mrf.mxu0
    %v1279 = vadd.f32 %v1266, %v1278
    %v1280 = vpop.f32.mrf.mxu0
    %1281 = vdwg.mxu0
    %1282 = vmatpush.bf16.msra.mxu0 %v971
    %1283 = vmatpush.bf16.msra.mxu0 %v967
    %1284 = vmatpush.bf16.msra.mxu0 %v963
    %1285 = vmatpush.bf16.msra.mxu0 %v959
    %1286 = vmatpush.bf16.msra.mxu0 %v955
    %1287 = vmatpush.bf16.msra.mxu0 %v951
    %1288 = vmatpush.bf16.msra.mxu0 %v947
    %1289 = vmatpush.bf16.msra.mxu0 %v943
    %1290 = vmatmul.bf16.gmra.mxu0 %v49
    %v1291 = vpop.f32.mrf.mxu0
    %v1292 = vadd.f32 %v1279, %v1291
    %v1293 = vpop.f32.mrf.mxu0
    %1294 = vdwg.mxu0
    %1295 = vmatpush.bf16.msra.mxu0 %v1003
    %1296 = vmatpush.bf16.msra.mxu0 %v999
    %1297 = vmatpush.bf16.msra.mxu0 %v995
    %1298 = vmatpush.bf16.msra.mxu0 %v991
    %1299 = vmatpush.bf16.msra.mxu0 %v987
    %1300 = vmatpush.bf16.msra.mxu0 %v983
    %1301 = vmatpush.bf16.msra.mxu0 %v979
    %1302 = vmatpush.bf16.msra.mxu0 %v975
    %1303 = vmatmul.bf16.gmra.mxu0 %v50
    %v1304 = vpop.f32.mrf.mxu0
    %v1305 = vadd.f32 %v1292, %v1304
    %v1306 = vpop.f32.mrf.mxu0
    %1307 = vdwg.mxu0
    %1308 = vmatpush.bf16.msra.mxu0 %v1035
    %1309 = vmatpush.bf16.msra.mxu0 %v1031
    %1310 = vmatpush.bf16.msra.mxu0 %v1027
    %1311 = vmatpush.bf16.msra.mxu0 %v1023
    %1312 = vmatpush.bf16.msra.mxu0 %v1019
    %1313 = vmatpush.bf16.msra.mxu0 %v1015
    %1314 = vmatpush.bf16.msra.mxu0 %v1011
    %1315 = vmatpush.bf16.msra.mxu0 %v1007
    %1316 = vmatmul.bf16.gmra.mxu0 %v51
    %v1317 = vpop.f32.mrf.mxu0
    %v1318 = vadd.f32 %v1305, %v1317
    %v1319 = vpop.f32.mrf.mxu0
    %1320 = vdwg.mxu0
    %1321 = vmatpush.bf16.msra.mxu0 0
    %1322 = vmatpush.bf16.msra.mxu0 0
    %1323 = vmatpush.bf16.msra.mxu0 0
    %1324 = vmatpush.bf16.msra.mxu0 0
    %1325 = vmatpush.bf16.msra.mxu0 0
    %1326 = vmatpush.bf16.msra.mxu0 0
    %1327 = vmatpush.bf16.msra.mxu0 0
    %1328 = vmatpush.bf16.msra.mxu0 %v1039
    %1329 = vmatmul.bf16.gmra.mxu0 %v1241
    %v1330 = vpop.f32.mrf.mxu0
    %v1331 = vadd.f32 %v1318, %v1330
    %v1332 = vpop.f32.mrf.mxu0
    %1333 = vdwg.mxu0
    %1334 = vmatpush.bf16.msra.mxu0 %v876
    %1335 = vmatpush.bf16.msra.mxu0 %v872
    %1336 = vmatpush.bf16.msra.mxu0 %v868
    %1337 = vmatpush.bf16.msra.mxu0 %v864
    %1338 = vmatpush.bf16.msra.mxu0 %v860
    %1339 = vmatpush.bf16.msra.mxu0 %v856
    %1340 = vmatpush.bf16.msra.mxu0 %v852
    %1341 = vmatpush.bf16.msra.mxu0 %v848
    %1342 = vmatmul.bf16.gmra.mxu0 %v46
    %v1343 = vpop.f32.mrf.mxu0
    %v1344 = vadd.f32 %v252, %v1343
    %v1345 = vpop.f32.mrf.mxu0
    %1346 = vdwg.mxu0
    %1347 = vmatpush.bf16.msra.mxu0 %v908
    %1348 = vmatpush.bf16.msra.mxu0 %v904
    %1349 = vmatpush.bf16.msra.mxu0 %v900
    %1350 = vmatpush.bf16.msra.mxu0 %v896
    %1351 = vmatpush.bf16.msra.mxu0 %v892
    %1352 = vmatpush.bf16.msra.mxu0 %v888
    %1353 = vmatpush.bf16.msra.mxu0 %v884
    %1354 = vmatpush.bf16.msra.mxu0 %v880
    %1355 = vmatmul.bf16.gmra.mxu0 %v47
    %v1356 = vpop.f32.mrf.mxu0
    %v1357 = vadd.f32 %v1344, %v1356
    %v1358 = vpop.f32.mrf.mxu0
    %1359 = vdwg.mxu0
    %1360 = vmatpush.bf16.msra.mxu0 %v940
    %1361 = vmatpush.bf16.msra.mxu0 %v936
    %1362 = vmatpush.bf16.msra.mxu0 %v932
    %1363 = vmatpush.bf16.msra.mxu0 %v928
    %1364 = vmatpush.bf16.msra.mxu0 %v924
    %1365 = vmatpush.bf16.msra.mxu0 %v920
    %1366 = vmatpush.bf16.msra.mxu0 %v916
    %1367 = vmatpush.bf16.msra.mxu0 %v912
    %1368 = vmatmul.bf16.gmra.mxu0 %v48
    %v1369 = vpop.f32.mrf.mxu0
    %v1370 = vadd.f32 %v1357, %v1369
    %v1371 = vpop.f32.mrf.mxu0
    %1372 = vdwg.mxu0
    %1373 = vmatpush.bf16.msra.mxu0 %v972
    %1374 = vmatpush.bf16.msra.mxu0 %v968
    %1375 = vmatpush.bf16.msra.mxu0 %v964
    %1376 = vmatpush.bf16.msra.mxu0 %v960
    %1377 = vmatpush.bf16.msra.mxu0 %v956
    %1378 = vmatpush.bf16.msra.mxu0 %v952
    %1379 = vmatpush.bf16.msra.mxu0 %v948
    %1380 = vmatpush.bf16.msra.mxu0 %v944
    %1381 = vmatmul.bf16.gmra.mxu0 %v49
    %v1382 = vpop.f32.mrf.mxu0
    %v1383 = vadd.f32 %v1370, %v1382
    %v1384 = vpop.f32.mrf.mxu0
    %1385 = vdwg.mxu0
    %1386 = vmatpush.bf16.msra.mxu0 %v1004
    %1387 = vmatpush.bf16.msra.mxu0 %v1000
    %1388 = vmatpush.bf16.msra.mxu0 %v996
    %1389 = vmatpush.bf16.msra.mxu0 %v992
    %1390 = vmatpush.bf16.msra.mxu0 %v988
    %1391 = vmatpush.bf16.msra.mxu0 %v984
    %1392 = vmatpush.bf16.msra.mxu0 %v980
    %1393 = vmatpush.bf16.msra.mxu0 %v976
    %1394 = vmatmul.bf16.gmra.mxu0 %v50
    %v1395 = vpop.f32.mrf.mxu0
    %v1396 = vadd.f32 %v1383, %v1395
    %v1397 = vpop.f32.mrf.mxu0
    %1398 = vdwg.mxu0
    %1399 = vmatpush.bf16.msra.mxu0 %v1036
    %1400 = vmatpush.bf16.msra.mxu0 %v1032
    %1401 = vmatpush.bf16.msra.mxu0 %v1028
    %1402 = vmatpush.bf16.msra.mxu0 %v1024
    %1403 = vmatpush.bf16.msra.mxu0 %v1020
    %1404 = vmatpush.bf16.msra.mxu0 %v1016
    %1405 = vmatpush.bf16.msra.mxu0 %v1012
    %1406 = vmatpush.bf16.msra.mxu0 %v1008
    %1407 = vmatmul.bf16.gmra.mxu0 %v51
    %v1408 = vpop.f32.mrf.mxu0
    %v1409 = vadd.f32 %v1396, %v1408
    %v1410 = vpop.f32.mrf.mxu0
    %1411 = vdwg.mxu0
    %1412 = vmatpush.bf16.msra.mxu0 0
    %1413 = vmatpush.bf16.msra.mxu0 0
    %1414 = vmatpush.bf16.msra.mxu0 0
    %1415 = vmatpush.bf16.msra.mxu0 0
    %1416 = vmatpush.bf16.msra.mxu0 0
    %1417 = vmatpush.bf16.msra.mxu0 0
    %1418 = vmatpush.bf16.msra.mxu0 0
    %1419 = vmatpush.bf16.msra.mxu0 %v1040
    %1420 = vmatmul.bf16.gmra.mxu0 %v1241
    %v1421 = vpop.f32.mrf.mxu0
    %v1422 = vadd.f32 %v1409, %v1421
    %v1423 = vpop.f32.mrf.mxu0
    %1424 = vdwg.mxu0
    %1425 = vmatpush.bf16.msra.mxu0 %v877
    %1426 = vmatpush.bf16.msra.mxu0 %v873
    %1427 = vmatpush.bf16.msra.mxu0 %v869
    %1428 = vmatpush.bf16.msra.mxu0 %v865
    %1429 = vmatpush.bf16.msra.mxu0 %v861
    %1430 = vmatpush.bf16.msra.mxu0 %v857
    %1431 = vmatpush.bf16.msra.mxu0 %v853
    %1432 = vmatpush.bf16.msra.mxu0 %v849
    %1433 = vmatmul.bf16.gmra.mxu0 %v46
    %v1434 = vpop.f32.mrf.mxu0
    %v1435 = vadd.f32 %v253, %v1434
    %v1436 = vpop.f32.mrf.mxu0
    %1437 = vdwg.mxu0
    %1438 = vmatpush.bf16.msra.mxu0 %v909
    %1439 = vmatpush.bf16.msra.mxu0 %v905
    %1440 = vmatpush.bf16.msra.mxu0 %v901
    %1441 = vmatpush.bf16.msra.mxu0 %v897
    %1442 = vmatpush.bf16.msra.mxu0 %v893
    %1443 = vmatpush.bf16.msra.mxu0 %v889
    %1444 = vmatpush.bf16.msra.mxu0 %v885
    %1445 = vmatpush.bf16.msra.mxu0 %v881
    %1446 = vmatmul.bf16.gmra.mxu0 %v47
    %v1447 = vpop.f32.mrf.mxu0
    %v1448 = vadd.f32 %v1435, %v1447
    %v1449 = vpop.f32.mrf.mxu0
    %1450 = vdwg.mxu0
    %1451 = vmatpush.bf16.msra.mxu0 %v941
    %1452 = vmatpush.bf16.msra.mxu0 %v937
    %1453 = vmatpush.bf16.msra.mxu0 %v933
    %1454 = vmatpush.bf16.msra.mxu0 %v929
    %1455 = vmatpush.bf16.msra.mxu0 %v925
    %1456 = vmatpush.bf16.msra.mxu0 %v921
    %1457 = vmatpush.bf16.msra.mxu0 %v917
    %1458 = vmatpush.bf16.msra.mxu0 %v913
    %1459 = vmatmul.bf16.gmra.mxu0 %v48
    %v1460 = vpop.f32.mrf.mxu0
    %v1461 = vadd.f32 %v1448, %v1460
    %v1462 = vpop.f32.mrf.mxu0
    %1463 = vdwg.mxu0
    %1464 = vmatpush.bf16.msra.mxu0 %v973
    %1465 = vmatpush.bf16.msra.mxu0 %v969
    %1466 = vmatpush.bf16.msra.mxu0 %v965
    %1467 = vmatpush.bf16.msra.mxu0 %v961
    %1468 = vmatpush.bf16.msra.mxu0 %v957
    %1469 = vmatpush.bf16.msra.mxu0 %v953
    %1470 = vmatpush.bf16.msra.mxu0 %v949
    %1471 = vmatpush.bf16.msra.mxu0 %v945
    %1472 = vmatmul.bf16.gmra.mxu0 %v49
    %v1473 = vpop.f32.mrf.mxu0
    %v1474 = vadd.f32 %v1461, %v1473
    %v1475 = vpop.f32.mrf.mxu0
    %1476 = vdwg.mxu0
    %1477 = vmatpush.bf16.msra.mxu0 %v1005
    %1478 = vmatpush.bf16.msra.mxu0 %v1001
    %1479 = vmatpush.bf16.msra.mxu0 %v997
    %1480 = vmatpush.bf16.msra.mxu0 %v993
    %1481 = vmatpush.bf16.msra.mxu0 %v989
    %1482 = vmatpush.bf16.msra.mxu0 %v985
    %1483 = vmatpush.bf16.msra.mxu0 %v981
    %1484 = vmatpush.bf16.msra.mxu0 %v977
    %1485 = vmatmul.bf16.gmra.mxu0 %v50
    %v1486 = vpop.f32.mrf.mxu0
    %v1487 = vadd.f32 %v1474, %v1486
    %v1488 = vpop.f32.mrf.mxu0
    %1489 = vdwg.mxu0
    %1490 = vmatpush.bf16.msra.mxu0 %v1037
    %1491 = vmatpush.bf16.msra.mxu0 %v1033
    %1492 = vmatpush.bf16.msra.mxu0 %v1029
    %1493 = vmatpush.bf16.msra.mxu0 %v1025
    %1494 = vmatpush.bf16.msra.mxu0 %v1021
    %1495 = vmatpush.bf16.msra.mxu0 %v1017
    %1496 = vmatpush.bf16.msra.mxu0 %v1013
    %1497 = vmatpush.bf16.msra.mxu0 %v1009
    %1498 = vmatmul.bf16.gmra.mxu0 %v51
    %v1499 = vpop.f32.mrf.mxu0
    %v1500 = vadd.f32 %v1487, %v1499
    %v1501 = vpop.f32.mrf.mxu0
    %1502 = vdwg.mxu0
    %1503 = vmatpush.bf16.msra.mxu0 0
    %1504 = vmatpush.bf16.msra.mxu0 0
    %1505 = vmatpush.bf16.msra.mxu0 0
    %1506 = vmatpush.bf16.msra.mxu0 0
    %1507 = vmatpush.bf16.msra.mxu0 0
    %1508 = vmatpush.bf16.msra.mxu0 0
    %1509 = vmatpush.bf16.msra.mxu0 0
    %1510 = vmatpush.bf16.msra.mxu0 %v1041
    %1511 = vmatmul.bf16.gmra.mxu0 %v1241
    %v1512 = vpop.f32.mrf.mxu0
    %v1513 = vadd.f32 %v1500, %v1512
    %v1514 = vpop.f32.mrf.mxu0
    %1515 = vdwg.mxu0
    %1516 = vmatpush.bf16.msra.mxu0 %v878
    %1517 = vmatpush.bf16.msra.mxu0 %v874
    %1518 = vmatpush.bf16.msra.mxu0 %v870
    %1519 = vmatpush.bf16.msra.mxu0 %v866
    %1520 = vmatpush.bf16.msra.mxu0 %v862
    %1521 = vmatpush.bf16.msra.mxu0 %v858
    %1522 = vmatpush.bf16.msra.mxu0 %v854
    %1523 = vmatpush.bf16.msra.mxu0 %v850
    %1524 = vmatmul.bf16.gmra.mxu0 %v46
    %v1525 = vpop.f32.mrf.mxu0
    %v1526 = vadd.f32 %v254, %v1525
    %v1527 = vpop.f32.mrf.mxu0
    %1528 = vdwg.mxu0
    %1529 = vmatpush.bf16.msra.mxu0 %v910
    %1530 = vmatpush.bf16.msra.mxu0 %v906
    %1531 = vmatpush.bf16.msra.mxu0 %v902
    %1532 = vmatpush.bf16.msra.mxu0 %v898
    %1533 = vmatpush.bf16.msra.mxu0 %v894
    %1534 = vmatpush.bf16.msra.mxu0 %v890
    %1535 = vmatpush.bf16.msra.mxu0 %v886
    %1536 = vmatpush.bf16.msra.mxu0 %v882
    %1537 = vmatmul.bf16.gmra.mxu0 %v47
    %v1538 = vpop.f32.mrf.mxu0
    %v1539 = vadd.f32 %v1526, %v1538
    %v1540 = vpop.f32.mrf.mxu0
    %1541 = vdwg.mxu0
    %1542 = vmatpush.bf16.msra.mxu0 %v942
    %1543 = vmatpush.bf16.msra.mxu0 %v938
    %1544 = vmatpush.bf16.msra.mxu0 %v934
    %1545 = vmatpush.bf16.msra.mxu0 %v930
    %1546 = vmatpush.bf16.msra.mxu0 %v926
    %1547 = vmatpush.bf16.msra.mxu0 %v922
    %1548 = vmatpush.bf16.msra.mxu0 %v918
    %1549 = vmatpush.bf16.msra.mxu0 %v914
    %1550 = vmatmul.bf16.gmra.mxu0 %v48
    %v1551 = vpop.f32.mrf.mxu0
    %v1552 = vadd.f32 %v1539, %v1551
    %v1553 = vpop.f32.mrf.mxu0
    %1554 = vdwg.mxu0
    %1555 = vmatpush.bf16.msra.mxu0 %v974
    %1556 = vmatpush.bf16.msra.mxu0 %v970
    %1557 = vmatpush.bf16.msra.mxu0 %v966
    %1558 = vmatpush.bf16.msra.mxu0 %v962
    %1559 = vmatpush.bf16.msra.mxu0 %v958
    %1560 = vmatpush.bf16.msra.mxu0 %v954
    %1561 = vmatpush.bf16.msra.mxu0 %v950
    %1562 = vmatpush.bf16.msra.mxu0 %v946
    %1563 = vmatmul.bf16.gmra.mxu0 %v49
    %v1564 = vpop.f32.mrf.mxu0
    %v1565 = vadd.f32 %v1552, %v1564
    %v1566 = vpop.f32.mrf.mxu0
    %1567 = vdwg.mxu0
    %1568 = vmatpush.bf16.msra.mxu0 %v1006
    %1569 = vmatpush.bf16.msra.mxu0 %v1002
    %1570 = vmatpush.bf16.msra.mxu0 %v998
    %1571 = vmatpush.bf16.msra.mxu0 %v994
    %1572 = vmatpush.bf16.msra.mxu0 %v990
    %1573 = vmatpush.bf16.msra.mxu0 %v986
    %1574 = vmatpush.bf16.msra.mxu0 %v982
    %1575 = vmatpush.bf16.msra.mxu0 %v978
    %1576 = vmatmul.bf16.gmra.mxu0 %v50
    %v1577 = vpop.f32.mrf.mxu0
    %v1578 = vadd.f32 %v1565, %v1577
    %v1579 = vpop.f32.mrf.mxu0
    %1580 = vdwg.mxu0
    %1581 = vmatpush.bf16.msra.mxu0 %v1038
    %1582 = vmatpush.bf16.msra.mxu0 %v1034
    %1583 = vmatpush.bf16.msra.mxu0 %v1030
    %1584 = vmatpush.bf16.msra.mxu0 %v1026
    %1585 = vmatpush.bf16.msra.mxu0 %v1022
    %1586 = vmatpush.bf16.msra.mxu0 %v1018
    %1587 = vmatpush.bf16.msra.mxu0 %v1014
    %1588 = vmatpush.bf16.msra.mxu0 %v1010
    %1589 = vmatmul.bf16.gmra.mxu0 %v51
    %v1590 = vpop.f32.mrf.mxu0
    %v1591 = vadd.f32 %v1578, %v1590
    %v1592 = vpop.f32.mrf.mxu0
    %1593 = vdwg.mxu0
    %1594 = vmatpush.bf16.msra.mxu0 0
    %1595 = vmatpush.bf16.msra.mxu0 0
    %1596 = vmatpush.bf16.msra.mxu0 0
    %1597 = vmatpush.bf16.msra.mxu0 0
    %1598 = vmatpush.bf16.msra.mxu0 0
    %1599 = vmatpush.bf16.msra.mxu0 0
    %1600 = vmatpush.bf16.msra.mxu0 0
    %1601 = vmatpush.bf16.msra.mxu0 %v1042
    %1602 = vmatmul.bf16.gmra.mxu0 %v1241
    %v1603 = vpop.f32.mrf.mxu0
    %v1604 = vadd.f32 %v1591, %v1603
    %v1605 = vpop.f32.mrf.mxu0
    %1606 = vdwg.mxu0
    %v1607 = vmax.f32 %v1331, 0.0
    %v1608 = vmax.f32 %v1422, 0.0
    %v1609 = vmax.f32 %v1513, 0.0
    %v1610 = vmax.f32 %v1604, 0.0
    %v1611 = vpack.c.bf16 %v1607, %v1607
    %v1612 = vpack.c.bf16 %v1608, %v1608
    %v1613 = vpack.c.bf16 %v1609, %v1609
    %v1614 = vpack.c.bf16 %v1610, %v1610
    %v1615 = vld [vmem:[%s4] sm:$0xff]
    %v1616 = vld [vmem:[%s4 + $0x8] sm:$0xff]
    %v1617 = vld [vmem:[%s4 + $0x10] sm:$0xff]
    %v1618 = vld [vmem:[%s4 + $0x18] sm:$0xff]
    %v1619 = vld [vmem:[%s4 + $0x20] sm:$0xff]
    %v1620 = vld [vmem:[%s4 + $0x28] sm:$0xff]
    %v1621 = vld [vmem:[%s4 + $0x30] sm:$0xff]
    %v1622 = vld [vmem:[%s4 + $0x38] sm:$0xff]
    %v1623 = vld [vmem:[%s4 + $0x40] sm:$0xff]
    %v1624 = vld [vmem:[%s4 + $0x48] sm:$0xff]
    %v1625 = vld [vmem:[%s4 + $0x50] sm:$0xff]
    %v1626 = vld [vmem:[%s4 + $0x58] sm:$0xff]
    %v1627 = vld [vmem:[%s4 + $0x60] sm:$0xff]
    %v1628 = vld [vmem:[%s4 + $0x68] sm:$0xff]
    %v1629 = vld [vmem:[%s4 + $0x70] sm:$0xff]
    %v1630 = vld [vmem:[%s4 + $0x78] sm:$0xff]
    %v1631 = vld [vmem:[%s4 + $0x80] sm:$0xff]
    %v1632 = vld [vmem:[%s4 + $0x88] sm:$0xff]
    %v1633 = vld [vmem:[%s4 + $0x90] sm:$0xff]
    %v1634 = vld [vmem:[%s4 + $0x98] sm:$0xff]
    %v1635 = vld [vmem:[%s4 + $0xa0] sm:$0xff]
    %v1636 = vld [vmem:[%s4 + $0xa8] sm:$0xff]
    %v1637 = vld [vmem:[%s4 + $0xb0] sm:$0xff]
    %v1638 = vld [vmem:[%s4 + $0xb8] sm:$0xff]
    %v1639 = vld [vmem:[%s4 + $0xc0] sm:$0xff]
    %v1640 = vld [vmem:[%s4 + $0xc8] sm:$0xff]
    %v1641 = vld [vmem:[%s4 + $0xd0] sm:$0xff]
    %v1642 = vld [vmem:[%s4 + $0xd8] sm:$0xff]
    %v1643 = vld [vmem:[%s4 + $0xe0] sm:$0xff]
    %v1644 = vld [vmem:[%s4 + $0xe8] sm:$0xff]
    %v1645 = vld [vmem:[%s4 + $0xf0] sm:$0xff]
    %v1646 = vld [vmem:[%s4 + $0xf8] sm:$0xff]
    %v1647 = vld [vmem:[%s4 + $0x100] sm:$0xff]
    %v1648 = vld [vmem:[%s4 + $0x108] sm:$0xff]
    %v1649 = vld [vmem:[%s4 + $0x110] sm:$0xff]
    %v1650 = vld [vmem:[%s4 + $0x118] sm:$0xff]
    %v1651 = vld [vmem:[%s4 + $0x120] sm:$0xff]
    %v1652 = vld [vmem:[%s4 + $0x128] sm:$0xff]
    %v1653 = vld [vmem:[%s4 + $0x130] sm:$0xff]
    %v1654 = vld [vmem:[%s4 + $0x138] sm:$0xff]
    %v1655 = vld [vmem:[%s4 + $0x140] sm:$0xff]
    %v1656 = vld [vmem:[%s4 + $0x148] sm:$0xff]
    %v1657 = vld [vmem:[%s4 + $0x150] sm:$0xff]
    %v1658 = vld [vmem:[%s4 + $0x158] sm:$0xff]
    %v1659 = vld [vmem:[%s4 + $0x160] sm:$0xff]
    %v1660 = vld [vmem:[%s4 + $0x168] sm:$0xff]
    %v1661 = vld [vmem:[%s4 + $0x170] sm:$0xff]
    %v1662 = vld [vmem:[%s4 + $0x178] sm:$0xff]
    %v1663 = vld [vmem:[%s4 + $0x180] sm:$0xff]
    %v1664 = vld [vmem:[%s4 + $0x188] sm:$0xff]
    %v1665 = vld [vmem:[%s5] sm:$0x3]
    %v1667 = vperm.slane %v1665, 0
    %v1668 = vperm.slane %v1665, 1
    %v1721 = vunpack.c.l.b16 %v1615
    %v1722 = vunpack.c.h.b16 %v1615
    %v1723 = vunpack.c.l.b16 %v1616
    %v1724 = vunpack.c.h.b16 %v1616
    %v1725 = vunpack.c.l.b16 %v1617
    %v1726 = vunpack.c.h.b16 %v1617
    %v1727 = vunpack.c.l.b16 %v1618
    %v1728 = vunpack.c.h.b16 %v1618
    %v1729 = vunpack.c.l.b16 %v1619
    %v1730 = vunpack.c.h.b16 %v1619
    %v1731 = vunpack.c.l.b16 %v1620
    %v1732 = vunpack.c.h.b16 %v1620
    %v1733 = vunpack.c.l.b16 %v1621
    %v1734 = vunpack.c.h.b16 %v1621
    %v1735 = vunpack.c.l.b16 %v1622
    %v1736 = vunpack.c.h.b16 %v1622
    %v1737 = vunpack.c.l.b16 %v1623
    %v1738 = vunpack.c.h.b16 %v1623
    %v1739 = vunpack.c.l.b16 %v1624
    %v1740 = vunpack.c.h.b16 %v1624
    %v1741 = vunpack.c.l.b16 %v1625
    %v1742 = vunpack.c.h.b16 %v1625
    %v1743 = vunpack.c.l.b16 %v1626
    %v1744 = vunpack.c.h.b16 %v1626
    %v1745 = vunpack.c.l.b16 %v1627
    %v1746 = vunpack.c.h.b16 %v1627
    %v1747 = vunpack.c.l.b16 %v1628
    %v1748 = vunpack.c.h.b16 %v1628
    %v1749 = vunpack.c.l.b16 %v1629
    %v1750 = vunpack.c.h.b16 %v1629
    %v1751 = vunpack.c.l.b16 %v1630
    %v1752 = vunpack.c.h.b16 %v1630
    %v1753 = vunpack.c.l.b16 %v1631
    %v1754 = vunpack.c.h.b16 %v1631
    %v1755 = vunpack.c.l.b16 %v1632
    %v1756 = vunpack.c.h.b16 %v1632
    %v1757 = vunpack.c.l.b16 %v1633
    %v1758 = vunpack.c.h.b16 %v1633
    %v1759 = vunpack.c.l.b16 %v1634
    %v1760 = vunpack.c.h.b16 %v1634
    %v1761 = vunpack.c.l.b16 %v1635
    %v1762 = vunpack.c.h.b16 %v1635
    %v1763 = vunpack.c.l.b16 %v1636
    %v1764 = vunpack.c.h.b16 %v1636
    %v1765 = vunpack.c.l.b16 %v1637
    %v1766 = vunpack.c.h.b16 %v1637
    %v1767 = vunpack.c.l.b16 %v1638
    %v1768 = vunpack.c.h.b16 %v1638
    %v1769 = vunpack.c.l.b16 %v1639
    %v1770 = vunpack.c.h.b16 %v1639
    %v1771 = vunpack.c.l.b16 %v1640
    %v1772 = vunpack.c.h.b16 %v1640
    %v1773 = vunpack.c.l.b16 %v1641
    %v1774 = vunpack.c.h.b16 %v1641
    %v1775 = vunpack.c.l.b16 %v1642
    %v1776 = vunpack.c.h.b16 %v1642
    %v1777 = vunpack.c.l.b16 %v1643
    %v1778 = vunpack.c.h.b16 %v1643
    %v1779 = vunpack.c.l.b16 %v1644
    %v1780 = vunpack.c.h.b16 %v1644
    %v1781 = vunpack.c.l.b16 %v1645
    %v1782 = vunpack.c.h.b16 %v1645
    %v1783 = vunpack.c.l.b16 %v1646
    %v1784 = vunpack.c.h.b16 %v1646
    %v1785 = vunpack.c.l.b16 %v1647
    %v1786 = vunpack.c.h.b16 %v1647
    %v1787 = vunpack.c.l.b16 %v1648
    %v1788 = vunpack.c.h.b16 %v1648
    %v1789 = vunpack.c.l.b16 %v1649
    %v1790 = vunpack.c.h.b16 %v1649
    %v1791 = vunpack.c.l.b16 %v1650
    %v1792 = vunpack.c.h.b16 %v1650
    %v1793 = vunpack.c.l.b16 %v1651
    %v1794 = vunpack.c.h.b16 %v1651
    %v1795 = vunpack.c.l.b16 %v1652
    %v1796 = vunpack.c.h.b16 %v1652
    %v1797 = vunpack.c.l.b16 %v1653
    %v1798 = vunpack.c.h.b16 %v1653
    %v1799 = vunpack.c.l.b16 %v1654
    %v1800 = vunpack.c.h.b16 %v1654
    %v1801 = vunpack.c.l.b16 %v1655
    %v1802 = vunpack.c.h.b16 %v1655
    %v1803 = vunpack.c.l.b16 %v1656
    %v1804 = vunpack.c.h.b16 %v1656
    %v1805 = vunpack.c.l.b16 %v1657
    %v1806 = vunpack.c.h.b16 %v1657
    %v1807 = vunpack.c.l.b16 %v1658
    %v1808 = vunpack.c.h.b16 %v1658
    %v1809 = vunpack.c.l.b16 %v1659
    %v1810 = vunpack.c.h.b16 %v1659
    %v1811 = vunpack.c.l.b16 %v1660
    %v1812 = vunpack.c.h.b16 %v1660
    %v1813 = vunpack.c.l.b16 %v1661
    %v1814 = vunpack.c.h.b16 %v1661
    %v1815 = vunpack.c.l.b16 %v1662
    %v1816 = vunpack.c.h.b16 %v1662
    %v1817 = vunpack.c.l.b16 %v1663
    %v1818 = vunpack.c.h.b16 %v1663
    %v1819 = vunpack.c.l.b16 %v1664
    %v1820 = vunpack.c.h.b16 %v1664
    %v1821 = vpack.c.b16 %v1723, %v1721
    %v1822 = vpack.c.b16 %v1724, %v1722
    %v1823 = vpack.c.b16 %v1727, %v1725
    %v1824 = vpack.c.b16 %v1728, %v1726
    %v1825 = vpack.c.b16 %v1731, %v1729
    %v1826 = vpack.c.b16 %v1732, %v1730
    %v1827 = vpack.c.b16 %v1735, %v1733
    %v1828 = vpack.c.b16 %v1736, %v1734
    %v1829 = vpack.c.b16 %v1739, %v1737
    %v1830 = vpack.c.b16 %v1740, %v1738
    %v1831 = vpack.c.b16 %v1743, %v1741
    %v1832 = vpack.c.b16 %v1744, %v1742
    %v1833 = vpack.c.b16 %v1747, %v1745
    %v1834 = vpack.c.b16 %v1748, %v1746
    %v1835 = vpack.c.b16 %v1751, %v1749
    %v1836 = vpack.c.b16 %v1752, %v1750
    %v1837 = vpack.c.b16 %v1755, %v1753
    %v1838 = vpack.c.b16 %v1756, %v1754
    %v1839 = vpack.c.b16 %v1759, %v1757
    %v1840 = vpack.c.b16 %v1760, %v1758
    %v1841 = vpack.c.b16 %v1763, %v1761
    %v1842 = vpack.c.b16 %v1764, %v1762
    %v1843 = vpack.c.b16 %v1767, %v1765
    %v1844 = vpack.c.b16 %v1768, %v1766
    %v1845 = vpack.c.b16 %v1771, %v1769
    %v1846 = vpack.c.b16 %v1772, %v1770
    %v1847 = vpack.c.b16 %v1775, %v1773
    %v1848 = vpack.c.b16 %v1776, %v1774
    %v1849 = vpack.c.b16 %v1779, %v1777
    %v1850 = vpack.c.b16 %v1780, %v1778
    %v1851 = vpack.c.b16 %v1783, %v1781
    %v1852 = vpack.c.b16 %v1784, %v1782
    %v1853 = vpack.c.b16 %v1787, %v1785
    %v1854 = vpack.c.b16 %v1788, %v1786
    %v1855 = vpack.c.b16 %v1791, %v1789
    %v1856 = vpack.c.b16 %v1792, %v1790
    %v1857 = vpack.c.b16 %v1795, %v1793
    %v1858 = vpack.c.b16 %v1796, %v1794
    %v1859 = vpack.c.b16 %v1799, %v1797
    %v1860 = vpack.c.b16 %v1800, %v1798
    %v1861 = vpack.c.b16 %v1803, %v1801
    %v1862 = vpack.c.b16 %v1804, %v1802
    %v1863 = vpack.c.b16 %v1807, %v1805
    %v1864 = vpack.c.b16 %v1808, %v1806
    %v1865 = vpack.c.b16 %v1811, %v1809
    %v1866 = vpack.c.b16 %v1812, %v1810
    %v1867 = vpack.c.b16 %v1815, %v1813
    %v1868 = vpack.c.b16 %v1816, %v1814
    %v1869 = vpack.c.b16 %v1819, %v1817
    %v1870 = vpack.c.b16 %v1820, %v1818
    %v1922 = vsel %vm1239, %v1614, 0
    %1924 = vmatpush.bf16.msra.mxu0 %v1835
    %1925 = vmatpush.bf16.msra.mxu0 %v1833
    %1926 = vmatpush.bf16.msra.mxu0 %v1831
    %1927 = vmatpush.bf16.msra.mxu0 %v1829
    %1928 = vmatpush.bf16.msra.mxu0 %v1827
    %1929 = vmatpush.bf16.msra.mxu0 %v1825
    %1930 = vmatpush.bf16.msra.mxu0 %v1823
    %1931 = vmatpush.bf16.msra.mxu0 %v1821
    %1932 = vmatmul.bf16.gmra.mxu0 %v1611
    %v1933 = vpop.f32.mrf.mxu0
    %v1934 = vadd.f32 %v1667, %v1933
    %v1935 = vpop.f32.mrf.mxu0
    %1936 = vdwg.mxu0
    %1937 = vmatpush.bf16.msra.mxu0 %v1851
    %1938 = vmatpush.bf16.msra.mxu0 %v1849
    %1939 = vmatpush.bf16.msra.mxu0 %v1847
    %1940 = vmatpush.bf16.msra.mxu0 %v1845
    %1941 = vmatpush.bf16.msra.mxu0 %v1843
    %1942 = vmatpush.bf16.msra.mxu0 %v1841
    %1943 = vmatpush.bf16.msra.mxu0 %v1839
    %1944 = vmatpush.bf16.msra.mxu0 %v1837
    %1945 = vmatmul.bf16.gmra.mxu0 %v1612
    %v1946 = vpop.f32.mrf.mxu0
    %v1947 = vadd.f32 %v1934, %v1946
    %v1948 = vpop.f32.mrf.mxu0
    %1949 = vdwg.mxu0
    %1950 = vmatpush.bf16.msra.mxu0 %v1867
    %1951 = vmatpush.bf16.msra.mxu0 %v1865
    %1952 = vmatpush.bf16.msra.mxu0 %v1863
    %1953 = vmatpush.bf16.msra.mxu0 %v1861
    %1954 = vmatpush.bf16.msra.mxu0 %v1859
    %1955 = vmatpush.bf16.msra.mxu0 %v1857
    %1956 = vmatpush.bf16.msra.mxu0 %v1855
    %1957 = vmatpush.bf16.msra.mxu0 %v1853
    %1958 = vmatmul.bf16.gmra.mxu0 %v1613
    %v1959 = vpop.f32.mrf.mxu0
    %v1960 = vadd.f32 %v1947, %v1959
    %v1961 = vpop.f32.mrf.mxu0
    %1962 = vdwg.mxu0
    %1963 = vmatpush.bf16.msra.mxu0 0
    %1964 = vmatpush.bf16.msra.mxu0 0
    %1965 = vmatpush.bf16.msra.mxu0 0
    %1966 = vmatpush.bf16.msra.mxu0 0
    %1967 = vmatpush.bf16.msra.mxu0 0
    %1968 = vmatpush.bf16.msra.mxu0 0
    %1969 = vmatpush.bf16.msra.mxu0 0
    %1970 = vmatpush.bf16.msra.mxu0 %v1869
    %1971 = vmatmul.bf16.gmra.mxu0 %v1922
    %v1972 = vpop.f32.mrf.mxu0
    %v1973 = vadd.f32 %v1960, %v1972
    %v1974 = vpop.f32.mrf.mxu0
    %1975 = vdwg.mxu0
    %1976 = vmatpush.bf16.msra.mxu0 %v1836
    %1977 = vmatpush.bf16.msra.mxu0 %v1834
    %1978 = vmatpush.bf16.msra.mxu0 %v1832
    %1979 = vmatpush.bf16.msra.mxu0 %v1830
    %1980 = vmatpush.bf16.msra.mxu0 %v1828
    %1981 = vmatpush.bf16.msra.mxu0 %v1826
    %1982 = vmatpush.bf16.msra.mxu0 %v1824
    %1983 = vmatpush.bf16.msra.mxu0 %v1822
    %1984 = vmatmul.bf16.gmra.mxu0 %v1611
    %v1985 = vpop.f32.mrf.mxu0
    %v1986 = vadd.f32 %v1668, %v1985
    %v1987 = vpop.f32.mrf.mxu0
    %1988 = vdwg.mxu0
    %1989 = vmatpush.bf16.msra.mxu0 %v1852
    %1990 = vmatpush.bf16.msra.mxu0 %v1850
    %1991 = vmatpush.bf16.msra.mxu0 %v1848
    %1992 = vmatpush.bf16.msra.mxu0 %v1846
    %1993 = vmatpush.bf16.msra.mxu0 %v1844
    %1994 = vmatpush.bf16.msra.mxu0 %v1842
    %1995 = vmatpush.bf16.msra.mxu0 %v1840
    %1996 = vmatpush.bf16.msra.mxu0 %v1838
    %1997 = vmatmul.bf16.gmra.mxu0 %v1612
    %v1998 = vpop.f32.mrf.mxu0
    %v1999 = vadd.f32 %v1986, %v1998
    %v2000 = vpop.f32.mrf.mxu0
    %2001 = vdwg.mxu0
    %2002 = vmatpush.bf16.msra.mxu0 %v1868
    %2003 = vmatpush.bf16.msra.mxu0 %v1866
    %2004 = vmatpush.bf16.msra.mxu0 %v1864
    %2005 = vmatpush.bf16.msra.mxu0 %v1862
    %2006 = vmatpush.bf16.msra.mxu0 %v1860
    %2007 = vmatpush.bf16.msra.mxu0 %v1858
    %2008 = vmatpush.bf16.msra.mxu0 %v1856
    %2009 = vmatpush.bf16.msra.mxu0 %v1854
    %2010 = vmatmul.bf16.gmra.mxu0 %v1613
    %v2011 = vpop.f32.mrf.mxu0
    %v2012 = vadd.f32 %v1999, %v2011
    %v2013 = vpop.f32.mrf.mxu0
    %2014 = vdwg.mxu0
    %2015 = vmatpush.bf16.msra.mxu0 0
    %2016 = vmatpush.bf16.msra.mxu0 0
    %2017 = vmatpush.bf16.msra.mxu0 0
    %2018 = vmatpush.bf16.msra.mxu0 0
    %2019 = vmatpush.bf16.msra.mxu0 0
    %2020 = vmatpush.bf16.msra.mxu0 0
    %2021 = vmatpush.bf16.msra.mxu0 0
    %2022 = vmatpush.bf16.msra.mxu0 %v1870
    %2023 = vmatmul.bf16.gmra.mxu0 %v1922
    %v2024 = vpop.f32.mrf.mxu0
    %v2025 = vadd.f32 %v2012, %v2024
    %v2026 = vpop.f32.mrf.mxu0
    %2027 = vdwg.mxu0
    %v2028 = vld [vmem:[%s1] sm:$0xff]
    %v2029 = vmul.f32 %v2025, 0.5
    %v2030 = vmul.f32 %v2029, 1.442695
    %v2031 = vpow.pop %v2030
    %v2032 = vmul.f32 %v2028, %v2031
    %v2033 = vadd.f32 %v1973, %v2032
    %v2034 = vpack.c.bf16 %v2033, %v2033
    %v2035 = vld [vmem:[%s6] sm:$0xff]
    %v2036 = vld [vmem:[%s6 + $0x8] sm:$0xff]
    %v2037 = vld [vmem:[%s6 + $0x10] sm:$0xff]
    %v2038 = vld [vmem:[%s6 + $0x18] sm:$0xff]
    %v2039 = vld [vmem:[%s6 + $0x20] sm:$0x33]
    %v2040 = vld [vmem:[%s6 + $0x28] sm:$0x33]
    %v2041 = vld [vmem:[%s7] sm:$0xf]
    %v2043 = vperm.slane %v2041, 0
    %v2044 = vperm.slane %v2041, 1
    %v2045 = vperm.slane %v2041, 2
    %v2046 = vperm.slane %v2041, 3
    %v2057 = vunpack.c.l.b16 %v2035
    %v2058 = vunpack.c.h.b16 %v2035
    %v2059 = vunpack.c.l.b16 %v2036
    %v2060 = vunpack.c.h.b16 %v2036
    %v2061 = vunpack.c.l.b16 %v2037
    %v2062 = vunpack.c.h.b16 %v2037
    %v2063 = vunpack.c.l.b16 %v2038
    %v2064 = vunpack.c.h.b16 %v2038
    %v2065 = vunpack.c.l.b16 %v2039
    %v2066 = vunpack.c.h.b16 %v2039
    %v2067 = vunpack.c.l.b16 %v2040
    %v2068 = vunpack.c.h.b16 %v2040
    %v2069 = vpack.c.b16 %v2061, %v2057
    %v2070 = vpack.c.b16 %v2062, %v2058
    %v2071 = vpack.c.b16 %v2063, %v2059
    %v2072 = vpack.c.b16 %v2064, %v2060
    %v2073 = vpack.c.b16 %v2065, %v2065
    %v2074 = vpack.c.b16 %v2066, %v2066
    %v2075 = vpack.c.b16 %v2067, %v2067
    %v2076 = vpack.c.b16 %v2068, %v2068
    %vm2081 = vcmask 162816
    %v2083 = vsel %vm2081, %v2034, 0
    %vm2085 = vcmask 1041408
    %v2087 = vsel %vm2085, %v2073, 0
    %v2090 = vsel %vm2085, %v2074, 0
    %v2093 = vsel %vm2085, %v2075, 0
    %v2096 = vsel %vm2085, %v2076, 0
    %2098 = vmatpush.bf16.msra.mxu0 0
    %2099 = vmatpush.bf16.msra.mxu0 0
    %2100 = vmatpush.bf16.msra.mxu0 0
    %2101 = vmatpush.bf16.msra.mxu0 0
    %2102 = vmatpush.bf16.msra.mxu0 0
    %2103 = vmatpush.bf16.msra.mxu0 0
    %2104 = vmatpush.bf16.msra.mxu0 %v2087
    %2105 = vmatpush.bf16.msra.mxu0 %v2069
    %2106 = vmatmul.bf16.gmra.mxu0 %v2083
    %v2107 = vpop.f32.mrf.mxu0
    %v2108 = vadd.f32 %v2043, %v2107
    %v2109 = vpop.f32.mrf.mxu0
    %2110 = vdwg.mxu0
    %2111 = vmatpush.bf16.msra.mxu0 0
    %2112 = vmatpush.bf16.msra.mxu0 0
    %2113 = vmatpush.bf16.msra.mxu0 0
    %2114 = vmatpush.bf16.msra.mxu0 0
    %2115 = vmatpush.bf16.msra.mxu0 0
    %2116 = vmatpush.bf16.msra.mxu0 0
    %2117 = vmatpush.bf16.msra.mxu0 %v2090
    %2118 = vmatpush.bf16.msra.mxu0 %v2070
    %2119 = vmatmul.bf16.gmra.mxu0 %v2083
    %v2120 = vpop.f32.mrf.mxu0
    %v2121 = vadd.f32 %v2044, %v2120
    %v2122 = vpop.f32.mrf.mxu0
    %2123 = vdwg.mxu0
    %2124 = vmatpush.bf16.msra.mxu0 0
    %2125 = vmatpush.bf16.msra.mxu0 0
    %2126 = vmatpush.bf16.msra.mxu0 0
    %2127 = vmatpush.bf16.msra.mxu0 0
    %2128 = vmatpush.bf16.msra.mxu0 0
    %2129 = vmatpush.bf16.msra.mxu0 0
    %2130 = vmatpush.bf16.msra.mxu0 %v2093
    %2131 = vmatpush.bf16.msra.mxu0 %v2071
    %2132 = vmatmul.bf16.gmra.mxu0 %v2083
    %v2133 = vpop.f32.mrf.mxu0
    %v2134 = vadd.f32 %v2045, %v2133
    %v2135 = vpop.f32.mrf.mxu0
    %2136 = vdwg.mxu0
    %2137 = vmatpush.bf16.msra.mxu0 0
    %2138 = vmatpush.bf16.msra.mxu0 0
    %2139 = vmatpush.bf16.msra.mxu0 0
    %2140 = vmatpush.bf16.msra.mxu0 0
    %2141 = vmatpush.bf16.msra.mxu0 0
    %2142 = vmatpush.bf16.msra.mxu0 0
    %2143 = vmatpush.bf16.msra.mxu0 %v2096
    %2144 = vmatpush.bf16.msra.mxu0 %v2072
    %2145 = vmatmul.bf16.gmra.mxu0 %v2083
    %v2146 = vpop.f32.mrf.mxu0
    %v2147 = vadd.f32 %v2046, %v2146
    %v2148 = vpop.f32.mrf.mxu0
    %2149 = vdwg.mxu0
    %v2150 = vmax.f32 %v2108, 0.0
    %v2151 = vmax.f32 %v2121, 0.0
    %v2152 = vmax.f32 %v2134, 0.0
    %v2153 = vmax.f32 %v2147, 0.0
    %v2154 = vpack.c.bf16 %v2150, %v2150
    %v2155 = vpack.c.bf16 %v2151, %v2151
    %v2156 = vpack.c.bf16 %v2152, %v2152
    %v2157 = vpack.c.bf16 %v2153, %v2153
    %v2158 = vld [vmem:[%s8] sm:$0xff]
    %v2159 = vld [vmem:[%s8 + $0x8] sm:$0xff]
    %v2160 = vld [vmem:[%s8 + $0x10] sm:$0xff]
    %v2161 = vld [vmem:[%s8 + $0x18] sm:$0xf]
    %v2162 = vld [vmem:[%s8 + $0x1c] sm:$0xff]
    %v2163 = vld [vmem:[%s8 + $0x24] sm:$0xff]
    %v2164 = vld [vmem:[%s8 + $0x2c] sm:$0xff]
    %v2165 = vld [vmem:[%s8 + $0x34] sm:$0xf]
    %v2166 = vld [vmem:[%s8 + $0x38] sm:$0xff]
    %v2167 = vld [vmem:[%s8 + $0x40] sm:$0xff]
    %v2168 = vld [vmem:[%s8 + $0x48] sm:$0xff]
    %v2169 = vld [vmem:[%s8 + $0x50] sm:$0xf]
    %v2170 = vld [vmem:[%s8 + $0x54] sm:$0xff]
    %v2171 = vld [vmem:[%s8 + $0x5c] sm:$0xff]
    %v2172 = vld [vmem:[%s8 + $0x64] sm:$0xff]
    %v2173 = vld [vmem:[%s8 + $0x6c] sm:$0xf]
    %v2174 = vld [vmem:[%s8 + $0x70] sm:$0xff]
    %v2175 = vld [vmem:[%s8 + $0x78] sm:$0xff]
    %v2176 = vld [vmem:[%s8 + $0x80] sm:$0xff]
    %v2177 = vld [vmem:[%s8 + $0x88] sm:$0xf]
    %v2178 = vld [vmem:[%s8 + $0x8c] sm:$0xff]
    %v2179 = vld [vmem:[%s8 + $0x94] sm:$0xff]
    %v2180 = vld [vmem:[%s8 + $0x9c] sm:$0xff]
    %v2181 = vld [vmem:[%s8 + $0xa4] sm:$0xf]
    %v2182 = vld [vmem:[%s8 + $0xa8] sm:$0xff]
    %v2183 = vld [vmem:[%s8 + $0xb0] sm:$0xff]
    %v2184 = vld [vmem:[%s8 + $0xb8] sm:$0xff]
    %v2185 = vld [vmem:[%s8 + $0xc0] sm:$0xf]
    %v2186 = vld [vmem:[%s8 + $0xc4] sm:$0xff]
    %v2187 = vld [vmem:[%s8 + $0xcc] sm:$0xff]
    %v2188 = vld [vmem:[%s8 + $0xd4] sm:$0xff]
    %v2189 = vld [vmem:[%s8 + $0xdc] sm:$0xf]
    %v2190 = vld [vmem:[%s8 + $0xe0] sm:$0xff]
    %v2191 = vld [vmem:[%s8 + $0xe8] sm:$0xff]
    %v2192 = vld [vmem:[%s8 + $0xf0] sm:$0xff]
    %v2193 = vld [vmem:[%s8 + $0xf8] sm:$0xf]
    %v2194 = vld [vmem:[%s8 + $0xfc] sm:$0xff]
    %v2195 = vld [vmem:[%s8 + $0x104] sm:$0xff]
    %v2196 = vld [vmem:[%s8 + $0x10c] sm:$0xff]
    %v2197 = vld [vmem:[%s8 + $0x114] sm:$0xf]
    %v2198 = vld [vmem:[%s8 + $0x118] sm:$0xff]
    %v2199 = vld [vmem:[%s8 + $0x120] sm:$0xff]
    %v2200 = vld [vmem:[%s8 + $0x128] sm:$0xff]
    %v2201 = vld [vmem:[%s8 + $0x130] sm:$0xf]
    %v2202 = vld [vmem:[%s8 + $0x134] sm:$0xff]
    %v2203 = vld [vmem:[%s8 + $0x13c] sm:$0xff]
    %v2204 = vld [vmem:[%s8 + $0x144] sm:$0xff]
    %v2205 = vld [vmem:[%s8 + $0x14c] sm:$0xf]
    %v2206 = vld [vmem:[%s8 + $0x150] sm:$0xff]
    %v2207 = vld [vmem:[%s8 + $0x158] sm:$0xff]
    %v2208 = vld [vmem:[%s8 + $0x160] sm:$0xff]
    %v2209 = vld [vmem:[%s8 + $0x168] sm:$0xf]
    %v2210 = vld [vmem:[%s8 + $0x16c] sm:$0xff]
    %v2211 = vld [vmem:[%s8 + $0x174] sm:$0xff]
    %v2212 = vld [vmem:[%s8 + $0x17c] sm:$0xff]
    %v2213 = vld [vmem:[%s8 + $0x184] sm:$0xf]
    %v2214 = vld [vmem:[%s8 + $0x188] sm:$0xff]
    %v2215 = vld [vmem:[%s8 + $0x190] sm:$0xff]
    %v2216 = vld [vmem:[%s8 + $0x198] sm:$0xff]
    %v2217 = vld [vmem:[%s8 + $0x1a0] sm:$0xf]
    %v2218 = vld [vmem:[%s8 + $0x1a4] sm:$0xff]
    %v2219 = vld [vmem:[%s8 + $0x1ac] sm:$0xff]
    %v2220 = vld [vmem:[%s8 + $0x1b4] sm:$0xff]
    %v2221 = vld [vmem:[%s8 + $0x1bc] sm:$0xf]
    %v2222 = vld [vmem:[%s8 + $0x1c0] sm:$0xff]
    %v2223 = vld [vmem:[%s8 + $0x1c8] sm:$0xff]
    %v2224 = vld [vmem:[%s8 + $0x1d0] sm:$0xff]
    %v2225 = vld [vmem:[%s8 + $0x1d8] sm:$0xf]
    %v2226 = vld [vmem:[%s8 + $0x1dc] sm:$0xff]
    %v2227 = vld [vmem:[%s8 + $0x1e4] sm:$0xff]
    %v2228 = vld [vmem:[%s8 + $0x1ec] sm:$0xff]
    %v2229 = vld [vmem:[%s8 + $0x1f4] sm:$0xf]
    %v2230 = vld [vmem:[%s8 + $0x1f8] sm:$0xff]
    %v2231 = vld [vmem:[%s8 + $0x200] sm:$0xff]
    %v2232 = vld [vmem:[%s8 + $0x208] sm:$0xff]
    %v2233 = vld [vmem:[%s8 + $0x210] sm:$0xf]
    %v2234 = vld [vmem:[%s8 + $0x214] sm:$0xff]
    %v2235 = vld [vmem:[%s8 + $0x21c] sm:$0xff]
    %v2236 = vld [vmem:[%s8 + $0x224] sm:$0xff]
    %v2237 = vld [vmem:[%s8 + $0x22c] sm:$0xf]
    %v2238 = vld [vmem:[%s8 + $0x230] sm:$0xff]
    %v2239 = vld [vmem:[%s8 + $0x238] sm:$0xff]
    %v2240 = vld [vmem:[%s8 + $0x240] sm:$0xff]
    %v2241 = vld [vmem:[%s8 + $0x248] sm:$0xf]
    %v2242 = vld [vmem:[%s8 + $0x24c] sm:$0xff]
    %v2243 = vld [vmem:[%s8 + $0x254] sm:$0xff]
    %v2244 = vld [vmem:[%s8 + $0x25c] sm:$0xff]
    %v2245 = vld [vmem:[%s8 + $0x264] sm:$0xf]
    %v2246 = vld [vmem:[%s8 + $0x268] sm:$0xff]
    %v2247 = vld [vmem:[%s8 + $0x270] sm:$0xff]
    %v2248 = vld [vmem:[%s8 + $0x278] sm:$0xff]
    %v2249 = vld [vmem:[%s8 + $0x280] sm:$0xf]
    %v2250 = vld [vmem:[%s8 + $0x284] sm:$0xff]
    %v2251 = vld [vmem:[%s8 + $0x28c] sm:$0xff]
    %v2252 = vld [vmem:[%s8 + $0x294] sm:$0xff]
    %v2253 = vld [vmem:[%s8 + $0x29c] sm:$0xf]
    %v2254 = vld [vmem:[%s8 + $0x2a0] sm:$0xff]
    %v2255 = vld [vmem:[%s8 + $0x2a8] sm:$0xff]
    %v2256 = vld [vmem:[%s8 + $0x2b0] sm:$0xff]
    %v2257 = vld [vmem:[%s8 + $0x2b8] sm:$0xf]
    %v2258 = vld [vmem:[%s8 + $0x2bc] sm:$0xff]
    %v2259 = vld [vmem:[%s8 + $0x2c4] sm:$0xff]
    %v2260 = vld [vmem:[%s8 + $0x2cc] sm:$0xff]
    %v2261 = vld [vmem:[%s8 + $0x2d4] sm:$0xf]
    %v2262 = vld [vmem:[%s8 + $0x2d8] sm:$0xff]
    %v2263 = vld [vmem:[%s8 + $0x2e0] sm:$0xff]
    %v2264 = vld [vmem:[%s8 + $0x2e8] sm:$0xff]
    %v2265 = vld [vmem:[%s8 + $0x2f0] sm:$0xf]
    %v2266 = vld [vmem:[%s8 + $0x2f4] sm:$0xff]
    %v2267 = vld [vmem:[%s8 + $0x2fc] sm:$0xff]
    %v2268 = vld [vmem:[%s8 + $0x304] sm:$0xff]
    %v2269 = vld [vmem:[%s8 + $0x30c] sm:$0xf]
    %v2270 = vld [vmem:[%s8 + $0x310] sm:$0xff]
    %v2271 = vld [vmem:[%s8 + $0x318] sm:$0xff]
    %v2272 = vld [vmem:[%s8 + $0x320] sm:$0xff]
    %v2273 = vld [vmem:[%s8 + $0x328] sm:$0xf]
    %v2274 = vld [vmem:[%s8 + $0x32c] sm:$0xff]
    %v2275 = vld [vmem:[%s8 + $0x334] sm:$0xff]
    %v2276 = vld [vmem:[%s8 + $0x33c] sm:$0xff]
    %v2277 = vld [vmem:[%s8 + $0x344] sm:$0xf]
    %v2278 = vld [vmem:[%s8 + $0x348] sm:$0xff]
    %v2279 = vld [vmem:[%s8 + $0x350] sm:$0xff]
    %v2280 = vld [vmem:[%s8 + $0x358] sm:$0xff]
    %v2281 = vld [vmem:[%s8 + $0x360] sm:$0xf]
    %v2282 = vld [vmem:[%s8 + $0x364] sm:$0xff]
    %v2283 = vld [vmem:[%s8 + $0x36c] sm:$0xff]
    %v2284 = vld [vmem:[%s8 + $0x374] sm:$0xff]
    %v2285 = vld [vmem:[%s8 + $0x37c] sm:$0xf]
    %v2286 = vld [vmem:[%s8 + $0x380] sm:$0xff]
    %v2287 = vld [vmem:[%s8 + $0x388] sm:$0xff]
    %v2288 = vld [vmem:[%s8 + $0x390] sm:$0xff]
    %v2289 = vld [vmem:[%s8 + $0x398] sm:$0xf]
    %v2290 = vld [vmem:[%s8 + $0x39c] sm:$0xff]
    %v2291 = vld [vmem:[%s8 + $0x3a4] sm:$0xff]
    %v2292 = vld [vmem:[%s8 + $0x3ac] sm:$0xff]
    %v2293 = vld [vmem:[%s8 + $0x3b4] sm:$0xf]
    %v2294 = vld [vmem:[%s8 + $0x3b8] sm:$0xff]
    %v2295 = vld [vmem:[%s8 + $0x3c0] sm:$0xff]
    %v2296 = vld [vmem:[%s8 + $0x3c8] sm:$0xff]
    %v2297 = vld [vmem:[%s8 + $0x3d0] sm:$0xf]
    %v2298 = vld [vmem:[%s8 + $0x3d4] sm:$0xff]
    %v2299 = vld [vmem:[%s8 + $0x3dc] sm:$0xff]
    %v2300 = vld [vmem:[%s8 + $0x3e4] sm:$0xff]
    %v2301 = vld [vmem:[%s8 + $0x3ec] sm:$0xf]
    %v2302 = vld [vmem:[%s8 + $0x3f0] sm:$0xff]
    %v2303 = vld [vmem:[%s8 + $0x3f8] sm:$0xff]
    %v2304 = vld [vmem:[%s8 + $0x400] sm:$0xff]
    %v2305 = vld [vmem:[%s8 + $0x408] sm:$0xf]
    %v2306 = vld [vmem:[%s8 + $0x40c] sm:$0xff]
    %v2307 = vld [vmem:[%s8 + $0x414] sm:$0xff]
    %v2308 = vld [vmem:[%s8 + $0x41c] sm:$0xff]
    %v2309 = vld [vmem:[%s8 + $0x424] sm:$0xf]
    %v2310 = vld [vmem:[%s8 + $0x428] sm:$0xff]
    %v2311 = vld [vmem:[%s8 + $0x430] sm:$0xff]
    %v2312 = vld [vmem:[%s8 + $0x438] sm:$0xff]
    %v2313 = vld [vmem:[%s8 + $0x440] sm:$0xf]
    %v2314 = vld [vmem:[%s8 + $0x444] sm:$0xff]
    %v2315 = vld [vmem:[%s8 + $0x44c] sm:$0xff]
    %v2316 = vld [vmem:[%s8 + $0x454] sm:$0xff]
    %v2317 = vld [vmem:[%s8 + $0x45c] sm:$0xf]
    %v2318 = vld [vmem:[%s8 + $0x460] sm:$0xff]
    %v2319 = vld [vmem:[%s8 + $0x468] sm:$0xff]
    %v2320 = vld [vmem:[%s8 + $0x470] sm:$0xff]
    %v2321 = vld [vmem:[%s8 + $0x478] sm:$0xf]
    %v2322 = vld [vmem:[%s8 + $0x47c] sm:$0xff]
    %v2323 = vld [vmem:[%s8 + $0x484] sm:$0xff]
    %v2324 = vld [vmem:[%s8 + $0x48c] sm:$0xff]
    %v2325 = vld [vmem:[%s8 + $0x494] sm:$0xf]
    %v2326 = vld [vmem:[%s8 + $0x498] sm:$0xff]
    %v2327 = vld [vmem:[%s8 + $0x4a0] sm:$0xff]
    %v2328 = vld [vmem:[%s8 + $0x4a8] sm:$0xff]
    %v2329 = vld [vmem:[%s8 + $0x4b0] sm:$0xf]
    %v2330 = vld [vmem:[%s8 + $0x4b4] sm:$0xff]
    %v2331 = vld [vmem:[%s8 + $0x4bc] sm:$0xff]
    %v2332 = vld [vmem:[%s8 + $0x4c4] sm:$0xff]
    %v2333 = vld [vmem:[%s8 + $0x4cc] sm:$0xf]
    %v2334 = vld [vmem:[%s8 + $0x4d0] sm:$0xff]
    %v2335 = vld [vmem:[%s8 + $0x4d8] sm:$0xff]
    %v2336 = vld [vmem:[%s8 + $0x4e0] sm:$0xff]
    %v2337 = vld [vmem:[%s8 + $0x4e8] sm:$0xf]
    %v2338 = vld [vmem:[%s8 + $0x4ec] sm:$0xff]
    %v2339 = vld [vmem:[%s8 + $0x4f4] sm:$0xff]
    %v2340 = vld [vmem:[%s8 + $0x4fc] sm:$0xff]
    %v2341 = vld [vmem:[%s8 + $0x504] sm:$0xf]
    %v2342 = vld [vmem:[%s8 + $0x508] sm:$0xff]
    %v2343 = vld [vmem:[%s8 + $0x510] sm:$0xff]
    %v2344 = vld [vmem:[%s8 + $0x518] sm:$0xff]
    %v2345 = vld [vmem:[%s8 + $0x520] sm:$0xf]
    %v2346 = vld [vmem:[%s8 + $0x524] sm:$0xff]
    %v2347 = vld [vmem:[%s8 + $0x52c] sm:$0xff]
    %v2348 = vld [vmem:[%s8 + $0x534] sm:$0xff]
    %v2349 = vld [vmem:[%s8 + $0x53c] sm:$0xf]
    %v2350 = vld [vmem:[%s8 + $0x540] sm:$0xff]
    %v2351 = vld [vmem:[%s8 + $0x548] sm:$0xff]
    %v2352 = vld [vmem:[%s8 + $0x550] sm:$0xff]
    %v2353 = vld [vmem:[%s8 + $0x558] sm:$0xf]
    %v2354 = vld [vmem:[%s8 + $0x55c] sm:$0xff]
    %v2355 = vld [vmem:[%s8 + $0x564] sm:$0xff]
    %v2356 = vld [vmem:[%s8 + $0x56c] sm:$0xff]
    %v2357 = vld [vmem:[%s8 + $0x574] sm:$0xf]
    %v2358 = vld [vmem:[%s9] sm:$0x7f]
    %v2360 = vperm.slane %v2358, 0
    %v2361 = vperm.slane %v2358, 1
    %v2362 = vperm.slane %v2358, 2
    %v2363 = vperm.slane %v2358, 3
    %v2364 = vperm.slane %v2358, 4
    %v2365 = vperm.slane %v2358, 5
    %v2366 = vperm.slane %v2358, 6
    %v2574 = vunpack.c.l.b16 %v2158
    %v2575 = vunpack.c.h.b16 %v2158
    %v2576 = vunpack.c.l.b16 %v2159
    %v2577 = vunpack.c.h.b16 %v2159
    %v2578 = vunpack.c.l.b16 %v2160
    %v2579 = vunpack.c.h.b16 %v2160
    %v2580 = vunpack.c.l.b16 %v2161
    %v2581 = vunpack.c.l.b16 %v2162
    %v2582 = vunpack.c.h.b16 %v2162
    %v2583 = vunpack.c.l.b16 %v2163
    %v2584 = vunpack.c.h.b16 %v2163
    %v2585 = vunpack.c.l.b16 %v2164
    %v2586 = vunpack.c.h.b16 %v2164
    %v2587 = vunpack.c.l.b16 %v2165
    %v2588 = vunpack.c.l.b16 %v2166
    %v2589 = vunpack.c.h.b16 %v2166
    %v2590 = vunpack.c.l.b16 %v2167
    %v2591 = vunpack.c.h.b16 %v2167
    %v2592 = vunpack.c.l.b16 %v2168
    %v2593 = vunpack.c.h.b16 %v2168
    %v2594 = vunpack.c.l.b16 %v2169
    %v2595 = vunpack.c.l.b16 %v2170
    %v2596 = vunpack.c.h.b16 %v2170
    %v2597 = vunpack.c.l.b16 %v2171
    %v2598 = vunpack.c.h.b16 %v2171
    %v2599 = vunpack.c.l.b16 %v2172
    %v2600 = vunpack.c.h.b16 %v2172
    %v2601 = vunpack.c.l.b16 %v2173
    %v2602 = vunpack.c.l.b16 %v2174
    %v2603 = vunpack.c.h.b16 %v2174
    %v2604 = vunpack.c.l.b16 %v2175
    %v2605 = vunpack.c.h.b16 %v2175
    %v2606 = vunpack.c.l.b16 %v2176
    %v2607 = vunpack.c.h.b16 %v2176
    %v2608 = vunpack.c.l.b16 %v2177
    %v2609 = vunpack.c.l.b16 %v2178
    %v2610 = vunpack.c.h.b16 %v2178
    %v2611 = vunpack.c.l.b16 %v2179
    %v2612 = vunpack.c.h.b16 %v2179
    %v2613 = vunpack.c.l.b16 %v2180
    %v2614 = vunpack.c.h.b16 %v2180
    %v2615 = vunpack.c.l.b16 %v2181
    %v2616 = vunpack.c.l.b16 %v2182
    %v2617 = vunpack.c.h.b16 %v2182
    %v2618 = vunpack.c.l.b16 %v2183
    %v2619 = vunpack.c.h.b16 %v2183
    %v2620 = vunpack.c.l.b16 %v2184
    %v2621 = vunpack.c.h.b16 %v2184
    %v2622 = vunpack.c.l.b16 %v2185
    %v2623 = vunpack.c.l.b16 %v2186
    %v2624 = vunpack.c.h.b16 %v2186
    %v2625 = vunpack.c.l.b16 %v2187
    %v2626 = vunpack.c.h.b16 %v2187
    %v2627 = vunpack.c.l.b16 %v2188
    %v2628 = vunpack.c.h.b16 %v2188
    %v2629 = vunpack.c.l.b16 %v2189
    %v2630 = vunpack.c.l.b16 %v2190
    %v2631 = vunpack.c.h.b16 %v2190
    %v2632 = vunpack.c.l.b16 %v2191
    %v2633 = vunpack.c.h.b16 %v2191
    %v2634 = vunpack.c.l.b16 %v2192
    %v2635 = vunpack.c.h.b16 %v2192
    %v2636 = vunpack.c.l.b16 %v2193
    %v2637 = vunpack.c.l.b16 %v2194
    %v2638 = vunpack.c.h.b16 %v2194
    %v2639 = vunpack.c.l.b16 %v2195
    %v2640 = vunpack.c.h.b16 %v2195
    %v2641 = vunpack.c.l.b16 %v2196
    %v2642 = vunpack.c.h.b16 %v2196
    %v2643 = vunpack.c.l.b16 %v2197
    %v2644 = vunpack.c.l.b16 %v2198
    %v2645 = vunpack.c.h.b16 %v2198
    %v2646 = vunpack.c.l.b16 %v2199
    %v2647 = vunpack.c.h.b16 %v2199
    %v2648 = vunpack.c.l.b16 %v2200
    %v2649 = vunpack.c.h.b16 %v2200
    %v2650 = vunpack.c.l.b16 %v2201
    %v2651 = vunpack.c.l.b16 %v2202
    %v2652 = vunpack.c.h.b16 %v2202
    %v2653 = vunpack.c.l.b16 %v2203
    %v2654 = vunpack.c.h.b16 %v2203
    %v2655 = vunpack.c.l.b16 %v2204
    %v2656 = vunpack.c.h.b16 %v2204
    %v2657 = vunpack.c.l.b16 %v2205
    %v2658 = vunpack.c.l.b16 %v2206
    %v2659 = vunpack.c.h.b16 %v2206
    %v2660 = vunpack.c.l.b16 %v2207
    %v2661 = vunpack.c.h.b16 %v2207
    %v2662 = vunpack.c.l.b16 %v2208
    %v2663 = vunpack.c.h.b16 %v2208
    %v2664 = vunpack.c.l.b16 %v2209
    %v2665 = vunpack.c.l.b16 %v2210
    %v2666 = vunpack.c.h.b16 %v2210
    %v2667 = vunpack.c.l.b16 %v2211
    %v2668 = vunpack.c.h.b16 %v2211
    %v2669 = vunpack.c.l.b16 %v2212
    %v2670 = vunpack.c.h.b16 %v2212
    %v2671 = vunpack.c.l.b16 %v2213
    %v2672 = vunpack.c.l.b16 %v2214
    %v2673 = vunpack.c.h.b16 %v2214
    %v2674 = vunpack.c.l.b16 %v2215
    %v2675 = vunpack.c.h.b16 %v2215
    %v2676 = vunpack.c.l.b16 %v2216
    %v2677 = vunpack.c.h.b16 %v2216
    %v2678 = vunpack.c.l.b16 %v2217
    %v2679 = vunpack.c.l.b16 %v2218
    %v2680 = vunpack.c.h.b16 %v2218
    %v2681 = vunpack.c.l.b16 %v2219
    %v2682 = vunpack.c.h.b16 %v2219
    %v2683 = vunpack.c.l.b16 %v2220
    %v2684 = vunpack.c.h.b16 %v2220
    %v2685 = vunpack.c.l.b16 %v2221
    %v2686 = vunpack.c.l.b16 %v2222
    %v2687 = vunpack.c.h.b16 %v2222
    %v2688 = vunpack.c.l.b16 %v2223
    %v2689 = vunpack.c.h.b16 %v2223
    %v2690 = vunpack.c.l.b16 %v2224
    %v2691 = vunpack.c.h.b16 %v2224
    %v2692 = vunpack.c.l.b16 %v2225
    %v2693 = vunpack.c.l.b16 %v2226
    %v2694 = vunpack.c.h.b16 %v2226
    %v2695 = vunpack.c.l.b16 %v2227
    %v2696 = vunpack.c.h.b16 %v2227
    %v2697 = vunpack.c.l.b16 %v2228
    %v2698 = vunpack.c.h.b16 %v2228
    %v2699 = vunpack.c.l.b16 %v2229
    %v2700 = vunpack.c.l.b16 %v2230
    %v2701 = vunpack.c.h.b16 %v2230
    %v2702 = vunpack.c.l.b16 %v2231
    %v2703 = vunpack.c.h.b16 %v2231
    %v2704 = vunpack.c.l.b16 %v2232
    %v2705 = vunpack.c.h.b16 %v2232
    %v2706 = vunpack.c.l.b16 %v2233
    %v2707 = vunpack.c.l.b16 %v2234
    %v2708 = vunpack.c.h.b16 %v2234
    %v2709 = vunpack.c.l.b16 %v2235
    %v2710 = vunpack.c.h.b16 %v2235
    %v2711 = vunpack.c.l.b16 %v2236
    %v2712 = vunpack.c.h.b16 %v2236
    %v2713 = vunpack.c.l.b16 %v2237
    %v2714 = vunpack.c.l.b16 %v2238
    %v2715 = vunpack.c.h.b16 %v2238
    %v2716 = vunpack.c.l.b16 %v2239
    %v2717 = vunpack.c.h.b16 %v2239
    %v2718 = vunpack.c.l.b16 %v2240
    %v2719 = vunpack.c.h.b16 %v2240
    %v2720 = vunpack.c.l.b16 %v2241
    %v2721 = vunpack.c.l.b16 %v2242
    %v2722 = vunpack.c.h.b16 %v2242
    %v2723 = vunpack.c.l.b16 %v2243
    %v2724 = vunpack.c.h.b16 %v2243
    %v2725 = vunpack.c.l.b16 %v2244
    %v2726 = vunpack.c.h.b16 %v2244
    %v2727 = vunpack.c.l.b16 %v2245
    %v2728 = vunpack.c.l.b16 %v2246
    %v2729 = vunpack.c.h.b16 %v2246
    %v2730 = vunpack.c.l.b16 %v2247
    %v2731 = vunpack.c.h.b16 %v2247
    %v2732 = vunpack.c.l.b16 %v2248
    %v2733 = vunpack.c.h.b16 %v2248
    %v2734 = vunpack.c.l.b16 %v2249
    %v2735 = vunpack.c.l.b16 %v2250
    %v2736 = vunpack.c.h.b16 %v2250
    %v2737 = vunpack.c.l.b16 %v2251
    %v2738 = vunpack.c.h.b16 %v2251
    %v2739 = vunpack.c.l.b16 %v2252
    %v2740 = vunpack.c.h.b16 %v2252
    %v2741 = vunpack.c.l.b16 %v2253
    %v2742 = vunpack.c.l.b16 %v2254
    %v2743 = vunpack.c.h.b16 %v2254
    %v2744 = vunpack.c.l.b16 %v2255
    %v2745 = vunpack.c.h.b16 %v2255
    %v2746 = vunpack.c.l.b16 %v2256
    %v2747 = vunpack.c.h.b16 %v2256
    %v2748 = vunpack.c.l.b16 %v2257
    %v2749 = vunpack.c.l.b16 %v2258
    %v2750 = vunpack.c.h.b16 %v2258
    %v2751 = vunpack.c.l.b16 %v2259
    %v2752 = vunpack.c.h.b16 %v2259
    %v2753 = vunpack.c.l.b16 %v2260
    %v2754 = vunpack.c.h.b16 %v2260
    %v2755 = vunpack.c.l.b16 %v2261
    %v2756 = vunpack.c.l.b16 %v2262
    %v2757 = vunpack.c.h.b16 %v2262
    %v2758 = vunpack.c.l.b16 %v2263
    %v2759 = vunpack.c.h.b16 %v2263
    %v2760 = vunpack.c.l.b16 %v2264
    %v2761 = vunpack.c.h.b16 %v2264
    %v2762 = vunpack.c.l.b16 %v2265
    %v2763 = vunpack.c.l.b16 %v2266
    %v2764 = vunpack.c.h.b16 %v2266
    %v2765 = vunpack.c.l.b16 %v2267
    %v2766 = vunpack.c.h.b16 %v2267
    %v2767 = vunpack.c.l.b16 %v2268
    %v2768 = vunpack.c.h.b16 %v2268
    %v2769 = vunpack.c.l.b16 %v2269
    %v2770 = vunpack.c.l.b16 %v2270
    %v2771 = vunpack.c.h.b16 %v2270
    %v2772 = vunpack.c.l.b16 %v2271
    %v2773 = vunpack.c.h.b16 %v2271
    %v2774 = vunpack.c.l.b16 %v2272
    %v2775 = vunpack.c.h.b16 %v2272
    %v2776 = vunpack.c.l.b16 %v2273
    %v2777 = vunpack.c.l.b16 %v2274
    %v2778 = vunpack.c.h.b16 %v2274
    %v2779 = vunpack.c.l.b16 %v2275
    %v2780 = vunpack.c.h.b16 %v2275
    %v2781 = vunpack.c.l.b16 %v2276
    %v2782 = vunpack.c.h.b16 %v2276
    %v2783 = vunpack.c.l.b16 %v2277
    %v2784 = vunpack.c.l.b16 %v2278
    %v2785 = vunpack.c.h.b16 %v2278
    %v2786 = vunpack.c.l.b16 %v2279
    %v2787 = vunpack.c.h.b16 %v2279
    %v2788 = vunpack.c.l.b16 %v2280
    %v2789 = vunpack.c.h.b16 %v2280
    %v2790 = vunpack.c.l.b16 %v2281
    %v2791 = vunpack.c.l.b16 %v2282
    %v2792 = vunpack.c.h.b16 %v2282
    %v2793 = vunpack.c.l.b16 %v2283
    %v2794 = vunpack.c.h.b16 %v2283
    %v2795 = vunpack.c.l.b16 %v2284
    %v2796 = vunpack.c.h.b16 %v2284
    %v2797 = vunpack.c.l.b16 %v2285
    %v2798 = vunpack.c.l.b16 %v2286
    %v2799 = vunpack.c.h.b16 %v2286
    %v2800 = vunpack.c.l.b16 %v2287
    %v2801 = vunpack.c.h.b16 %v2287
    %v2802 = vunpack.c.l.b16 %v2288
    %v2803 = vunpack.c.h.b16 %v2288
    %v2804 = vunpack.c.l.b16 %v2289
    %v2805 = vunpack.c.l.b16 %v2290
    %v2806 = vunpack.c.h.b16 %v2290
    %v2807 = vunpack.c.l.b16 %v2291
    %v2808 = vunpack.c.h.b16 %v2291
    %v2809 = vunpack.c.l.b16 %v2292
    %v2810 = vunpack.c.h.b16 %v2292
    %v2811 = vunpack.c.l.b16 %v2293
    %v2812 = vunpack.c.l.b16 %v2294
    %v2813 = vunpack.c.h.b16 %v2294
    %v2814 = vunpack.c.l.b16 %v2295
    %v2815 = vunpack.c.h.b16 %v2295
    %v2816 = vunpack.c.l.b16 %v2296
    %v2817 = vunpack.c.h.b16 %v2296
    %v2818 = vunpack.c.l.b16 %v2297
    %v2819 = vunpack.c.l.b16 %v2298
    %v2820 = vunpack.c.h.b16 %v2298
    %v2821 = vunpack.c.l.b16 %v2299
    %v2822 = vunpack.c.h.b16 %v2299
    %v2823 = vunpack.c.l.b16 %v2300
    %v2824 = vunpack.c.h.b16 %v2300
    %v2825 = vunpack.c.l.b16 %v2301
    %v2826 = vunpack.c.l.b16 %v2302
    %v2827 = vunpack.c.h.b16 %v2302
    %v2828 = vunpack.c.l.b16 %v2303
    %v2829 = vunpack.c.h.b16 %v2303
    %v2830 = vunpack.c.l.b16 %v2304
    %v2831 = vunpack.c.h.b16 %v2304
    %v2832 = vunpack.c.l.b16 %v2305
    %v2833 = vunpack.c.l.b16 %v2306
    %v2834 = vunpack.c.h.b16 %v2306
    %v2835 = vunpack.c.l.b16 %v2307
    %v2836 = vunpack.c.h.b16 %v2307
    %v2837 = vunpack.c.l.b16 %v2308
    %v2838 = vunpack.c.h.b16 %v2308
    %v2839 = vunpack.c.l.b16 %v2309
    %v2840 = vunpack.c.l.b16 %v2310
    %v2841 = vunpack.c.h.b16 %v2310
    %v2842 = vunpack.c.l.b16 %v2311
    %v2843 = vunpack.c.h.b16 %v2311
    %v2844 = vunpack.c.l.b16 %v2312
    %v2845 = vunpack.c.h.b16 %v2312
    %v2846 = vunpack.c.l.b16 %v2313
    %v2847 = vunpack.c.l.b16 %v2314
    %v2848 = vunpack.c.h.b16 %v2314
    %v2849 = vunpack.c.l.b16 %v2315
    %v2850 = vunpack.c.h.b16 %v2315
    %v2851 = vunpack.c.l.b16 %v2316
    %v2852 = vunpack.c.h.b16 %v2316
    %v2853 = vunpack.c.l.b16 %v2317
    %v2854 = vunpack.c.l.b16 %v2318
    %v2855 = vunpack.c.h.b16 %v2318
    %v2856 = vunpack.c.l.b16 %v2319
    %v2857 = vunpack.c.h.b16 %v2319
    %v2858 = vunpack.c.l.b16 %v2320
    %v2859 = vunpack.c.h.b16 %v2320
    %v2860 = vunpack.c.l.b16 %v2321
    %v2861 = vunpack.c.l.b16 %v2322
    %v2862 = vunpack.c.h.b16 %v2322
    %v2863 = vunpack.c.l.b16 %v2323
    %v2864 = vunpack.c.h.b16 %v2323
    %v2865 = vunpack.c.l.b16 %v2324
    %v2866 = vunpack.c.h.b16 %v2324
    %v2867 = vunpack.c.l.b16 %v2325
    %v2868 = vunpack.c.l.b16 %v2326
    %v2869 = vunpack.c.h.b16 %v2326
    %v2870 = vunpack.c.l.b16 %v2327
    %v2871 = vunpack.c.h.b16 %v2327
    %v2872 = vunpack.c.l.b16 %v2328
    %v2873 = vunpack.c.h.b16 %v2328
    %v2874 = vunpack.c.l.b16 %v2329
    %v2875 = vunpack.c.l.b16 %v2330
    %v2876 = vunpack.c.h.b16 %v2330
    %v2877 = vunpack.c.l.b16 %v2331
    %v2878 = vunpack.c.h.b16 %v2331
    %v2879 = vunpack.c.l.b16 %v2332
    %v2880 = vunpack.c.h.b16 %v2332
    %v2881 = vunpack.c.l.b16 %v2333
    %v2882 = vunpack.c.l.b16 %v2334
    %v2883 = vunpack.c.h.b16 %v2334
    %v2884 = vunpack.c.l.b16 %v2335
    %v2885 = vunpack.c.h.b16 %v2335
    %v2886 = vunpack.c.l.b16 %v2336
    %v2887 = vunpack.c.h.b16 %v2336
    %v2888 = vunpack.c.l.b16 %v2337
    %v2889 = vunpack.c.l.b16 %v2338
    %v2890 = vunpack.c.h.b16 %v2338
    %v2891 = vunpack.c.l.b16 %v2339
    %v2892 = vunpack.c.h.b16 %v2339
    %v2893 = vunpack.c.l.b16 %v2340
    %v2894 = vunpack.c.h.b16 %v2340
    %v2895 = vunpack.c.l.b16 %v2341
    %v2896 = vunpack.c.l.b16 %v2342
    %v2897 = vunpack.c.h.b16 %v2342
    %v2898 = vunpack.c.l.b16 %v2343
    %v2899 = vunpack.c.h.b16 %v2343
    %v2900 = vunpack.c.l.b16 %v2344
    %v2901 = vunpack.c.h.b16 %v2344
    %v2902 = vunpack.c.l.b16 %v2345
    %v2903 = vunpack.c.l.b16 %v2346
    %v2904 = vunpack.c.h.b16 %v2346
    %v2905 = vunpack.c.l.b16 %v2347
    %v2906 = vunpack.c.h.b16 %v2347
    %v2907 = vunpack.c.l.b16 %v2348
    %v2908 = vunpack.c.h.b16 %v2348
    %v2909 = vunpack.c.l.b16 %v2349
    %v2910 = vunpack.c.l.b16 %v2350
    %v2911 = vunpack.c.h.b16 %v2350
    %v2912 = vunpack.c.l.b16 %v2351
    %v2913 = vunpack.c.h.b16 %v2351
    %v2914 = vunpack.c.l.b16 %v2352
    %v2915 = vunpack.c.h.b16 %v2352
    %v2916 = vunpack.c.l.b16 %v2353
    %v2917 = vunpack.c.l.b16 %v2354
    %v2918 = vunpack.c.h.b16 %v2354
    %v2919 = vunpack.c.l.b16 %v2355
    %v2920 = vunpack.c.h.b16 %v2355
    %v2921 = vunpack.c.l.b16 %v2356
    %v2922 = vunpack.c.h.b16 %v2356
    %v2923 = vunpack.c.l.b16 %v2357
    %v2924 = vpack.c.b16 %v2581, %v2574
    %v2925 = vpack.c.b16 %v2582, %v2575
    %v2926 = vpack.c.b16 %v2583, %v2576
    %v2927 = vpack.c.b16 %v2584, %v2577
    %v2928 = vpack.c.b16 %v2585, %v2578
    %v2929 = vpack.c.b16 %v2586, %v2579
    %v2930 = vpack.c.b16 %v2587, %v2580
    %v2931 = vpack.c.b16 %v2595, %v2588
    %v2932 = vpack.c.b16 %v2596, %v2589
    %v2933 = vpack.c.b16 %v2597, %v2590
    %v2934 = vpack.c.b16 %v2598, %v2591
    %v2935 = vpack.c.b16 %v2599, %v2592
    %v2936 = vpack.c.b16 %v2600, %v2593
    %v2937 = vpack.c.b16 %v2601, %v2594
    %v2938 = vpack.c.b16 %v2609, %v2602
    %v2939 = vpack.c.b16 %v2610, %v2603
    %v2940 = vpack.c.b16 %v2611, %v2604
    %v2941 = vpack.c.b16 %v2612, %v2605
    %v2942 = vpack.c.b16 %v2613, %v2606
    %v2943 = vpack.c.b16 %v2614, %v2607
    %v2944 = vpack.c.b16 %v2615, %v2608
    %v2945 = vpack.c.b16 %v2623, %v2616
    %v2946 = vpack.c.b16 %v2624, %v2617
    %v2947 = vpack.c.b16 %v2625, %v2618
    %v2948 = vpack.c.b16 %v2626, %v2619
    %v2949 = vpack.c.b16 %v2627, %v2620
    %v2950 = vpack.c.b16 %v2628, %v2621
    %v2951 = vpack.c.b16 %v2629, %v2622
    %v2952 = vpack.c.b16 %v2637, %v2630
    %v2953 = vpack.c.b16 %v2638, %v2631
    %v2954 = vpack.c.b16 %v2639, %v2632
    %v2955 = vpack.c.b16 %v2640, %v2633
    %v2956 = vpack.c.b16 %v2641, %v2634
    %v2957 = vpack.c.b16 %v2642, %v2635
    %v2958 = vpack.c.b16 %v2643, %v2636
    %v2959 = vpack.c.b16 %v2651, %v2644
    %v2960 = vpack.c.b16 %v2652, %v2645
    %v2961 = vpack.c.b16 %v2653, %v2646
    %v2962 = vpack.c.b16 %v2654, %v2647
    %v2963 = vpack.c.b16 %v2655, %v2648
    %v2964 = vpack.c.b16 %v2656, %v2649
    %v2965 = vpack.c.b16 %v2657, %v2650
    %v2966 = vpack.c.b16 %v2665, %v2658
    %v2967 = vpack.c.b16 %v2666, %v2659
    %v2968 = vpack.c.b16 %v2667, %v2660
    %v2969 = vpack.c.b16 %v2668, %v2661
    %v2970 = vpack.c.b16 %v2669, %v2662
    %v2971 = vpack.c.b16 %v2670, %v2663
    %v2972 = vpack.c.b16 %v2671, %v2664
    %v2973 = vpack.c.b16 %v2679, %v2672
    %v2974 = vpack.c.b16 %v2680, %v2673
    %v2975 = vpack.c.b16 %v2681, %v2674
    %v2976 = vpack.c.b16 %v2682, %v2675
    %v2977 = vpack.c.b16 %v2683, %v2676
    %v2978 = vpack.c.b16 %v2684, %v2677
    %v2979 = vpack.c.b16 %v2685, %v2678
    %v2980 = vpack.c.b16 %v2693, %v2686
    %v2981 = vpack.c.b16 %v2694, %v2687
    %v2982 = vpack.c.b16 %v2695, %v2688
    %v2983 = vpack.c.b16 %v2696, %v2689
    %v2984 = vpack.c.b16 %v2697, %v2690
    %v2985 = vpack.c.b16 %v2698, %v2691
    %v2986 = vpack.c.b16 %v2699, %v2692
    %v2987 = vpack.c.b16 %v2707, %v2700
    %v2988 = vpack.c.b16 %v2708, %v2701
    %v2989 = vpack.c.b16 %v2709, %v2702
    %v2990 = vpack.c.b16 %v2710, %v2703
    %v2991 = vpack.c.b16 %v2711, %v2704
    %v2992 = vpack.c.b16 %v2712, %v2705
    %v2993 = vpack.c.b16 %v2713, %v2706
    %v2994 = vpack.c.b16 %v2721, %v2714
    %v2995 = vpack.c.b16 %v2722, %v2715
    %v2996 = vpack.c.b16 %v2723, %v2716
    %v2997 = vpack.c.b16 %v2724, %v2717
    %v2998 = vpack.c.b16 %v2725, %v2718
    %v2999 = vpack.c.b16 %v2726, %v2719
    %v3000 = vpack.c.b16 %v2727, %v2720
    %v3001 = vpack.c.b16 %v2735, %v2728
    %v3002 = vpack.c.b16 %v2736, %v2729
    %v3003 = vpack.c.b16 %v2737, %v2730
    %v3004 = vpack.c.b16 %v2738, %v2731
    %v3005 = vpack.c.b16 %v2739, %v2732
    %v3006 = vpack.c.b16 %v2740, %v2733
    %v3007 = vpack.c.b16 %v2741, %v2734
    %v3008 = vpack.c.b16 %v2749, %v2742
    %v3009 = vpack.c.b16 %v2750, %v2743
    %v3010 = vpack.c.b16 %v2751, %v2744
    %v3011 = vpack.c.b16 %v2752, %v2745
    %v3012 = vpack.c.b16 %v2753, %v2746
    %v3013 = vpack.c.b16 %v2754, %v2747
    %v3014 = vpack.c.b16 %v2755, %v2748
    %v3015 = vpack.c.b16 %v2763, %v2756
    %v3016 = vpack.c.b16 %v2764, %v2757
    %v3017 = vpack.c.b16 %v2765, %v2758
    %v3018 = vpack.c.b16 %v2766, %v2759
    %v3019 = vpack.c.b16 %v2767, %v2760
    %v3020 = vpack.c.b16 %v2768, %v2761
    %v3021 = vpack.c.b16 %v2769, %v2762
    %v3022 = vpack.c.b16 %v2777, %v2770
    %v3023 = vpack.c.b16 %v2778, %v2771
    %v3024 = vpack.c.b16 %v2779, %v2772
    %v3025 = vpack.c.b16 %v2780, %v2773
    %v3026 = vpack.c.b16 %v2781, %v2774
    %v3027 = vpack.c.b16 %v2782, %v2775
    %v3028 = vpack.c.b16 %v2783, %v2776
    %v3029 = vpack.c.b16 %v2791, %v2784
    %v3030 = vpack.c.b16 %v2792, %v2785
    %v3031 = vpack.c.b16 %v2793, %v2786
    %v3032 = vpack.c.b16 %v2794, %v2787
    %v3033 = vpack.c.b16 %v2795, %v2788
    %v3034 = vpack.c.b16 %v2796, %v2789
    %v3035 = vpack.c.b16 %v2797, %v2790
    %v3036 = vpack.c.b16 %v2805, %v2798
    %v3037 = vpack.c.b16 %v2806, %v2799
    %v3038 = vpack.c.b16 %v2807, %v2800
    %v3039 = vpack.c.b16 %v2808, %v2801
    %v3040 = vpack.c.b16 %v2809, %v2802
    %v3041 = vpack.c.b16 %v2810, %v2803
    %v3042 = vpack.c.b16 %v2811, %v2804
    %v3043 = vpack.c.b16 %v2819, %v2812
    %v3044 = vpack.c.b16 %v2820, %v2813
    %v3045 = vpack.c.b16 %v2821, %v2814
    %v3046 = vpack.c.b16 %v2822, %v2815
    %v3047 = vpack.c.b16 %v2823, %v2816
    %v3048 = vpack.c.b16 %v2824, %v2817
    %v3049 = vpack.c.b16 %v2825, %v2818
    %v3050 = vpack.c.b16 %v2833, %v2826
    %v3051 = vpack.c.b16 %v2834, %v2827
    %v3052 = vpack.c.b16 %v2835, %v2828
    %v3053 = vpack.c.b16 %v2836, %v2829
    %v3054 = vpack.c.b16 %v2837, %v2830
    %v3055 = vpack.c.b16 %v2838, %v2831
    %v3056 = vpack.c.b16 %v2839, %v2832
    %v3057 = vpack.c.b16 %v2847, %v2840
    %v3058 = vpack.c.b16 %v2848, %v2841
    %v3059 = vpack.c.b16 %v2849, %v2842
    %v3060 = vpack.c.b16 %v2850, %v2843
    %v3061 = vpack.c.b16 %v2851, %v2844
    %v3062 = vpack.c.b16 %v2852, %v2845
    %v3063 = vpack.c.b16 %v2853, %v2846
    %v3064 = vpack.c.b16 %v2861, %v2854
    %v3065 = vpack.c.b16 %v2862, %v2855
    %v3066 = vpack.c.b16 %v2863, %v2856
    %v3067 = vpack.c.b16 %v2864, %v2857
    %v3068 = vpack.c.b16 %v2865, %v2858
    %v3069 = vpack.c.b16 %v2866, %v2859
    %v3070 = vpack.c.b16 %v2867, %v2860
    %v3071 = vpack.c.b16 %v2875, %v2868
    %v3072 = vpack.c.b16 %v2876, %v2869
    %v3073 = vpack.c.b16 %v2877, %v2870
    %v3074 = vpack.c.b16 %v2878, %v2871
    %v3075 = vpack.c.b16 %v2879, %v2872
    %v3076 = vpack.c.b16 %v2880, %v2873
    %v3077 = vpack.c.b16 %v2881, %v2874
    %v3078 = vpack.c.b16 %v2889, %v2882
    %v3079 = vpack.c.b16 %v2890, %v2883
    %v3080 = vpack.c.b16 %v2891, %v2884
    %v3081 = vpack.c.b16 %v2892, %v2885
    %v3082 = vpack.c.b16 %v2893, %v2886
    %v3083 = vpack.c.b16 %v2894, %v2887
    %v3084 = vpack.c.b16 %v2895, %v2888
    %v3085 = vpack.c.b16 %v2903, %v2896
    %v3086 = vpack.c.b16 %v2904, %v2897
    %v3087 = vpack.c.b16 %v2905, %v2898
    %v3088 = vpack.c.b16 %v2906, %v2899
    %v3089 = vpack.c.b16 %v2907, %v2900
    %v3090 = vpack.c.b16 %v2908, %v2901
    %v3091 = vpack.c.b16 %v2909, %v2902
    %v3092 = vpack.c.b16 %v2917, %v2910
    %v3093 = vpack.c.b16 %v2918, %v2911
    %v3094 = vpack.c.b16 %v2919, %v2912
    %v3095 = vpack.c.b16 %v2920, %v2913
    %v3096 = vpack.c.b16 %v2921, %v2914
    %v3097 = vpack.c.b16 %v2922, %v2915
    %v3098 = vpack.c.b16 %v2923, %v2916
    %v3275 = vsel %vm1239, %v2157, 0
    %3277 = vmatpush.bf16.msra.mxu0 %v2973
    %3278 = vmatpush.bf16.msra.mxu0 %v2966
    %3279 = vmatpush.bf16.msra.mxu0 %v2959
    %3280 = vmatpush.bf16.msra.mxu0 %v2952
    %3281 = vmatpush.bf16.msra.mxu0 %v2945
    %3282 = vmatpush.bf16.msra.mxu0 %v2938
    %3283 = vmatpush.bf16.msra.mxu0 %v2931
    %3284 = vmatpush.bf16.msra.mxu0 %v2924
    %3285 = vmatmul.bf16.gmra.mxu0 %v2154
    %v3286 = vpop.f32.mrf.mxu0
    %v3287 = vadd.f32 %v2360, %v3286
    %v3288 = vpop.f32.mrf.mxu0
    %3289 = vdwg.mxu0
    %3290 = vmatpush.bf16.msra.mxu0 %v3029
    %3291 = vmatpush.bf16.msra.mxu0 %v3022
    %3292 = vmatpush.bf16.msra.mxu0 %v3015
    %3293 = vmatpush.bf16.msra.mxu0 %v3008
    %3294 = vmatpush.bf16.msra.mxu0 %v3001
    %3295 = vmatpush.bf16.msra.mxu0 %v2994
    %3296 = vmatpush.bf16.msra.mxu0 %v2987
    %3297 = vmatpush.bf16.msra.mxu0 %v2980
    %3298 = vmatmul.bf16.gmra.mxu0 %v2155
    %v3299 = vpop.f32.mrf.mxu0
    %v3300 = vadd.f32 %v3287, %v3299
    %v3301 = vpop.f32.mrf.mxu0
    %3302 = vdwg.mxu0
    %3303 = vmatpush.bf16.msra.mxu0 %v3085
    %3304 = vmatpush.bf16.msra.mxu0 %v3078
    %3305 = vmatpush.bf16.msra.mxu0 %v3071
    %3306 = vmatpush.bf16.msra.mxu0 %v3064
    %3307 = vmatpush.bf16.msra.mxu0 %v3057
    %3308 = vmatpush.bf16.msra.mxu0 %v3050
    %3309 = vmatpush.bf16.msra.mxu0 %v3043
    %3310 = vmatpush.bf16.msra.mxu0 %v3036
    %3311 = vmatmul.bf16.gmra.mxu0 %v2156
    %v3312 = vpop.f32.mrf.mxu0
    %v3313 = vadd.f32 %v3300, %v3312
    %v3314 = vpop.f32.mrf.mxu0
    %3315 = vdwg.mxu0
    %3316 = vmatpush.bf16.msra.mxu0 0
    %3317 = vmatpush.bf16.msra.mxu0 0
    %3318 = vmatpush.bf16.msra.mxu0 0
    %3319 = vmatpush.bf16.msra.mxu0 0
    %3320 = vmatpush.bf16.msra.mxu0 0
    %3321 = vmatpush.bf16.msra.mxu0 0
    %3322 = vmatpush.bf16.msra.mxu0 0
    %3323 = vmatpush.bf16.msra.mxu0 %v3092
    %3324 = vmatmul.bf16.gmra.mxu0 %v3275
    %v3325 = vpop.f32.mrf.mxu0
    %v3326 = vadd.f32 %v3313, %v3325
    %v3327 = vpop.f32.mrf.mxu0
    %3328 = vdwg.mxu0
    %3329 = vmatpush.bf16.msra.mxu0 %v2974
    %3330 = vmatpush.bf16.msra.mxu0 %v2967
    %3331 = vmatpush.bf16.msra.mxu0 %v2960
    %3332 = vmatpush.bf16.msra.mxu0 %v2953
    %3333 = vmatpush.bf16.msra.mxu0 %v2946
    %3334 = vmatpush.bf16.msra.mxu0 %v2939
    %3335 = vmatpush.bf16.msra.mxu0 %v2932
    %3336 = vmatpush.bf16.msra.mxu0 %v2925
    %3337 = vmatmul.bf16.gmra.mxu0 %v2154
    %v3338 = vpop.f32.mrf.mxu0
    %v3339 = vadd.f32 %v2361, %v3338
    %v3340 = vpop.f32.mrf.mxu0
    %3341 = vdwg.mxu0
    %3342 = vmatpush.bf16.msra.mxu0 %v3030
    %3343 = vmatpush.bf16.msra.mxu0 %v3023
    %3344 = vmatpush.bf16.msra.mxu0 %v3016
    %3345 = vmatpush.bf16.msra.mxu0 %v3009
    %3346 = vmatpush.bf16.msra.mxu0 %v3002
    %3347 = vmatpush.bf16.msra.mxu0 %v2995
    %3348 = vmatpush.bf16.msra.mxu0 %v2988
    %3349 = vmatpush.bf16.msra.mxu0 %v2981
    %3350 = vmatmul.bf16.gmra.mxu0 %v2155
    %v3351 = vpop.f32.mrf.mxu0
    %v3352 = vadd.f32 %v3339, %v3351
    %v3353 = vpop.f32.mrf.mxu0
    %3354 = vdwg.mxu0
    %3355 = vmatpush.bf16.msra.mxu0 %v3086
    %3356 = vmatpush.bf16.msra.mxu0 %v3079
    %3357 = vmatpush.bf16.msra.mxu0 %v3072
    %3358 = vmatpush.bf16.msra.mxu0 %v3065
    %3359 = vmatpush.bf16.msra.mxu0 %v3058
    %3360 = vmatpush.bf16.msra.mxu0 %v3051
    %3361 = vmatpush.bf16.msra.mxu0 %v3044
    %3362 = vmatpush.bf16.msra.mxu0 %v3037
    %3363 = vmatmul.bf16.gmra.mxu0 %v2156
    %v3364 = vpop.f32.mrf.mxu0
    %v3365 = vadd.f32 %v3352, %v3364
    %v3366 = vpop.f32.mrf.mxu0
    %3367 = vdwg.mxu0
    %3368 = vmatpush.bf16.msra.mxu0 0
    %3369 = vmatpush.bf16.msra.mxu0 0
    %3370 = vmatpush.bf16.msra.mxu0 0
    %3371 = vmatpush.bf16.msra.mxu0 0
    %3372 = vmatpush.bf16.msra.mxu0 0
    %3373 = vmatpush.bf16.msra.mxu0 0
    %3374 = vmatpush.bf16.msra.mxu0 0
    %3375 = vmatpush.bf16.msra.mxu0 %v3093
    %3376 = vmatmul.bf16.gmra.mxu0 %v3275
    %v3377 = vpop.f32.mrf.mxu0
    %v3378 = vadd.f32 %v3365, %v3377
    %v3379 = vpop.f32.mrf.mxu0
    %3380 = vdwg.mxu0
    %3381 = vmatpush.bf16.msra.mxu0 %v2975
    %3382 = vmatpush.bf16.msra.mxu0 %v2968
    %3383 = vmatpush.bf16.msra.mxu0 %v2961
    %3384 = vmatpush.bf16.msra.mxu0 %v2954
    %3385 = vmatpush.bf16.msra.mxu0 %v2947
    %3386 = vmatpush.bf16.msra.mxu0 %v2940
    %3387 = vmatpush.bf16.msra.mxu0 %v2933
    %3388 = vmatpush.bf16.msra.mxu0 %v2926
    %3389 = vmatmul.bf16.gmra.mxu0 %v2154
    %v3390 = vpop.f32.mrf.mxu0
    %v3391 = vadd.f32 %v2362, %v3390
    %v3392 = vpop.f32.mrf.mxu0
    %3393 = vdwg.mxu0
    %3394 = vmatpush.bf16.msra.mxu0 %v3031
    %3395 = vmatpush.bf16.msra.mxu0 %v3024
    %3396 = vmatpush.bf16.msra.mxu0 %v3017
    %3397 = vmatpush.bf16.msra.mxu0 %v3010
    %3398 = vmatpush.bf16.msra.mxu0 %v3003
    %3399 = vmatpush.bf16.msra.mxu0 %v2996
    %3400 = vmatpush.bf16.msra.mxu0 %v2989
    %3401 = vmatpush.bf16.msra.mxu0 %v2982
    %3402 = vmatmul.bf16.gmra.mxu0 %v2155
    %v3403 = vpop.f32.mrf.mxu0
    %v3404 = vadd.f32 %v3391, %v3403
    %v3405 = vpop.f32.mrf.mxu0
    %3406 = vdwg.mxu0
    %3407 = vmatpush.bf16.msra.mxu0 %v3087
    %3408 = vmatpush.bf16.msra.mxu0 %v3080
    %3409 = vmatpush.bf16.msra.mxu0 %v3073
    %3410 = vmatpush.bf16.msra.mxu0 %v3066
    %3411 = vmatpush.bf16.msra.mxu0 %v3059
    %3412 = vmatpush.bf16.msra.mxu0 %v3052
    %3413 = vmatpush.bf16.msra.mxu0 %v3045
    %3414 = vmatpush.bf16.msra.mxu0 %v3038
    %3415 = vmatmul.bf16.gmra.mxu0 %v2156
    %v3416 = vpop.f32.mrf.mxu0
    %v3417 = vadd.f32 %v3404, %v3416
    %v3418 = vpop.f32.mrf.mxu0
    %3419 = vdwg.mxu0
    %3420 = vmatpush.bf16.msra.mxu0 0
    %3421 = vmatpush.bf16.msra.mxu0 0
    %3422 = vmatpush.bf16.msra.mxu0 0
    %3423 = vmatpush.bf16.msra.mxu0 0
    %3424 = vmatpush.bf16.msra.mxu0 0
    %3425 = vmatpush.bf16.msra.mxu0 0
    %3426 = vmatpush.bf16.msra.mxu0 0
    %3427 = vmatpush.bf16.msra.mxu0 %v3094
    %3428 = vmatmul.bf16.gmra.mxu0 %v3275
    %v3429 = vpop.f32.mrf.mxu0
    %v3430 = vadd.f32 %v3417, %v3429
    %v3431 = vpop.f32.mrf.mxu0
    %3432 = vdwg.mxu0
    %3433 = vmatpush.bf16.msra.mxu0 %v2976
    %3434 = vmatpush.bf16.msra.mxu0 %v2969
    %3435 = vmatpush.bf16.msra.mxu0 %v2962
    %3436 = vmatpush.bf16.msra.mxu0 %v2955
    %3437 = vmatpush.bf16.msra.mxu0 %v2948
    %3438 = vmatpush.bf16.msra.mxu0 %v2941
    %3439 = vmatpush.bf16.msra.mxu0 %v2934
    %3440 = vmatpush.bf16.msra.mxu0 %v2927
    %3441 = vmatmul.bf16.gmra.mxu0 %v2154
    %v3442 = vpop.f32.mrf.mxu0
    %v3443 = vadd.f32 %v2363, %v3442
    %v3444 = vpop.f32.mrf.mxu0
    %3445 = vdwg.mxu0
    %3446 = vmatpush.bf16.msra.mxu0 %v3032
    %3447 = vmatpush.bf16.msra.mxu0 %v3025
    %3448 = vmatpush.bf16.msra.mxu0 %v3018
    %3449 = vmatpush.bf16.msra.mxu0 %v3011
    %3450 = vmatpush.bf16.msra.mxu0 %v3004
    %3451 = vmatpush.bf16.msra.mxu0 %v2997
    %3452 = vmatpush.bf16.msra.mxu0 %v2990
    %3453 = vmatpush.bf16.msra.mxu0 %v2983
    %3454 = vmatmul.bf16.gmra.mxu0 %v2155
    %v3455 = vpop.f32.mrf.mxu0
    %v3456 = vadd.f32 %v3443, %v3455
    %v3457 = vpop.f32.mrf.mxu0
    %3458 = vdwg.mxu0
    %3459 = vmatpush.bf16.msra.mxu0 %v3088
    %3460 = vmatpush.bf16.msra.mxu0 %v3081
    %3461 = vmatpush.bf16.msra.mxu0 %v3074
    %3462 = vmatpush.bf16.msra.mxu0 %v3067
    %3463 = vmatpush.bf16.msra.mxu0 %v3060
    %3464 = vmatpush.bf16.msra.mxu0 %v3053
    %3465 = vmatpush.bf16.msra.mxu0 %v3046
    %3466 = vmatpush.bf16.msra.mxu0 %v3039
    %3467 = vmatmul.bf16.gmra.mxu0 %v2156
    %v3468 = vpop.f32.mrf.mxu0
    %v3469 = vadd.f32 %v3456, %v3468
    %v3470 = vpop.f32.mrf.mxu0
    %3471 = vdwg.mxu0
    %3472 = vmatpush.bf16.msra.mxu0 0
    %3473 = vmatpush.bf16.msra.mxu0 0
    %3474 = vmatpush.bf16.msra.mxu0 0
    %3475 = vmatpush.bf16.msra.mxu0 0
    %3476 = vmatpush.bf16.msra.mxu0 0
    %3477 = vmatpush.bf16.msra.mxu0 0
    %3478 = vmatpush.bf16.msra.mxu0 0
    %3479 = vmatpush.bf16.msra.mxu0 %v3095
    %3480 = vmatmul.bf16.gmra.mxu0 %v3275
    %v3481 = vpop.f32.mrf.mxu0
    %v3482 = vadd.f32 %v3469, %v3481
    %v3483 = vpop.f32.mrf.mxu0
    %3484 = vdwg.mxu0
    %3485 = vmatpush.bf16.msra.mxu0 %v2977
    %3486 = vmatpush.bf16.msra.mxu0 %v2970
    %3487 = vmatpush.bf16.msra.mxu0 %v2963
    %3488 = vmatpush.bf16.msra.mxu0 %v2956
    %3489 = vmatpush.bf16.msra.mxu0 %v2949
    %3490 = vmatpush.bf16.msra.mxu0 %v2942
    %3491 = vmatpush.bf16.msra.mxu0 %v2935
    %3492 = vmatpush.bf16.msra.mxu0 %v2928
    %3493 = vmatmul.bf16.gmra.mxu0 %v2154
    %v3494 = vpop.f32.mrf.mxu0
    %v3495 = vadd.f32 %v2364, %v3494
    %v3496 = vpop.f32.mrf.mxu0
    %3497 = vdwg.mxu0
    %3498 = vmatpush.bf16.msra.mxu0 %v3033
    %3499 = vmatpush.bf16.msra.mxu0 %v3026
    %3500 = vmatpush.bf16.msra.mxu0 %v3019
    %3501 = vmatpush.bf16.msra.mxu0 %v3012
    %3502 = vmatpush.bf16.msra.mxu0 %v3005
    %3503 = vmatpush.bf16.msra.mxu0 %v2998
    %3504 = vmatpush.bf16.msra.mxu0 %v2991
    %3505 = vmatpush.bf16.msra.mxu0 %v2984
    %3506 = vmatmul.bf16.gmra.mxu0 %v2155
    %v3507 = vpop.f32.mrf.mxu0
    %v3508 = vadd.f32 %v3495, %v3507
    %v3509 = vpop.f32.mrf.mxu0
    %3510 = vdwg.mxu0
    %3511 = vmatpush.bf16.msra.mxu0 %v3089
    %3512 = vmatpush.bf16.msra.mxu0 %v3082
    %3513 = vmatpush.bf16.msra.mxu0 %v3075
    %3514 = vmatpush.bf16.msra.mxu0 %v3068
    %3515 = vmatpush.bf16.msra.mxu0 %v3061
    %3516 = vmatpush.bf16.msra.mxu0 %v3054
    %3517 = vmatpush.bf16.msra.mxu0 %v3047
    %3518 = vmatpush.bf16.msra.mxu0 %v3040
    %3519 = vmatmul.bf16.gmra.mxu0 %v2156
    %v3520 = vpop.f32.mrf.mxu0
    %v3521 = vadd.f32 %v3508, %v3520
    %v3522 = vpop.f32.mrf.mxu0
    %3523 = vdwg.mxu0
    %3524 = vmatpush.bf16.msra.mxu0 0
    %3525 = vmatpush.bf16.msra.mxu0 0
    %3526 = vmatpush.bf16.msra.mxu0 0
    %3527 = vmatpush.bf16.msra.mxu0 0
    %3528 = vmatpush.bf16.msra.mxu0 0
    %3529 = vmatpush.bf16.msra.mxu0 0
    %3530 = vmatpush.bf16.msra.mxu0 0
    %3531 = vmatpush.bf16.msra.mxu0 %v3096
    %3532 = vmatmul.bf16.gmra.mxu0 %v3275
    %v3533 = vpop.f32.mrf.mxu0
    %v3534 = vadd.f32 %v3521, %v3533
    %v3535 = vpop.f32.mrf.mxu0
    %3536 = vdwg.mxu0
    %3537 = vmatpush.bf16.msra.mxu0 %v2978
    %3538 = vmatpush.bf16.msra.mxu0 %v2971
    %3539 = vmatpush.bf16.msra.mxu0 %v2964
    %3540 = vmatpush.bf16.msra.mxu0 %v2957
    %3541 = vmatpush.bf16.msra.mxu0 %v2950
    %3542 = vmatpush.bf16.msra.mxu0 %v2943
    %3543 = vmatpush.bf16.msra.mxu0 %v2936
    %3544 = vmatpush.bf16.msra.mxu0 %v2929
    %3545 = vmatmul.bf16.gmra.mxu0 %v2154
    %v3546 = vpop.f32.mrf.mxu0
    %v3547 = vadd.f32 %v2365, %v3546
    %v3548 = vpop.f32.mrf.mxu0
    %3549 = vdwg.mxu0
    %3550 = vmatpush.bf16.msra.mxu0 %v3034
    %3551 = vmatpush.bf16.msra.mxu0 %v3027
    %3552 = vmatpush.bf16.msra.mxu0 %v3020
    %3553 = vmatpush.bf16.msra.mxu0 %v3013
    %3554 = vmatpush.bf16.msra.mxu0 %v3006
    %3555 = vmatpush.bf16.msra.mxu0 %v2999
    %3556 = vmatpush.bf16.msra.mxu0 %v2992
    %3557 = vmatpush.bf16.msra.mxu0 %v2985
    %3558 = vmatmul.bf16.gmra.mxu0 %v2155
    %v3559 = vpop.f32.mrf.mxu0
    %v3560 = vadd.f32 %v3547, %v3559
    %v3561 = vpop.f32.mrf.mxu0
    %3562 = vdwg.mxu0
    %3563 = vmatpush.bf16.msra.mxu0 %v3090
    %3564 = vmatpush.bf16.msra.mxu0 %v3083
    %3565 = vmatpush.bf16.msra.mxu0 %v3076
    %3566 = vmatpush.bf16.msra.mxu0 %v3069
    %3567 = vmatpush.bf16.msra.mxu0 %v3062
    %3568 = vmatpush.bf16.msra.mxu0 %v3055
    %3569 = vmatpush.bf16.msra.mxu0 %v3048
    %3570 = vmatpush.bf16.msra.mxu0 %v3041
    %3571 = vmatmul.bf16.gmra.mxu0 %v2156
    %v3572 = vpop.f32.mrf.mxu0
    %v3573 = vadd.f32 %v3560, %v3572
    %v3574 = vpop.f32.mrf.mxu0
    %3575 = vdwg.mxu0
    %3576 = vmatpush.bf16.msra.mxu0 0
    %3577 = vmatpush.bf16.msra.mxu0 0
    %3578 = vmatpush.bf16.msra.mxu0 0
    %3579 = vmatpush.bf16.msra.mxu0 0
    %3580 = vmatpush.bf16.msra.mxu0 0
    %3581 = vmatpush.bf16.msra.mxu0 0
    %3582 = vmatpush.bf16.msra.mxu0 0
    %3583 = vmatpush.bf16.msra.mxu0 %v3097
    %3584 = vmatmul.bf16.gmra.mxu0 %v3275
    %v3585 = vpop.f32.mrf.mxu0
    %v3586 = vadd.f32 %v3573, %v3585
    %v3587 = vpop.f32.mrf.mxu0
    %3588 = vdwg.mxu0
    %3589 = vmatpush.bf16.msra.mxu0 %v2979
    %3590 = vmatpush.bf16.msra.mxu0 %v2972
    %3591 = vmatpush.bf16.msra.mxu0 %v2965
    %3592 = vmatpush.bf16.msra.mxu0 %v2958
    %3593 = vmatpush.bf16.msra.mxu0 %v2951
    %3594 = vmatpush.bf16.msra.mxu0 %v2944
    %3595 = vmatpush.bf16.msra.mxu0 %v2937
    %3596 = vmatpush.bf16.msra.mxu0 %v2930
    %3597 = vmatmul.bf16.gmra.mxu0 %v2154
    %v3598 = vpop.f32.mrf.mxu0
    %v3599 = vadd.f32 %v2366, %v3598
    %v3600 = vpop.f32.mrf.mxu0
    %3601 = vdwg.mxu0
    %3602 = vmatpush.bf16.msra.mxu0 %v3035
    %3603 = vmatpush.bf16.msra.mxu0 %v3028
    %3604 = vmatpush.bf16.msra.mxu0 %v3021
    %3605 = vmatpush.bf16.msra.mxu0 %v3014
    %3606 = vmatpush.bf16.msra.mxu0 %v3007
    %3607 = vmatpush.bf16.msra.mxu0 %v3000
    %3608 = vmatpush.bf16.msra.mxu0 %v2993
    %3609 = vmatpush.bf16.msra.mxu0 %v2986
    %3610 = vmatmul.bf16.gmra.mxu0 %v2155
    %v3611 = vpop.f32.mrf.mxu0
    %v3612 = vadd.f32 %v3599, %v3611
    %v3613 = vpop.f32.mrf.mxu0
    %3614 = vdwg.mxu0
    %3615 = vmatpush.bf16.msra.mxu0 %v3091
    %3616 = vmatpush.bf16.msra.mxu0 %v3084
    %3617 = vmatpush.bf16.msra.mxu0 %v3077
    %3618 = vmatpush.bf16.msra.mxu0 %v3070
    %3619 = vmatpush.bf16.msra.mxu0 %v3063
    %3620 = vmatpush.bf16.msra.mxu0 %v3056
    %3621 = vmatpush.bf16.msra.mxu0 %v3049
    %3622 = vmatpush.bf16.msra.mxu0 %v3042
    %3623 = vmatmul.bf16.gmra.mxu0 %v2156
    %v3624 = vpop.f32.mrf.mxu0
    %v3625 = vadd.f32 %v3612, %v3624
    %v3626 = vpop.f32.mrf.mxu0
    %3627 = vdwg.mxu0
    %3628 = vmatpush.bf16.msra.mxu0 0
    %3629 = vmatpush.bf16.msra.mxu0 0
    %3630 = vmatpush.bf16.msra.mxu0 0
    %3631 = vmatpush.bf16.msra.mxu0 0
    %3632 = vmatpush.bf16.msra.mxu0 0
    %3633 = vmatpush.bf16.msra.mxu0 0
    %3634 = vmatpush.bf16.msra.mxu0 0
    %3635 = vmatpush.bf16.msra.mxu0 %v3098
    %3636 = vmatmul.bf16.gmra.mxu0 %v3275
    %v3637 = vpop.f32.mrf.mxu0
    %v3638 = vadd.f32 %v3625, %v3637
    %v3639 = vpop.f32.mrf.mxu0
    %3640 = vdwg.mxu0
    %v3641 = vxor.u32 %v3326, 2147483648
    %v3642 = vxor.u32 %v3378, 2147483648
    %v3643 = vxor.u32 %v3430, 2147483648
    %v3644 = vxor.u32 %v3482, 2147483648
    %v3645 = vxor.u32 %v3534, 2147483648
    %v3646 = vxor.u32 %v3586, 2147483648
    %v3647 = vxor.u32 %v3638, 2147483648
    %v3648 = vmul.f32 %v3641, 1.442695
    %v3649 = vpow.pop %v3648
    %v3650 = vmul.f32 %v3642, 1.442695
    %v3651 = vpow.pop %v3650
    %v3652 = vmul.f32 %v3643, 1.442695
    %v3653 = vpow.pop %v3652
    %v3654 = vmul.f32 %v3644, 1.442695
    %v3655 = vpow.pop %v3654
    %v3656 = vmul.f32 %v3645, 1.442695
    %v3657 = vpow.pop %v3656
    %v3658 = vmul.f32 %v3646, 1.442695
    %v3659 = vpow.pop %v3658
    %v3660 = vmul.f32 %v3647, 1.442695
    %v3661 = vpow.pop %v3660
    %v3662 = vadd.f32 %v3649, 1.0
    %v3663 = vadd.f32 %v3651, 1.0
    %v3664 = vadd.f32 %v3653, 1.0
    %v3665 = vadd.f32 %v3655, 1.0
    %v3666 = vadd.f32 %v3657, 1.0
    %v3667 = vadd.f32 %v3659, 1.0
    %v3668 = vadd.f32 %v3661, 1.0
    %v3669 = vrcp.pop %v3662
    %v3670 = vmul.f32 %v3662, %v3669
    %v3671 = vsub.f32 1.0, %v3670
    %v3672 = vmul.f32 %v3669, %v3671
    %v3673 = vadd.f32 %v3669, %v3672
    %vm3674 = vweird.f32 %v3662
    %vm3675 = vweird.f32 %v3669
    %vm3676 = vmor %vm3674, %vm3675
    %v3677 = vsel %vm3676, %v3669, %v3673
    %v3678 = vand.u32 2147483647, %v3662
    %vm3679 = vcmp.eq.f32.partialorder %v3678, 8.507059e+37
    %v3680 = vand.u32 %v3662, 2147483648
    %v3681 = vor.u32 1.1754944e-38, %v3680
    %v3682 = vsel %vm3679, %v3681, %v3677
    %v3683 = vmul.f32 1.0, %v3682
    %v3684 = vrcp.pop %v3663
    %v3685 = vmul.f32 %v3663, %v3684
    %v3686 = vsub.f32 1.0, %v3685
    %v3687 = vmul.f32 %v3684, %v3686
    %v3688 = vadd.f32 %v3684, %v3687
    %vm3689 = vweird.f32 %v3663
    %vm3690 = vweird.f32 %v3684
    %vm3691 = vmor %vm3689, %vm3690
    %v3692 = vsel %vm3691, %v3684, %v3688
    %v3693 = vand.u32 2147483647, %v3663
    %vm3694 = vcmp.eq.f32.partialorder %v3693, 8.507059e+37
    %v3695 = vand.u32 %v3663, 2147483648
    %v3696 = vor.u32 1.1754944e-38, %v3695
    %v3697 = vsel %vm3694, %v3696, %v3692
    %v3698 = vmul.f32 1.0, %v3697
    %v3699 = vrcp.pop %v3664
    %v3700 = vmul.f32 %v3664, %v3699
    %v3701 = vsub.f32 1.0, %v3700
    %v3702 = vmul.f32 %v3699, %v3701
    %v3703 = vadd.f32 %v3699, %v3702
    %vm3704 = vweird.f32 %v3664
    %vm3705 = vweird.f32 %v3699
    %vm3706 = vmor %vm3704, %vm3705
    %v3707 = vsel %vm3706, %v3699, %v3703
    %v3708 = vand.u32 2147483647, %v3664
    %vm3709 = vcmp.eq.f32.partialorder %v3708, 8.507059e+37
    %v3710 = vand.u32 %v3664, 2147483648
    %v3711 = vor.u32 1.1754944e-38, %v3710
    %v3712 = vsel %vm3709, %v3711, %v3707
    %v3713 = vmul.f32 1.0, %v3712
    %v3714 = vrcp.pop %v3665
    %v3715 = vmul.f32 %v3665, %v3714
    %v3716 = vsub.f32 1.0, %v3715
    %v3717 = vmul.f32 %v3714, %v3716
    %v3718 = vadd.f32 %v3714, %v3717
    %vm3719 = vweird.f32 %v3665
    %vm3720 = vweird.f32 %v3714
    %vm3721 = vmor %vm3719, %vm3720
    %v3722 = vsel %vm3721, %v3714, %v3718
    %v3723 = vand.u32 2147483647, %v3665
    %vm3724 = vcmp.eq.f32.partialorder %v3723, 8.507059e+37
    %v3725 = vand.u32 %v3665, 2147483648
    %v3726 = vor.u32 1.1754944e-38, %v3725
    %v3727 = vsel %vm3724, %v3726, %v3722
    %v3728 = vmul.f32 1.0, %v3727
    %v3729 = vrcp.pop %v3666
    %v3730 = vmul.f32 %v3666, %v3729
    %v3731 = vsub.f32 1.0, %v3730
    %v3732 = vmul.f32 %v3729, %v3731
    %v3733 = vadd.f32 %v3729, %v3732
    %vm3734 = vweird.f32 %v3666
    %vm3735 = vweird.f32 %v3729
    %vm3736 = vmor %vm3734, %vm3735
    %v3737 = vsel %vm3736, %v3729, %v3733
    %v3738 = vand.u32 2147483647, %v3666
    %vm3739 = vcmp.eq.f32.partialorder %v3738, 8.507059e+37
    %v3740 = vand.u32 %v3666, 2147483648
    %v3741 = vor.u32 1.1754944e-38, %v3740
    %v3742 = vsel %vm3739, %v3741, %v3737
    %v3743 = vmul.f32 1.0, %v3742
    %v3744 = vrcp.pop %v3667
    %v3745 = vmul.f32 %v3667, %v3744
    %v3746 = vsub.f32 1.0, %v3745
    %v3747 = vmul.f32 %v3744, %v3746
    %v3748 = vadd.f32 %v3744, %v3747
    %vm3749 = vweird.f32 %v3667
    %vm3750 = vweird.f32 %v3744
    %vm3751 = vmor %vm3749, %vm3750
    %v3752 = vsel %vm3751, %v3744, %v3748
    %v3753 = vand.u32 2147483647, %v3667
    %vm3754 = vcmp.eq.f32.partialorder %v3753, 8.507059e+37
    %v3755 = vand.u32 %v3667, 2147483648
    %v3756 = vor.u32 1.1754944e-38, %v3755
    %v3757 = vsel %vm3754, %v3756, %v3752
    %v3758 = vmul.f32 1.0, %v3757
    %v3759 = vrcp.pop %v3668
    %v3760 = vmul.f32 %v3668, %v3759
    %v3761 = vsub.f32 1.0, %v3760
    %v3762 = vmul.f32 %v3759, %v3761
    %v3763 = vadd.f32 %v3759, %v3762
    %vm3764 = vweird.f32 %v3668
    %vm3765 = vweird.f32 %v3759
    %vm3766 = vmor %vm3764, %vm3765
    %v3767 = vsel %vm3766, %v3759, %v3763
    %v3768 = vand.u32 2147483647, %v3668
    %vm3769 = vcmp.eq.f32.partialorder %v3768, 8.507059e+37
    %v3770 = vand.u32 %v3668, 2147483648
    %v3771 = vor.u32 1.1754944e-38, %v3770
    %v3772 = vsel %vm3769, %v3771, %v3767
    %v3773 = vmul.f32 1.0, %v3772
    %v3774 = vpack.c.bf16 %v3698, %v3683
    %v3775 = vpack.c.bf16 %v3728, %v3713
    %v3776 = vpack.c.bf16 %v3758, %v3743
    %v3777 = vpack.c.bf16 %v3773, %v3773
    %3778 = vst [vmem:[#allocation2] sm:$0xff] %v3774
    %3779 = vst [vmem:[#allocation2 + $0x8] sm:$0xff] %v3775
    %3780 = vst [vmem:[#allocation2 + $0x10] sm:$0xff] %v3776
    %vm3781 = vcmask 125952
    %3782 = vst.msk [vmem:[#allocation2 + $0x18] sm:$0xf] %vm3781, %v3777
    %v3783 = vpack.c.bf16 %v2025, %v1973
    %3784 = vst [vmem:[%s11] sm:$0xff] %v3783
    // Predicated region
    $region42: #{vae_forward.1} parent=1 // pred_check
      _
    $region43: #{vae_forward.1} parent=1 // pred_check_branch
      %3786 = sbr.rel (0) target = $region45
    $region44: #{vae_forward.1} parent=1 // pred_region
      %3788 = vsyncadd [#allocation3], 0
      %s3790 = sshll.u32 [#allocation2], 4
      %s3791 = int_to_ptr.vmem [resolvable:$true] %s3790
      %s3792 = sshll.u32 %s10, 4
      %s3793 = int_to_ptr.hbm [resolvable:$true] %s3792
      %3795 = dma.vmem_to_hbm [thread:$0]  %s3791, 448, %s3793, [#allocation3]
    $region45: #{vae_forward.1} parent=1 // pred_fallthru
      _
    // Predicated region
    $region46: #{vae_forward.1} parent=1 // pred_check
      _
    $region47: #{vae_forward.1} parent=1 // pred_check_branch
      %3797 = sbr.rel (0) target = $region49
    $region48: #{vae_forward.1} parent=1 // pred_region
      _
    $region49: #{vae_forward.1} parent=1 // pred_fallthru
      _
    // Predicated region
    $region50: #{vae_forward.1} parent=1 // pred_check
      _
    $region51: #{vae_forward.1} parent=1 // pred_check_branch
      %3799 = sbr.rel (0) target = $region53
    $region52: #{vae_forward.1} parent=1 // pred_region
      %3801 = dma.done [#allocation3], 448
    $region53: #{vae_forward.1} parent=1 // pred_fallthru
      _
    // Predicated region
    $region54: #{vae_forward.1} parent=1 // pred_check
      _
    $region55: #{vae_forward.1} parent=1 // pred_check_branch
      %3803 = sbr.rel (0) target = $region57
    $region56: #{vae_forward.1} parent=1 // pred_region
      _
    $region57: #{vae_forward.1} parent=1 // pred_fallthru
      _
    %3804 = vsyncpa [#allocation3], 1

</llo_original>
